<compile_context>
chip_gen: v7x
topology: tpu7x:2x2x1
jax: 0.10.0
libtpu: 0.0.40
codegen_flags: <defaults>
</compile_context>

<pallas_src>
import functools
import math

import jax
import jax.numpy as jnp
from jax.experimental import pallas as pl
from jax.experimental.pallas import tpu as pltpu

_LANE = 128
_MASK_VAL = -1e30   # large-negative finite (avoids inf-inf NaNs in the online max)


def _flash_qkv_kernel(q_ref, k_ref, v_ref, o_ref, m_ref, l_ref, acc_ref, *,
                      scale2, kv_block, seq_len, mask_keys):
    """One (batch, head-group, q-tile, kv-tile) grid step of QKVAttention."""
    ki = pl.program_id(3)

    @pl.when(ki == 0)
    def _():
        m_ref[...] = jnp.full(m_ref.shape, _MASK_VAL, m_ref.dtype)
        l_ref[...] = jnp.zeros(l_ref.shape, l_ref.dtype)
        acc_ref[...] = jnp.zeros(acc_ref.shape, acc_ref.dtype)

    # Fold (q*scale)*(k*scale) into a single scale^2 on the small q block
    # (T/C times fewer VALU ops than scaling the (Sk, Tq) scores).
    q = q_ref[0] * scale2          # (Hb, C, Tq), input dtype
    k = k_ref[0]                   # (Hb, C, Sk)
    v = v_ref[0]                   # (Hb, C, Sk)

    # scores[h, s, t] = sum_c k[h, c, s] * q[h, c, t]  -> (Hb, Sk, Tq) f32.
    s = jax.lax.dot_general(
        k, q, dimension_numbers=(((1,), (1,)), ((0,), (0,))),
        preferred_element_type=jnp.float32)

    if mask_keys:
        # Lane-density padding of T: padded key rows must carry no softmax mass.
        key_pos = ki * kv_block + jax.lax.broadcasted_iota(jnp.int32, s.shape, 1)
        s = jnp.where(key_pos < seq_len, s, _MASK_VAL)

    # Online softmax over the key (sublane) axis, in f32 (matches torch .float()).
    m_prev = m_ref[...]                                      # (Hb, 1, Tq)
    m_new = jnp.maximum(m_prev, jnp.max(s, axis=1, keepdims=True))
    alpha = jnp.exp(m_prev - m_new)                          # (Hb, 1, Tq)
    p = jnp.exp(s - m_new)                                   # (Hb, Sk, Tq) f32
    l_ref[...] = alpha * l_ref[...] + jnp.sum(p, axis=1, keepdims=True)

    # out[h, c, t] += sum_s v[h, c, s] * p[h, s, t]: natural [M,K]x[K,N] layout,
    # weights cast back to the input dtype (matches `.type(weight.dtype)`).
    pv = jax.lax.dot_general(
        v, p.astype(v.dtype), dimension_numbers=(((2,), (1,)), ((0,), (0,))),
        preferred_element_type=jnp.float32)                  # (Hb, C, Tq) f32
    acc_ref[...] = alpha * acc_ref[...] + pv
    m_ref[...] = m_new

    @pl.when(ki == pl.num_programs(3) - 1)
    def _():
        inv_l = 1.0 / l_ref[...]          # exact: only a (Hb,1,Tq) reciprocal
        o_ref[0] = (acc_ref[...] * inv_l).astype(o_ref.dtype)


def _vmem_limit_bytes():
    """Generation-aware VMEM limit (~78% of physical: ~100 MiB v5e/v6e, ~50 MiB v7x)."""
    cap = None
    try:
        info = pltpu.get_tpu_info()
        for name in ("vmem_capacity_bytes", "vmem_bytes", "vmem_size_bytes"):
            val = getattr(info, name, None)
            if val:
                cap = int(val)
                break
    except Exception:
        cap = None
    if not cap:
        cap = 64 * 1024 * 1024            # conservative per-TC (v7x) fallback
    return int(cap * 0.78)


def _vmem_per_step(hb, ch, tq, sk, itemsize):
    """Per-grid-step working set, including compiler-allocated intermediates."""
    in_blocks = 2 * hb * ch * (tq + 2 * sk) * itemsize   # double-buffered q, k, v
    out_block = 2 * hb * ch * tq * itemsize              # double-buffered output
    scratch = hb * ch * tq * 4 + 2 * hb * 8 * tq * 4     # acc + m/l (sublane-padded)
    scores = 2 * hb * sk * tq * 4                        # s and p coexist around exp
    p_cast = hb * sk * tq * itemsize                     # weights cast to input dtype
    pv_tmp = hb * ch * tq * 4                            # f32 result of the PV matmul
    return in_blocks + out_block + scratch + scores + p_cast + pv_tmp


def _choose_blocks(bs, n_heads, ch, t_pad, itemsize, budget):
    """Pick (heads_per_block, q_tile, kv_tile): lane-dense, VMEM-bounded, megacore-aware."""
    lane_units = t_pad // _LANE
    t_divs = sorted({_LANE * d for d in range(1, lane_units + 1)
                     if lane_units % d == 0}, reverse=True)
    h_divs = [d for d in range(n_heads, 0, -1) if n_heads % d == 0]

    tq = next((t for t in t_divs if t <= 1024), t_divs[-1])
    sk = next((t for t in t_divs if t <= 512), t_divs[-1])
    hb = n_heads

    # v7x megacore: make sure the parallel part of the grid has >= 2 steps.
    def parallel_steps(hb_, tq_):
        return bs * (n_heads // hb_) * (t_pad // tq_)
    if parallel_steps(hb, tq) < 2:
        smaller_t = [t for t in t_divs if t < tq]
        smaller_h = [h for h in h_divs if h < hb]
        if smaller_t:
            tq = smaller_t[0]
        elif smaller_h:
            hb = smaller_h[0]

    def fits(hb_, tq_, sk_):
        return _vmem_per_step(hb_, ch, tq_, sk_, itemsize) <= budget

    for cand in [h for h in h_divs if h <= hb]:   # largest head pack that fits
        hb = cand
        if fits(hb, tq, sk):
            break
    while not fits(hb, tq, sk) and sk > _LANE:
        sk = max(t for t in t_divs if t < sk)
    while not fits(hb, tq, sk) and tq > _LANE:
        tq = max(t for t in t_divs if t < tq)
    return hb, tq, sk


def qkv_attention(qkv, n_heads, block_sizes=None):
    """qkv: [N, 3*H*C, T] -> [N, H*C, T]  (QKVAttention 'split-first' ordering)."""
    bs, width, length = qkv.shape
    assert width % (3 * n_heads) == 0
    ch = width // (3 * n_heads)
    H = n_heads

    # Free reshape (contiguous split of the channel axis): (N, 3*H, C, T).
    qkv4 = qkv.reshape(bs, 3 * H, ch, length)

    # Lane-dense T: pad the sequence axis to a multiple of 128 so output/score
    # vregs are full and stores are unmasked.  Padded keys get masked in-kernel;
    # padded query columns are sliced off below.
    t_pad = max(_LANE, -(-length // _LANE) * _LANE)
    if t_pad != length:
        qkv4 = jnp.pad(qkv4, ((0, 0), (0, 0), (0, 0), (0, t_pad - length)))

    vmem_limit = _vmem_limit_bytes()
    if block_sizes is None:
        budget = int(vmem_limit * 0.7)    # headroom for uncounted temporaries
        hb, tq, sk = _choose_blocks(bs, H, ch, t_pad, qkv.dtype.itemsize, budget)
    else:
        hb, tq, sk = block_sizes
        assert H % hb == 0 and t_pad % tq == 0 and t_pad % sk == 0
        assert tq % _LANE == 0 and sk % _LANE == 0
    # TODO(synk): prime/awkward n_heads collapse to hb=1; a ragged last head
    # group (pl.cdiv grid + masking) would avoid the extra grid steps.
    groups = H // hb
    n_q = t_pad // tq
    n_kv = t_pad // sk

    scale2 = 1.0 / math.sqrt(ch)          # (ch ** -0.25) ** 2, folded into q

    kernel = functools.partial(
        _flash_qkv_kernel, scale2=scale2, kv_block=sk, seq_len=length,
        mask_keys=(t_pad != length))

    q_block = (1, hb, ch, tq)
    kv_block = (1, hb, ch, sk)
    q_spec = pl.BlockSpec(q_block, lambda n, g, qi, ki: (n, g, 0, qi))
    k_spec = pl.BlockSpec(kv_block, lambda n, g, qi, ki: (n, groups + g, 0, ki))
    v_spec = pl.BlockSpec(kv_block, lambda n, g, qi, ki: (n, 2 * groups + g, 0, ki))
    o_spec = pl.BlockSpec(q_block, lambda n, g, qi, ki: (n, g, 0, qi))

    out = pl.pallas_call(
        kernel,
        out_shape=jax.ShapeDtypeStruct((bs, H, ch, t_pad), qkv.dtype),
        grid_spec=pltpu.PrefetchScalarGridSpec(
            num_scalar_prefetch=0,
            grid=(bs, groups, n_q, n_kv),
            in_specs=[q_spec, k_spec, v_spec],
            out_specs=o_spec,
            scratch_shapes=[
                pltpu.VMEM((hb, 1, tq), jnp.float32),    # running max
                pltpu.VMEM((hb, 1, tq), jnp.float32),    # running denom
                pltpu.VMEM((hb, ch, tq), jnp.float32),   # output accumulator
            ]),
        compiler_params=pltpu.CompilerParams(
            dimension_semantics=("parallel", "parallel", "parallel", "arbitrary"),
            vmem_limit_bytes=vmem_limit),
    )(qkv4, qkv4, qkv4)   # one HBM buffer, three BlockSpec windows (q/k/v)

    if t_pad != length:
        out = out[..., :length]
    return out.reshape(bs, H * ch, length)


def _reference(qkv, n_heads):
    """Pure-JAX reference mirroring the PyTorch QKVAttention forward."""
    bs, width, length = qkv.shape
    ch = width // (3 * n_heads)
    q, k, v = jnp.split(qkv, 3, axis=1)                 # each (bs, H*ch, T)
    scale = 1.0 / math.sqrt(math.sqrt(ch))
    q = (q * scale).reshape(bs * n_heads, ch, length)
    k = (k * scale).reshape(bs * n_heads, ch, length)
    v = v.reshape(bs * n_heads, ch, length)
    w = jnp.einsum('bct,bcs->bts', q, k)
    w = jax.nn.softmax(w.astype(jnp.float32), axis=-1).astype(w.dtype)
    a = jnp.einsum('bts,bcs->bct', w, v)
    return a.reshape(bs, -1, length)


if __name__ == "__main__":
    # T=600 (non-multiple of 128) exercises: T padding + key masking, multiple
    # key tiles (online softmax accumulation), head packing, and the
    # generation-aware block/VMEM selection -- while staying small.
    N, H, C, T = 2, 2, 8, 600            # width = 3*H*C = 48
    key = jax.random.PRNGKey(0)
    qkv = jax.random.normal(key, (N, 3 * H * C, T), dtype=jnp.float32)

    out = qkv_attention(qkv, n_heads=H)
    jax.block_until_ready(out)

    ref = _reference(qkv, n_heads=H)
    assert out.shape == (N, H * C, T)
    assert jnp.allclose(out, ref, atol=2e-3, rtol=2e-3), \
        float(jnp.max(jnp.abs(out - ref)))
    print("KERNEL_OK")
</pallas_src>

<mosaic_0001>
module attributes {stable_mosaic.version = 11 : i64} {
  func.func @_flash_qkv_kernel(%arg0: i32, %arg1: i32, %arg2: i32, %arg3: i32, %arg4: memref<1x2x8x640xf32, #tpu.memory_space<vmem>>, %arg5: memref<1x2x8x128xf32, #tpu.memory_space<vmem>>, %arg6: memref<1x2x8x128xf32, #tpu.memory_space<vmem>>, %arg7: memref<1x2x8x640xf32, #tpu.memory_space<vmem>>, %arg8: memref<2x1x640xf32, #tpu.memory_space<vmem>>, %arg9: memref<2x1x640xf32, #tpu.memory_space<vmem>>, %arg10: memref<2x8x640xf32, #tpu.memory_space<vmem>>) attributes {dimension_semantics = [#tpu.dimension_semantics<parallel>, #tpu.dimension_semantics<parallel>, #tpu.dimension_semantics<parallel>, #tpu.dimension_semantics<arbitrary>], iteration_bounds = array<i64: 2, 1, 1, 5>, scalar_prefetch = 0 : i64, scratch_operands = 3 : i64, tpu.core_type = #tpu.core_type<tc>, window_params = [{transform_indices = @transform_0, window_bounds = array<i64: 1, 2, 8, 640>}, {transform_indices = @transform_1, window_bounds = array<i64: 1, 2, 8, 128>}, {transform_indices = @transform_2, window_bounds = array<i64: 1, 2, 8, 128>}, {transform_indices = @transform_3, window_bounds = array<i64: 1, 2, 8, 640>}]} {
    %c0_i32 = arith.constant 0 : i32
    %0 = arith.cmpi eq, %arg3, %c0_i32 : i32
    %1 = arith.extui %0 : i1 to i32
    %c0_i32_0 = arith.constant 0 : i32
    %2 = arith.cmpi ne, %1, %c0_i32_0 : i32
    scf.if %2 {
      %cst_36 = arith.constant -1.000000e+30 : f32
      %45 = vector.broadcast %cst_36 : f32 to vector<2x1x640xf32>
      %c0_37 = arith.constant 0 : index
      %c0_38 = arith.constant 0 : index
      %c0_39 = arith.constant 0 : index
      %46 = vector.load %arg8[%c0_37, %c0_38, %c0_39] : memref<2x1x640xf32, #tpu.memory_space<vmem>>, vector<2x1x640xf32>
      tpu.vector_store %arg8[%c0_37, %c0_38, %c0_39], %45 {strides = array<i32>} : memref<2x1x640xf32, #tpu.memory_space<vmem>>, vector<2x1x640xf32>,
      %cst_40 = arith.constant 0.000000e+00 : f32
      %47 = vector.broadcast %cst_40 : f32 to vector<2x1x640xf32>
      %c0_41 = arith.constant 0 : index
      %c0_42 = arith.constant 0 : index
      %c0_43 = arith.constant 0 : index
      %48 = vector.load %arg9[%c0_41, %c0_42, %c0_43] : memref<2x1x640xf32, #tpu.memory_space<vmem>>, vector<2x1x640xf32>
      tpu.vector_store %arg9[%c0_41, %c0_42, %c0_43], %47 {strides = array<i32>} : memref<2x1x640xf32, #tpu.memory_space<vmem>>, vector<2x1x640xf32>,
      %cst_44 = arith.constant 0.000000e+00 : f32
      %49 = vector.broadcast %cst_44 : f32 to vector<2x8x640xf32>
      %c0_45 = arith.constant 0 : index
      %c0_46 = arith.constant 0 : index
      %c0_47 = arith.constant 0 : index
      %50 = vector.load %arg10[%c0_45, %c0_46, %c0_47] : memref<2x8x640xf32, #tpu.memory_space<vmem>>, vector<2x8x640xf32>
      tpu.vector_store %arg10[%c0_45, %c0_46, %c0_47], %49 {strides = array<i32>} : memref<2x8x640xf32, #tpu.memory_space<vmem>>, vector<2x8x640xf32>,
    } else {
    }
    %c0 = arith.constant 0 : index
    %c0_1 = arith.constant 0 : index
    %c0_2 = arith.constant 0 : index
    %c0_3 = arith.constant 0 : index
    %3 = vector.load %arg4[%c0, %c0_1, %c0_2, %c0_3] : memref<1x2x8x640xf32, #tpu.memory_space<vmem>>, vector<1x2x8x640xf32>
    %4 = vector.shape_cast %3 : vector<1x2x8x640xf32> to vector<2x8x640xf32>
    %cst = arith.constant 0.353553385 : f32
    %5 = vector.broadcast %cst : f32 to vector<2x8x640xf32>
    %6 = arith.mulf %4, %5 : vector<2x8x640xf32>
    %c0_4 = arith.constant 0 : index
    %c0_5 = arith.constant 0 : index
    %c0_6 = arith.constant 0 : index
    %c0_7 = arith.constant 0 : index
    %7 = vector.load %arg5[%c0_4, %c0_5, %c0_6, %c0_7] : memref<1x2x8x128xf32, #tpu.memory_space<vmem>>, vector<1x2x8x128xf32>
    %8 = vector.shape_cast %7 : vector<1x2x8x128xf32> to vector<2x8x128xf32>
    %c0_8 = arith.constant 0 : index
    %c0_9 = arith.constant 0 : index
    %c0_10 = arith.constant 0 : index
    %c0_11 = arith.constant 0 : index
    %9 = vector.load %arg6[%c0_8, %c0_9, %c0_10, %c0_11] : memref<1x2x8x128xf32, #tpu.memory_space<vmem>>, vector<1x2x8x128xf32>
    %10 = vector.shape_cast %9 : vector<1x2x8x128xf32> to vector<2x8x128xf32>
    %cst_12 = arith.constant dense<0.000000e+00> : vector<2x128x640xf32>
    %11 = tpu.matmul %8, %6, %cst_12 {dimension_numbers = #tpu.dot_dimension_numbers<[1], [1], [2], [2], [0, 0, 0, 2, 1, 2], [0], [0]>} : vector<2x8x128xf32>, vector<2x8x640xf32>, vector<2x128x640xf32> -> vector<2x128x640xf32>
    %c128_i32 = arith.constant 128 : i32
    %12 = arith.muli %arg3, %c128_i32 : i32
    %13 = tpu.iota {dimensions = array<i32: 1>} : vector<2x128x640xi32>
    %14 = vector.broadcast %12 : i32 to vector<2x128x640xi32>
    %15 = arith.addi %14, %13 : vector<2x128x640xi32>
    %c600_i32 = arith.constant 600 : i32
    %16 = vector.broadcast %c600_i32 : i32 to vector<2x128x640xi32>
    %17 = arith.cmpi slt, %15, %16 : vector<2x128x640xi32>
    %cst_13 = arith.constant -1.000000e+30 : f32
    %18 = vector.broadcast %cst_13 : f32 to vector<2x128x640xf32>
    %19 = arith.select %17, %11, %18 : vector<2x128x640xi1>, vector<2x128x640xf32>
    %c0_14 = arith.constant 0 : index
    %c0_15 = arith.constant 0 : index
    %c0_16 = arith.constant 0 : index
    %20 = vector.load %arg8[%c0_14, %c0_15, %c0_16] : memref<2x1x640xf32, #tpu.memory_space<vmem>>, vector<2x1x640xf32>
    %cst_17 = arith.constant dense<0xFF800000> : vector<2x640xf32>
    %21 = vector.multi_reduction <maximumf>, %19, %cst_17 [1] : vector<2x128x640xf32> to vector<2x640xf32>
    %22 = vector.shape_cast %21 : vector<2x640xf32> to vector<2x1x640xf32>
    %23 = arith.maximumf %20, %22 : vector<2x1x640xf32>
    %24 = arith.subf %20, %23 : vector<2x1x640xf32>
    %25 = math.exp %24 : vector<2x1x640xf32>
    %26 = vector.broadcast %23 : vector<2x1x640xf32> to vector<2x128x640xf32>
    %27 = arith.subf %19, %26 : vector<2x128x640xf32>
    %28 = math.exp %27 : vector<2x128x640xf32>
    %c0_18 = arith.constant 0 : index
    %c0_19 = arith.constant 0 : index
    %c0_20 = arith.constant 0 : index
    %29 = vector.load %arg9[%c0_18, %c0_19, %c0_20] : memref<2x1x640xf32, #tpu.memory_space<vmem>>, vector<2x1x640xf32>
    %30 = arith.mulf %25, %29 : vector<2x1x640xf32>
    %cst_21 = arith.constant dense<0.000000e+00> : vector<2x640xf32>
    %31 = vector.multi_reduction <add>, %28, %cst_21 [1] : vector<2x128x640xf32> to vector<2x640xf32>
    %32 = vector.shape_cast %31 : vector<2x640xf32> to vector<2x1x640xf32>
    %33 = arith.addf %30, %32 : vector<2x1x640xf32>
    %c0_22 = arith.constant 0 : index
    %c0_23 = arith.constant 0 : index
    %c0_24 = arith.constant 0 : index
    %34 = vector.load %arg9[%c0_22, %c0_23, %c0_24] : memref<2x1x640xf32, #tpu.memory_space<vmem>>, vector<2x1x640xf32>
    tpu.vector_store %arg9[%c0_22, %c0_23, %c0_24], %33 {strides = array<i32>} : memref<2x1x640xf32, #tpu.memory_space<vmem>>, vector<2x1x640xf32>,
    %cst_25 = arith.constant dense<0.000000e+00> : vector<2x8x640xf32>
    %35 = tpu.matmul %10, %28, %cst_25 {dimension_numbers = #tpu.dot_dimension_numbers<[2], [1], [1], [2], [0, 0, 0, 1, 1, 2], [0], [0]>} : vector<2x8x128xf32>, vector<2x128x640xf32>, vector<2x8x640xf32> -> vector<2x8x640xf32>
    %c0_26 = arith.constant 0 : index
    %c0_27 = arith.constant 0 : index
    %c0_28 = arith.constant 0 : index
    %36 = vector.load %arg10[%c0_26, %c0_27, %c0_28] : memref<2x8x640xf32, #tpu.memory_space<vmem>>, vector<2x8x640xf32>
    %37 = vector.broadcast %25 : vector<2x1x640xf32> to vector<2x8x640xf32>
    %38 = arith.mulf %37, %36 : vector<2x8x640xf32>
    %39 = arith.addf %38, %35 : vector<2x8x640xf32>
    %c0_29 = arith.constant 0 : index
    %c0_30 = arith.constant 0 : index
    %c0_31 = arith.constant 0 : index
    %40 = vector.load %arg10[%c0_29, %c0_30, %c0_31] : memref<2x8x640xf32, #tpu.memory_space<vmem>>, vector<2x8x640xf32>
    tpu.vector_store %arg10[%c0_29, %c0_30, %c0_31], %39 {strides = array<i32>} : memref<2x8x640xf32, #tpu.memory_space<vmem>>, vector<2x8x640xf32>,
    %c0_32 = arith.constant 0 : index
    %c0_33 = arith.constant 0 : index
    %c0_34 = arith.constant 0 : index
    %41 = vector.load %arg8[%c0_32, %c0_33, %c0_34] : memref<2x1x640xf32, #tpu.memory_space<vmem>>, vector<2x1x640xf32>
    tpu.vector_store %arg8[%c0_32, %c0_33, %c0_34], %23 {strides = array<i32>} : memref<2x1x640xf32, #tpu.memory_space<vmem>>, vector<2x1x640xf32>,
    %c4_i32 = arith.constant 4 : i32
    %42 = arith.cmpi eq, %arg3, %c4_i32 : i32
    %43 = arith.extui %42 : i1 to i32
    %c0_i32_35 = arith.constant 0 : i32
    %44 = arith.cmpi ne, %43, %c0_i32_35 : i32
    scf.if %44 {
      %c0_36 = arith.constant 0 : index
      %c0_37 = arith.constant 0 : index
      %c0_38 = arith.constant 0 : index
      %45 = vector.load %arg9[%c0_36, %c0_37, %c0_38] : memref<2x1x640xf32, #tpu.memory_space<vmem>>, vector<2x1x640xf32>
      %cst_39 = arith.constant 1.000000e+00 : f32
      %46 = vector.broadcast %cst_39 : f32 to vector<2x1x640xf32>
      %47 = arith.divf %46, %45 : vector<2x1x640xf32>
      %c0_40 = arith.constant 0 : index
      %c0_41 = arith.constant 0 : index
      %c0_42 = arith.constant 0 : index
      %48 = vector.load %arg10[%c0_40, %c0_41, %c0_42] : memref<2x8x640xf32, #tpu.memory_space<vmem>>, vector<2x8x640xf32>
      %49 = vector.broadcast %47 : vector<2x1x640xf32> to vector<2x8x640xf32>
      %50 = arith.mulf %48, %49 : vector<2x8x640xf32>
      %c0_43 = arith.constant 0 : index
      %c0_44 = arith.constant 0 : index
      %c0_45 = arith.constant 0 : index
      %c0_46 = arith.constant 0 : index
      %51 = vector.load %arg7[%c0_43, %c0_44, %c0_45, %c0_46] : memref<1x2x8x640xf32, #tpu.memory_space<vmem>>, vector<1x2x8x640xf32>
      %52 = vector.shape_cast %51 : vector<1x2x8x640xf32> to vector<2x8x640xf32>
      %53 = vector.shape_cast %50 : vector<2x8x640xf32> to vector<1x2x8x640xf32>
      tpu.vector_store %arg7[%c0_43, %c0_44, %c0_45, %c0_46], %53 {strides = array<i32>} : memref<1x2x8x640xf32, #tpu.memory_space<vmem>>, vector<1x2x8x640xf32>,
    } else {
    }
    return
  }
  func.func @transform_0(%arg0: i32, %arg1: i32, %arg2: i32, %arg3: i32) -> (i32, i32, i32, i32) {
    %c0_i32 = arith.constant 0 : i32
    %c0_i32_0 = arith.constant 0 : i32
    return %arg0, %arg1, %c0_i32, %arg2 : i32, i32, i32, i32
  }
  func.func @transform_1(%arg0: i32, %arg1: i32, %arg2: i32, %arg3: i32) -> (i32, i32, i32, i32) {
    %c1_i32 = arith.constant 1 : i32
    %0 = arith.addi %c1_i32, %arg1 : i32
    %c0_i32 = arith.constant 0 : i32
    %c0_i32_0 = arith.constant 0 : i32
    return %arg0, %0, %c0_i32, %arg3 : i32, i32, i32, i32
  }
  func.func @transform_2(%arg0: i32, %arg1: i32, %arg2: i32, %arg3: i32) -> (i32, i32, i32, i32) {
    %c2_i32 = arith.constant 2 : i32
    %0 = arith.addi %c2_i32, %arg1 : i32
    %c0_i32 = arith.constant 0 : i32
    %c0_i32_0 = arith.constant 0 : i32
    return %arg0, %0, %c0_i32, %arg3 : i32, i32, i32, i32
  }
  func.func @transform_3(%arg0: i32, %arg1: i32, %arg2: i32, %arg3: i32) -> (i32, i32, i32, i32) {
    %c0_i32 = arith.constant 0 : i32
    %c0_i32_0 = arith.constant 0 : i32
    return %arg0, %arg1, %c0_i32, %arg2 : i32, i32, i32, i32
  }
}

</mosaic_0001>

<llo_original>
// kernel: tpu_custom_call.1
$region0: #{tpu_custom_call.1}
  #allocation0 [shape = 'u32[]', space=smem, size = 0x4, offset = 0x4, fixed_abs, tag = 'smem constant byte address 0x4 - core index']
  #allocation1 [shape = 'u32[144,128]{1,0:T(1,128)}', space=vmem, size = 0x12000, scoped, tag = 'internal scratch']
  #allocation2 [shape = 'f32[2,1,640]{2,1,0:T(1,128)}', space=vmem, size = 0x1400, scoped, tag = 'scratch operand']
  #allocation3 [shape = 'f32[2,1,640]{2,1,0:T(1,128)}', space=vmem, size = 0x1400, scoped, tag = 'scratch operand']
  #allocation4 [shape = 'f32[2,8,640]{2,1,0:T(8,128)}', space=vmem, size = 0xa000, scoped, tag = 'scratch operand']
  %s0 = inlined_call_operand.hbm [shape: f32[2,6,8,640], index: 0, kind: input, shape index: {}]
  %s1 = inlined_call_operand.hbm [shape: f32[2,6,8,640], index: 1, kind: input, shape index: {}]
  %s2 = inlined_call_operand.hbm [shape: f32[2,6,8,640], index: 2, kind: input, shape index: {}]
  %s3 = inlined_call_operand.hbm [shape: f32[2,2,8,640], index: 3, kind: output, shape index: {}]
  %s4 = sld [smem:[#allocation0]]
  $region65: #{tpu_custom_call.1} parent=0
    _
  %s6 = ssub.s32 1, %s4
  %s7 = scalar_select 0, %s6, %s4
  $region1: #{tpu_custom_call.1} parent=0
    #allocation5 [shape = 'u8[81920]{0}', space=vmem, size = 0x14000, scoped, tag = 'input window, operand 0']
    #allocation6 [shape = 's32[2]{0}', space=sflag, size = 0x8, scoped, tag = 'scoped memory for tpu_custom_call.1']
    #allocation7 [shape = 's32[2]{0}', space=sflag, size = 0x8, scoped, tag = 'scoped memory for tpu_custom_call.1']
    #allocation8 [shape = 'u8[16384]{0}', space=vmem, size = 0x4000, scoped, tag = 'input window, operand 1']
    #allocation9 [shape = 's32[2]{0}', space=sflag, size = 0x8, scoped, tag = 'scoped memory for tpu_custom_call.1']
    #allocation10 [shape = 'u8[16384]{0}', space=vmem, size = 0x4000, scoped, tag = 'input window, operand 2']
    #allocation11 [shape = 'u8[81920]{0}', space=vmem, size = 0x14000, scoped, tag = 'output window, operand 0']
    %8 = vsyncpa [#allocation6], 0
    %s9 = scalar_lea.sflag [#allocation6], 1
    %10 = vsyncpa %s9, 0
    %11 = vsyncpa [#allocation9], 0
    %s12 = scalar_lea.sflag [#allocation9], 1
    %13 = vsyncpa %s12, 0
    %14 = vsyncpa [#allocation7], 0
    %s15 = scalar_lea.sflag [#allocation7], 1
    %16 = vsyncpa %s15, 0
    loop: start=0, step=1, limit=12
    $region2: #{tpu_custom_call.1} parent=1 // loop_pre_header
      _
    $region3: #{tpu_custom_call.1} parent=1 // loop_header
      %s18 = sphi 0, %s22
      %p19 = scmp.ge.s32.totalorder %s18, 12
      %s25 = sphi 0, %s51
      %s26 = sphi 0, %s47
      %s27 = sphi 0, %s43
      %s28 = sphi 0, %s39
      %s29 = sphi 0, %s25
      %s30 = sphi 0, %s26
      %s31 = sphi 0, %s27
      %s32 = sphi 0, %s28
      %s33 = sphi 0, %s29
      %s34 = sphi 0, %s30
      %s35 = sphi 0, %s31
      %s36 = sphi 0, %s32
      %s58 = sphi 0, %s60
      %s61 = sphi 0, %s58
      %s62 = sphi 0, %s61
      %s78 = sphi 0, %s62
      %s90 = sphi 0, %s92
      %s93 = sphi 0, %s90
      %s94 = sphi 0, %s93
      %s110 = sphi 0, %s94
      %s122 = sphi 0, %s124
      %s125 = sphi 0, %s122
      %s126 = sphi 0, %s125
      %s142 = sphi 0, %s126
      %s152 = sphi 0, %s154
      %s155 = sphi 0, %s152
      %s156 = sphi 0, %s155
      %s172 = sphi 0, %s156
    $region4: #{tpu_custom_call.1} parent=1 // loop_header_branch
      %21 = sbr.rel (%p19) target = $region8
    $region5: #{tpu_custom_call.1} parent=1 // loop_body
      %s23 = ssub.s32 %s18, 1
      %s24 = ssub.s32 %s18, 2
      %s37 = sadd.s32 1, %s28
      %p38 = scmp.ge.s32.totalorder %s37, 5
      %s39 = scalar_select %p38, 0, %s37
      %s40 = sadd.s32 1, %s27
      %s41 = scalar_select %p38, %s40, %s27
      %p42 = scmp.ge.s32.totalorder %s41, 1
      %s43 = scalar_select %p42, 0, %s41
      %s44 = sadd.s32 1, %s26
      %s45 = scalar_select %p42, %s44, %s26
      %p46 = scmp.ge.s32.totalorder %s45, 1
      %s47 = scalar_select %p46, 0, %s45
      %s48 = sadd.s32 1, %s25
      %s49 = scalar_select %p46, %s48, %s25
      %p50 = scmp.ge.s32.totalorder %s49, 2
      %s51 = scalar_select %p50, 0, %s49
      %s52 = ssub.s32 %s25, %s51
      %s53 = ssub.s32 %s26, %s47
      %s54 = sor.u32 %s52, %s53
      %s55 = ssub.s32 %s27, %s43
      %s56 = sor.u32 %s54, %s55
      %p57 = scmp.eq.s32.totalorder %s56, 0
      %s59 = sadd.s32 %s58, 1
      %s60 = scalar_select %p57, %s58, %s59
      %p63 = pneg %p57
      %p64 = scmp.eq.s32.totalorder %s18, 9
      %p65 = por %p63, %p64
      %p66 = scmp.ne.s32.totalorder %s58, %s61
      %p67 = scmp.eq.s32.totalorder %s18, 0
      %p68 = por %p66, %p67
      %p69 = scmp.ne.s32.totalorder %s58, %s61
      %p70 = scmp.eq.s32.totalorder %s23, 9
      %p71 = por %p69, %p70
      %p72 = scmp.ne.s32.totalorder %s61, %s62
      %p73 = scmp.eq.s32.totalorder %s23, 0
      %p74 = por %p72, %p73
      %p75 = scmp.ne.s32.totalorder %s61, %s62
      %p76 = scmp.eq.s32.totalorder %s24, 9
      %p77 = por %p75, %p76
      %p79 = scmp.ne.s32.totalorder %s62, %s78
      %p80 = scmp.eq.s32.totalorder %s24, 0
      %p81 = por %p79, %p80
      %s82 = sadd.s32 %s26, 1
      %s83 = sadd.s32 %s47, 1
      %s84 = ssub.s32 %s25, %s51
      %s85 = ssub.s32 %s82, %s83
      %s86 = sor.u32 %s84, %s85
      %s87 = ssub.s32 %s28, %s39
      %s88 = sor.u32 %s86, %s87
      %p89 = scmp.eq.s32.totalorder %s88, 0
      %s91 = sadd.s32 %s90, 1
      %s92 = scalar_select %p89, %s90, %s91
      %p95 = pneg %p89
      %p96 = scmp.eq.s32.totalorder %s18, 9
      %p97 = por %p95, %p96
      %p98 = scmp.ne.s32.totalorder %s90, %s93
      %p99 = scmp.eq.s32.totalorder %s18, 0
      %p100 = por %p98, %p99
      %p101 = scmp.ne.s32.totalorder %s90, %s93
      %p102 = scmp.eq.s32.totalorder %s23, 9
      %p103 = por %p101, %p102
      %p104 = scmp.ne.s32.totalorder %s93, %s94
      %p105 = scmp.eq.s32.totalorder %s23, 0
      %p106 = por %p104, %p105
      %p107 = scmp.ne.s32.totalorder %s93, %s94
      %p108 = scmp.eq.s32.totalorder %s24, 9
      %p109 = por %p107, %p108
      %p111 = scmp.ne.s32.totalorder %s94, %s110
      %p112 = scmp.eq.s32.totalorder %s24, 0
      %p113 = por %p111, %p112
      %s114 = sadd.s32 %s26, 2
      %s115 = sadd.s32 %s47, 2
      %s116 = ssub.s32 %s25, %s51
      %s117 = ssub.s32 %s114, %s115
      %s118 = sor.u32 %s116, %s117
      %s119 = ssub.s32 %s28, %s39
      %s120 = sor.u32 %s118, %s119
      %p121 = scmp.eq.s32.totalorder %s120, 0
      %s123 = sadd.s32 %s122, 1
      %s124 = scalar_select %p121, %s122, %s123
      %p127 = pneg %p121
      %p128 = scmp.eq.s32.totalorder %s18, 9
      %p129 = por %p127, %p128
      %p130 = scmp.ne.s32.totalorder %s122, %s125
      %p131 = scmp.eq.s32.totalorder %s18, 0
      %p132 = por %p130, %p131
      %p133 = scmp.ne.s32.totalorder %s122, %s125
      %p134 = scmp.eq.s32.totalorder %s23, 9
      %p135 = por %p133, %p134
      %p136 = scmp.ne.s32.totalorder %s125, %s126
      %p137 = scmp.eq.s32.totalorder %s23, 0
      %p138 = por %p136, %p137
      %p139 = scmp.ne.s32.totalorder %s125, %s126
      %p140 = scmp.eq.s32.totalorder %s24, 9
      %p141 = por %p139, %p140
      %p143 = scmp.ne.s32.totalorder %s126, %s142
      %p144 = scmp.eq.s32.totalorder %s24, 0
      %p145 = por %p143, %p144
      %s146 = ssub.s32 %s25, %s51
      %s147 = ssub.s32 %s26, %s47
      %s148 = sor.u32 %s146, %s147
      %s149 = ssub.s32 %s27, %s43
      %s150 = sor.u32 %s148, %s149
      %p151 = scmp.eq.s32.totalorder %s150, 0
      %s153 = sadd.s32 %s152, 1
      %s154 = scalar_select %p151, %s152, %s153
      %p157 = pneg %p151
      %p158 = scmp.eq.s32.totalorder %s18, 9
      %p159 = por %p157, %p158
      %p160 = scmp.ne.s32.totalorder %s152, %s155
      %p161 = scmp.eq.s32.totalorder %s18, 0
      %p162 = por %p160, %p161
      %p163 = scmp.ne.s32.totalorder %s152, %s155
      %p164 = scmp.eq.s32.totalorder %s23, 9
      %p165 = por %p163, %p164
      %p166 = scmp.ne.s32.totalorder %s155, %s156
      %p167 = scmp.eq.s32.totalorder %s23, 0
      %p168 = por %p166, %p167
      %p169 = scmp.ne.s32.totalorder %s155, %s156
      %p170 = scmp.eq.s32.totalorder %s24, 9
      %p171 = por %p169, %p170
      %p173 = scmp.ne.s32.totalorder %s156, %s172
      %p174 = scmp.eq.s32.totalorder %s24, 0
      %p175 = por %p173, %p174
      %p176 = scmp.le.s32.totalorder 1, %s18
      %p177 = scmp.lt.s32.totalorder %s18, 11
      %p178 = pnand %p176, %p177
      %p179 = pneg %p178
      // Predicated region
      $region9: #{tpu_custom_call.1} parent=5 // pred_check
        _
      $region10: #{tpu_custom_call.1} parent=5 // pred_check_branch
        %181 = sbr.rel (%p178) target = $region12
      $region11: #{tpu_custom_call.1} parent=5 // pred_region
        %s182 = ssub.s32 %s18, 1
      $region12: #{tpu_custom_call.1} parent=5 // pred_fallthru
        _
      %p183 = scmp.lt.s32.totalorder %s18, 10
      // Predicated region
      $region13: #{tpu_custom_call.1} parent=5 // pred_check
        %p184 = pneg %p183
      $region14: #{tpu_custom_call.1} parent=5 // pred_check_branch
        %186 = sbr.rel (%p184) target = $region16
      $region15: #{tpu_custom_call.1} parent=5 // pred_region
        // Predicated region
        $region17: #{tpu_custom_call.1} parent=15 // pred_check
          %p187 = pneg %p68
        $region18: #{tpu_custom_call.1} parent=15 // pred_check_branch
          %189 = sbr.rel (%p187) target = $region20
        $region19: #{tpu_custom_call.1} parent=15 // pred_region
          %s190 = sand.u32 %s58, 1
          %s191 = scalar_lea.sflag [#allocation6], %s190
          %s192 = sand.u32 %s58, 1
          %s193 = smul.addr %s192, 80
          %s194 = scalar_lea.vmem [#allocation5], %s193
          %s195 = smul.u32 2, %s26
          %s196 = smul.u32 5, %s27
          %s198 = ssub.s32 1280, 1280
          %199 = vsyncadd %s191, %s198
          %s200 = smul.addr %s195, 5
          %s201 = sadd.s32 %s196, %s200
          %s202 = smul.addr %s25, 30
          %s203 = sadd.s32 %s201, %s202
          %s204 = smul.addr %s203, 128
          %s205 = scalar_lea.hbm %s0, %s204
          %s206 = sshll.u32 %s194, 4
          %s207 = int_to_ptr.vmem [resolvable:$true] %s206
          %212 = dma.hbm_to_vmem [thread:$0]  %s205, 1280, %s207, %s191, 640, 640, 40
        $region20: #{tpu_custom_call.1} parent=15 // pred_fallthru
          _
        // Predicated region
        $region21: #{tpu_custom_call.1} parent=15 // pred_check
          %p213 = pneg %p100
        $region22: #{tpu_custom_call.1} parent=15 // pred_check_branch
          %215 = sbr.rel (%p213) target = $region24
        $region23: #{tpu_custom_call.1} parent=15 // pred_region
          %s216 = sand.u32 %s18, 1
          %s217 = scalar_lea.sflag [#allocation9], %s216
          %s218 = sand.u32 %s90, 1
          %s219 = smul.addr %s218, 16
          %s220 = scalar_lea.vmem [#allocation8], %s219
          %s221 = sadd.s32 %s26, 1
          %s222 = smul.u32 2, %s221
          %s224 = ssub.s32 256, 256
          %225 = vsyncadd %s217, %s224
          %s226 = smul.addr %s222, 5
          %s227 = sadd.s32 %s28, %s226
          %s228 = smul.addr %s25, 30
          %s229 = sadd.s32 %s227, %s228
          %s230 = smul.addr %s229, 128
          %s231 = scalar_lea.hbm %s1, %s230
          %s232 = sshll.u32 %s220, 4
          %s233 = int_to_ptr.vmem [resolvable:$true] %s232
          %238 = dma.hbm_to_vmem [thread:$0]  %s231, 256, %s233, %s217, 640, 128, 8
        $region24: #{tpu_custom_call.1} parent=15 // pred_fallthru
          _
        // Predicated region
        $region25: #{tpu_custom_call.1} parent=15 // pred_check
          %p239 = pneg %p132
        $region26: #{tpu_custom_call.1} parent=15 // pred_check_branch
          %241 = sbr.rel (%p239) target = $region28
        $region27: #{tpu_custom_call.1} parent=15 // pred_region
          %s242 = sand.u32 %s18, 1
          %s243 = scalar_lea.sflag [#allocation9], %s242
          %s244 = sand.u32 %s122, 1
          %s245 = smul.addr %s244, 16
          %s246 = scalar_lea.vmem [#allocation10], %s245
          %s247 = sadd.s32 %s26, 2
          %s248 = smul.u32 2, %s247
          %s250 = ssub.s32 256, 256
          %251 = vsyncadd %s243, %s250
          %s252 = smul.addr %s248, 5
          %s253 = sadd.s32 %s28, %s252
          %s254 = smul.addr %s25, 30
          %s255 = sadd.s32 %s253, %s254
          %s256 = smul.addr %s255, 128
          %s257 = scalar_lea.hbm %s2, %s256
          %s258 = sshll.u32 %s246, 4
          %s259 = int_to_ptr.vmem [resolvable:$true] %s258
          %264 = dma.hbm_to_vmem [thread:$0]  %s257, 256, %s259, %s243, 640, 128, 8
        $region28: #{tpu_custom_call.1} parent=15 // pred_fallthru
          _
      $region16: #{tpu_custom_call.1} parent=5 // pred_fallthru
        _
      %p265 = scmp.le.s32.totalorder 1, %s18
      %p266 = scmp.lt.s32.totalorder %s18, 11
      %p267 = pnand %p265, %p266
      %p268 = pneg %p267
      // Predicated region
      $region29: #{tpu_custom_call.1} parent=5 // pred_check
        _
      $region30: #{tpu_custom_call.1} parent=5 // pred_check_branch
        %270 = sbr.rel (%p267) target = $region32
      $region31: #{tpu_custom_call.1} parent=5 // pred_region
        %s271 = ssub.s32 %s18, 1
        %s272 = sand.u32 %s61, 1
        %s273 = scalar_lea.sflag [#allocation6], %s272
        %s274 = sand.u32 %s61, 1
        %s275 = smul.addr %s274, 80
        %s276 = scalar_lea.vmem [#allocation5], %s275
        // Predicated region
        $region33: #{tpu_custom_call.1} parent=31 // pred_check
          %p277 = pneg %p74
        $region34: #{tpu_custom_call.1} parent=31 // pred_check_branch
          %279 = sbr.rel (%p277) target = $region36
        $region35: #{tpu_custom_call.1} parent=31 // pred_region
          %280 = dma.done %s273, 1280
        $region36: #{tpu_custom_call.1} parent=31 // pred_fallthru
          _
        %s281 = sand.u32 %s23, 1
        %s282 = scalar_lea.sflag [#allocation9], %s281
        %s283 = sand.u32 %s93, 1
        %s284 = smul.addr %s283, 16
        %s285 = scalar_lea.vmem [#allocation8], %s284
        // Predicated region
        $region37: #{tpu_custom_call.1} parent=31 // pred_check
          %p286 = pneg %p106
        $region38: #{tpu_custom_call.1} parent=31 // pred_check_branch
          %288 = sbr.rel (%p286) target = $region40
        $region39: #{tpu_custom_call.1} parent=31 // pred_region
          %289 = dma.done %s282, 256
        $region40: #{tpu_custom_call.1} parent=31 // pred_fallthru
          _
        %s290 = sand.u32 %s23, 1
        %s291 = scalar_lea.sflag [#allocation9], %s290
        %s292 = sand.u32 %s125, 1
        %s293 = smul.addr %s292, 16
        %s294 = scalar_lea.vmem [#allocation10], %s293
        // Predicated region
        $region41: #{tpu_custom_call.1} parent=31 // pred_check
          %p295 = pneg %p138
        $region42: #{tpu_custom_call.1} parent=31 // pred_check_branch
          %297 = sbr.rel (%p295) target = $region44
        $region43: #{tpu_custom_call.1} parent=31 // pred_region
          %298 = dma.done %s291, 256
        $region44: #{tpu_custom_call.1} parent=31 // pred_fallthru
          _
        %s299 = sand.u32 %s61, 1
        %s300 = scalar_lea.sflag [#allocation6], %s299
        %s301 = sand.u32 %s61, 1
        %s302 = smul.addr %s301, 80
        %s303 = scalar_lea.vmem [#allocation5], %s302
        %p304 = pneg %p74
        %p305 = pneg %p71
        %s306 = sand.u32 %s23, 1
        %s307 = scalar_lea.sflag [#allocation9], %s306
        %s308 = sand.u32 %s93, 1
        %s309 = smul.addr %s308, 16
        %s310 = scalar_lea.vmem [#allocation8], %s309
        %p311 = pneg %p106
        %p312 = pneg %p103
        %s313 = sand.u32 %s23, 1
        %s314 = scalar_lea.sflag [#allocation9], %s313
        %s315 = sand.u32 %s125, 1
        %s316 = smul.addr %s315, 16
        %s317 = scalar_lea.vmem [#allocation10], %s316
        %p318 = pneg %p138
        %p319 = pneg %p135
        %p320 = pneg %p168
        %p321 = pneg %p165
        %s322 = sand.u32 %s155, 1
        %s323 = scalar_lea.sflag [#allocation7], %s322
        %s324 = sand.u32 %s155, 1
        %s325 = smul.addr %s324, 80
        %s326 = scalar_lea.vmem [#allocation11], %s325
        %s327 = smul.u32 2, %s30
        %s328 = smul.u32 5, %s31
        %s329 = sadd.s32 %s30, 1
        %s330 = smul.u32 2, %s329
        %s331 = sadd.s32 %s30, 2
        %s332 = smul.u32 2, %s331
        %s333 = smul.u32 2, %s30
        %s334 = smul.u32 5, %s31
        %p335 = scmp.eq.s32.totalorder %s32, 0
        // Predicated region
        $region45: #{tpu_custom_call.1} parent=31 // pred_check
          %p336 = pneg %p335
        $region46: #{tpu_custom_call.1} parent=31 // pred_check_branch
          %338 = sbr.rel (%p336) target = $region48
        $region47: #{tpu_custom_call.1} parent=31 // pred_region
          %v339 = vlaneseq
          %vm340 = vcmp.ge.s32.totalorder %v339, 0
          %vm341 = vcmp.lt.s32.totalorder %v339, 640
          %vm342 = vmand %vm340, %vm341
          %343 = vst.msk [vmem:[#allocation2] sm:$0x1f] %vm342, -1e+30
          %344 = vst.msk [vmem:[#allocation2 + $0x5] sm:$0x1f] %vm342, -1e+30
          %345 = vst.msk [vmem:[#allocation3] sm:$0x1f] %vm342, 0.0
          %346 = vst.msk [vmem:[#allocation3 + $0x5] sm:$0x1f] %vm342, 0.0
          %347 = vst [vmem:[#allocation4] sm:$0xff] 0.0
          %348 = vst [vmem:[#allocation4 + $0x8] sm:$0xff] 0.0
          %349 = vst [vmem:[#allocation4 + $0x10] sm:$0xff] 0.0
          %350 = vst [vmem:[#allocation4 + $0x18] sm:$0xff] 0.0
          %351 = vst [vmem:[#allocation4 + $0x20] sm:$0xff] 0.0
          %352 = vst [vmem:[#allocation4 + $0x28] sm:$0xff] 0.0
          %353 = vst [vmem:[#allocation4 + $0x30] sm:$0xff] 0.0
          %354 = vst [vmem:[#allocation4 + $0x38] sm:$0xff] 0.0
          %355 = vst [vmem:[#allocation4 + $0x40] sm:$0xff] 0.0
          %356 = vst [vmem:[#allocation4 + $0x48] sm:$0xff] 0.0
        $region48: #{tpu_custom_call.1} parent=31 // pred_fallthru
          _
        %v357 = vld [vmem:[%s276] sm:$0xff]
        %v358 = vld [vmem:[%s276 + $0x8] sm:$0xff]
        %v359 = vld [vmem:[%s276 + $0x10] sm:$0xff]
        %v360 = vld [vmem:[%s276 + $0x18] sm:$0xff]
        %v361 = vld [vmem:[%s276 + $0x20] sm:$0xff]
        %v362 = vld [vmem:[%s276 + $0x28] sm:$0xff]
        %v363 = vld [vmem:[%s276 + $0x30] sm:$0xff]
        %v364 = vld [vmem:[%s276 + $0x38] sm:$0xff]
        %v365 = vld [vmem:[%s276 + $0x40] sm:$0xff]
        %v366 = vld [vmem:[%s276 + $0x48] sm:$0xff]
        %v367 = vmul.f32 %v357, 0.35355338
        %v368 = vmul.f32 %v358, 0.35355338
        %v369 = vmul.f32 %v359, 0.35355338
        %v370 = vmul.f32 %v360, 0.35355338
        %v371 = vmul.f32 %v361, 0.35355338
        %v372 = vmul.f32 %v362, 0.35355338
        %v373 = vmul.f32 %v363, 0.35355338
        %v374 = vmul.f32 %v364, 0.35355338
        %v375 = vmul.f32 %v365, 0.35355338
        %v376 = vmul.f32 %v366, 0.35355338
        %v377 = vld [vmem:[%s285] sm:$0xff]
        %v378 = vld [vmem:[%s285 + $0x8] sm:$0xff]
        %v379 = vld [vmem:[%s294] sm:$0xff]
        %v380 = vld [vmem:[%s294 + $0x8] sm:$0xff]
        %381 = vxpose.xlu0.b32.start [1/16] %v377, 128
        %382 = vxpose.xlu0.b32.cont [2/16] 0.0, 128
        %383 = vxpose.xlu0.b32.cont [3/16] 0.0, 128
        %384 = vxpose.xlu0.b32.cont [4/16] 0.0, 128
        %385 = vxpose.xlu0.b32.cont [5/16] 0.0, 128
        %386 = vxpose.xlu0.b32.cont [6/16] 0.0, 128
        %387 = vxpose.xlu0.b32.cont [7/16] 0.0, 128
        %388 = vxpose.xlu0.b32.cont [8/16] 0.0, 128
        %389 = vxpose.xlu0.b32.cont [9/16] 0.0, 128
        %390 = vxpose.xlu0.b32.cont [10/16] 0.0, 128
        %391 = vxpose.xlu0.b32.cont [11/16] 0.0, 128
        %392 = vxpose.xlu0.b32.cont [12/16] 0.0, 128
        %393 = vxpose.xlu0.b32.cont [13/16] 0.0, 128
        %394 = vxpose.xlu0.b32.cont [14/16] 0.0, 128
        %395 = vxpose.xlu0.b32.cont [15/16] 0.0, 128
        %396 = vxpose.xlu0.b32.end [16/16] 0.0, 128
        %v397 = vpop.trf.xlu0
        %v398 = vpop.trf.xlu0
        %v399 = vpop.trf.xlu0
        %v400 = vpop.trf.xlu0
        %v401 = vpop.trf.xlu0
        %v402 = vpop.trf.xlu0
        %v403 = vpop.trf.xlu0
        %v404 = vpop.trf.xlu0
        %v405 = vpop.trf.xlu0
        %v406 = vpop.trf.xlu0
        %v407 = vpop.trf.xlu0
        %v408 = vpop.trf.xlu0
        %v409 = vpop.trf.xlu0
        %v410 = vpop.trf.xlu0
        %v411 = vpop.trf.xlu0
        %v412 = vpop.trf.xlu0
        %vm413 = vcmask 64512
        %v415 = vsel %vm413, %v397, 0
        %v418 = vsel %vm413, %v398, 0
        %v421 = vsel %vm413, %v399, 0
        %v424 = vsel %vm413, %v400, 0
        %v427 = vsel %vm413, %v401, 0
        %v430 = vsel %vm413, %v402, 0
        %v433 = vsel %vm413, %v403, 0
        %v436 = vsel %vm413, %v404, 0
        %v439 = vsel %vm413, %v405, 0
        %v442 = vsel %vm413, %v406, 0
        %v445 = vsel %vm413, %v407, 0
        %v448 = vsel %vm413, %v408, 0
        %v451 = vsel %vm413, %v409, 0
        %v454 = vsel %vm413, %v410, 0
        %v457 = vsel %vm413, %v411, 0
        %v460 = vsel %vm413, %v412, 0
        %462 = vmatprep.subr.mxu0 %v368
        %463 = vmatpush1.msra.mxu0 %v367
        %464 = vmatprep.subr.mxu0 0.0
        %465 = vmatpush1.msra.mxu0 0.0
        %466 = vmatprep.subr.mxu0 0.0
        %467 = vmatpush1.msra.mxu0 0.0
        %468 = vmatprep.subr.mxu0 0.0
        %469 = vmatpush1.msra.mxu0 0.0
        %470 = vmatprep.subr.mxu0 0.0
        %471 = vmatpush1.msra.mxu0 0.0
        %472 = vmatprep.subr.mxu0 0.0
        %473 = vmatpush1.msra.mxu0 0.0
        %474 = vmatprep.subr.mxu0 0.0
        %475 = vmatpush1.msra.mxu0 0.0
        %476 = vmatprep.subr.mxu0 0.0
        %477 = vmatpush1.msra.mxu0 0.0
        %478 = vmatprep.subr.mxu0 0.0
        %479 = vmatpush1.msra.mxu0 0.0
        %480 = vmatprep.subr.mxu0 0.0
        %481 = vmatpush1.msra.mxu0 0.0
        %482 = vmatprep.subr.mxu0 0.0
        %483 = vmatpush1.msra.mxu0 0.0
        %484 = vmatprep.subr.mxu0 0.0
        %485 = vmatpush1.msra.mxu0 0.0
        %486 = vmatprep.subr.mxu0 0.0
        %487 = vmatpush1.msra.mxu0 0.0
        %488 = vmatprep.subr.mxu0 0.0
        %489 = vmatpush1.msra.mxu0 0.0
        %490 = vmatprep.subr.mxu0 0.0
        %491 = vmatpush1.msra.mxu0 0.0
        %492 = vmatprep.subr.mxu0 0.0
        %493 = vmatpush1.msra.mxu0 0.0
        %494 = vmatprep.subr.mxu0 0.0
        %495 = vmatpush1.msra.mxu0 0.0
        %496 = vmatprep.subr.mxu0 0.0
        %497 = vmatpush1.msra.mxu0 0.0
        %498 = vmatprep.subr.mxu0 0.0
        %499 = vmatpush1.msra.mxu0 0.0
        %500 = vmatprep.subr.mxu0 0.0
        %501 = vmatpush1.msra.mxu0 0.0
        %502 = vmatprep.subr.mxu0 0.0
        %503 = vmatpush1.msra.mxu0 0.0
        %504 = vmatprep.subr.mxu0 0.0
        %505 = vmatpush1.msra.mxu0 0.0
        %506 = vmatprep.subr.mxu0 0.0
        %507 = vmatpush1.msra.mxu0 0.0
        %508 = vmatprep.subr.mxu0 0.0
        %509 = vmatpush1.msra.mxu0 0.0
        %510 = vmatprep.subr.mxu0 0.0
        %511 = vmatpush1.msra.mxu0 0.0
        %512 = vmatprep.subr.mxu0 0.0
        %513 = vmatpush1.msra.mxu0 0.0
        %514 = vmatprep.subr.mxu0 0.0
        %515 = vmatpush1.msra.mxu0 0.0
        %516 = vmatprep.subr.mxu0 0.0
        %517 = vmatpush1.msra.mxu0 0.0
        %518 = vmatprep.subr.mxu0 0.0
        %519 = vmatpush1.msra.mxu0 0.0
        %520 = vmatprep.subr.mxu0 0.0
        %521 = vmatpush1.msra.mxu0 0.0
        %522 = vmatprep.subr.mxu0 0.0
        %523 = vmatpush1.msra.mxu0 0.0
        %524 = vmatprep.subr.mxu0 0.0
        %525 = vmatpush1.msra.mxu0 0.0
        %526 = vmatprep.mubr.f32.mxu0 0.0
        %527 = vmatmul.mubr.f32.gmra.mrb[0].mxu0 %v415
        %v528 = vpop.f32.mrb[0].mxu0
        %v529 = vadd.f32 0.0, %v528
        %v530 = vpop.f32.mrb[0].mxu0
        %v531 = vadd.f32 0.0, %v530
        %532 = vmatprep.mubr.f32.mxu0 0.0
        %533 = vmatmul.mubr.f32.gmra.mrb[0].mxu0 %v418
        %v534 = vpop.f32.mrb[0].mxu0
        %v535 = vadd.f32 0.0, %v534
        %v536 = vpop.f32.mrb[0].mxu0
        %v537 = vadd.f32 0.0, %v536
        %538 = vmatprep.mubr.f32.mxu0 0.0
        %539 = vmatmul.mubr.f32.gmra.mrb[0].mxu0 %v421
        %v540 = vpop.f32.mrb[0].mxu0
        %v541 = vadd.f32 0.0, %v540
        %v542 = vpop.f32.mrb[0].mxu0
        %v543 = vadd.f32 0.0, %v542
        %544 = vmatprep.mubr.f32.mxu0 0.0
        %545 = vmatmul.mubr.f32.gmra.mrb[0].mxu0 %v424
        %v546 = vpop.f32.mrb[0].mxu0
        %v547 = vadd.f32 0.0, %v546
        %v548 = vpop.f32.mrb[0].mxu0
        %v549 = vadd.f32 0.0, %v548
        %550 = vmatprep.mubr.f32.mxu0 0.0
        %551 = vmatmul.mubr.f32.gmra.mrb[0].mxu0 %v427
        %v552 = vpop.f32.mrb[0].mxu0
        %v553 = vadd.f32 0.0, %v552
        %v554 = vpop.f32.mrb[0].mxu0
        %v555 = vadd.f32 0.0, %v554
        %556 = vmatprep.mubr.f32.mxu0 0.0
        %557 = vmatmul.mubr.f32.gmra.mrb[0].mxu0 %v430
        %v558 = vpop.f32.mrb[0].mxu0
        %v559 = vadd.f32 0.0, %v558
        %v560 = vpop.f32.mrb[0].mxu0
        %v561 = vadd.f32 0.0, %v560
        %562 = vmatprep.mubr.f32.mxu0 0.0
        %563 = vmatmul.mubr.f32.gmra.mrb[0].mxu0 %v433
        %v564 = vpop.f32.mrb[0].mxu0
        %v565 = vadd.f32 0.0, %v564
        %v566 = vpop.f32.mrb[0].mxu0
        %v567 = vadd.f32 0.0, %v566
        %568 = vmatprep.mubr.f32.mxu0 0.0
        %569 = vmatmul.mubr.f32.gmra.mrb[0].mxu0 %v436
        %v570 = vpop.f32.mrb[0].mxu0
        %v571 = vadd.f32 0.0, %v570
        %v572 = vpop.f32.mrb[0].mxu0
        %v573 = vadd.f32 0.0, %v572
        %574 = vmatprep.mubr.f32.mxu0 0.0
        %575 = vmatmul.mubr.f32.gmra.mrb[0].mxu0 %v439
        %v576 = vpop.f32.mrb[0].mxu0
        %v577 = vadd.f32 0.0, %v576
        %v578 = vpop.f32.mrb[0].mxu0
        %v579 = vadd.f32 0.0, %v578
        %580 = vmatprep.mubr.f32.mxu0 0.0
        %581 = vmatmul.mubr.f32.gmra.mrb[0].mxu0 %v442
        %v582 = vpop.f32.mrb[0].mxu0
        %v583 = vadd.f32 0.0, %v582
        %v584 = vpop.f32.mrb[0].mxu0
        %v585 = vadd.f32 0.0, %v584
        %586 = vmatprep.mubr.f32.mxu0 0.0
        %587 = vmatmul.mubr.f32.gmra.mrb[0].mxu0 %v445
        %v588 = vpop.f32.mrb[0].mxu0
        %v589 = vadd.f32 0.0, %v588
        %v590 = vpop.f32.mrb[0].mxu0
        %v591 = vadd.f32 0.0, %v590
        %592 = vmatprep.mubr.f32.mxu0 0.0
        %593 = vmatmul.mubr.f32.gmra.mrb[0].mxu0 %v448
        %v594 = vpop.f32.mrb[0].mxu0
        %v595 = vadd.f32 0.0, %v594
        %v596 = vpop.f32.mrb[0].mxu0
        %v597 = vadd.f32 0.0, %v596
        %598 = vmatprep.mubr.f32.mxu0 0.0
        %599 = vmatmul.mubr.f32.gmra.mrb[0].mxu0 %v451
        %v600 = vpop.f32.mrb[0].mxu0
        %v601 = vadd.f32 0.0, %v600
        %v602 = vpop.f32.mrb[0].mxu0
        %v603 = vadd.f32 0.0, %v602
        %604 = vmatprep.mubr.f32.mxu0 0.0
        %605 = vmatmul.mubr.f32.gmra.mrb[0].mxu0 %v454
        %v606 = vpop.f32.mrb[0].mxu0
        %v607 = vadd.f32 0.0, %v606
        %v608 = vpop.f32.mrb[0].mxu0
        %v609 = vadd.f32 0.0, %v608
        %610 = vmatprep.mubr.f32.mxu0 0.0
        %611 = vmatmul.mubr.f32.gmra.mrb[0].mxu0 %v457
        %v612 = vpop.f32.mrb[0].mxu0
        %v613 = vadd.f32 0.0, %v612
        %v614 = vpop.f32.mrb[0].mxu0
        %v615 = vadd.f32 0.0, %v614
        %616 = vmatprep.mubr.f32.mxu0 0.0
        %617 = vmatmul.mubr.f32.gmra.mrb[0].mxu0 %v460
        %v618 = vpop.f32.mrb[0].mxu0
        %v619 = vadd.f32 0.0, %v618
        %v620 = vpop.f32.mrb[0].mxu0
        %v621 = vadd.f32 0.0, %v620
        %622 = vdwg.mxu0
        %623 = vmatprep.subr.mxu0 %v370
        %624 = vmatpush1.msra.mxu0 %v369
        %625 = vmatprep.subr.mxu0 0.0
        %626 = vmatpush1.msra.mxu0 0.0
        %627 = vmatprep.subr.mxu0 0.0
        %628 = vmatpush1.msra.mxu0 0.0
        %629 = vmatprep.subr.mxu0 0.0
        %630 = vmatpush1.msra.mxu0 0.0
        %631 = vmatprep.subr.mxu0 0.0
        %632 = vmatpush1.msra.mxu0 0.0
        %633 = vmatprep.subr.mxu0 0.0
        %634 = vmatpush1.msra.mxu0 0.0
        %635 = vmatprep.subr.mxu0 0.0
        %636 = vmatpush1.msra.mxu0 0.0
        %637 = vmatprep.subr.mxu0 0.0
        %638 = vmatpush1.msra.mxu0 0.0
        %639 = vmatprep.subr.mxu0 0.0
        %640 = vmatpush1.msra.mxu0 0.0
        %641 = vmatprep.subr.mxu0 0.0
        %642 = vmatpush1.msra.mxu0 0.0
        %643 = vmatprep.subr.mxu0 0.0
        %644 = vmatpush1.msra.mxu0 0.0
        %645 = vmatprep.subr.mxu0 0.0
        %646 = vmatpush1.msra.mxu0 0.0
        %647 = vmatprep.subr.mxu0 0.0
        %648 = vmatpush1.msra.mxu0 0.0
        %649 = vmatprep.subr.mxu0 0.0
        %650 = vmatpush1.msra.mxu0 0.0
        %651 = vmatprep.subr.mxu0 0.0
        %652 = vmatpush1.msra.mxu0 0.0
        %653 = vmatprep.subr.mxu0 0.0
        %654 = vmatpush1.msra.mxu0 0.0
        %655 = vmatprep.subr.mxu0 0.0
        %656 = vmatpush1.msra.mxu0 0.0
        %657 = vmatprep.subr.mxu0 0.0
        %658 = vmatpush1.msra.mxu0 0.0
        %659 = vmatprep.subr.mxu0 0.0
        %660 = vmatpush1.msra.mxu0 0.0
        %661 = vmatprep.subr.mxu0 0.0
        %662 = vmatpush1.msra.mxu0 0.0
        %663 = vmatprep.subr.mxu0 0.0
        %664 = vmatpush1.msra.mxu0 0.0
        %665 = vmatprep.subr.mxu0 0.0
        %666 = vmatpush1.msra.mxu0 0.0
        %667 = vmatprep.subr.mxu0 0.0
        %668 = vmatpush1.msra.mxu0 0.0
        %669 = vmatprep.subr.mxu0 0.0
        %670 = vmatpush1.msra.mxu0 0.0
        %671 = vmatprep.subr.mxu0 0.0
        %672 = vmatpush1.msra.mxu0 0.0
        %673 = vmatprep.subr.mxu0 0.0
        %674 = vmatpush1.msra.mxu0 0.0
        %675 = vmatprep.subr.mxu0 0.0
        %676 = vmatpush1.msra.mxu0 0.0
        %677 = vmatprep.subr.mxu0 0.0
        %678 = vmatpush1.msra.mxu0 0.0
        %679 = vmatprep.subr.mxu0 0.0
        %680 = vmatpush1.msra.mxu0 0.0
        %681 = vmatprep.subr.mxu0 0.0
        %682 = vmatpush1.msra.mxu0 0.0
        %683 = vmatprep.subr.mxu0 0.0
        %684 = vmatpush1.msra.mxu0 0.0
        %685 = vmatprep.subr.mxu0 0.0
        %686 = vmatpush1.msra.mxu0 0.0
        %687 = vmatprep.mubr.f32.mxu0 0.0
        %688 = vmatmul.mubr.f32.gmra.mrb[0].mxu0 %v415
        %v689 = vpop.f32.mrb[0].mxu0
        %v690 = vadd.f32 0.0, %v689
        %v691 = vpop.f32.mrb[0].mxu0
        %v692 = vadd.f32 0.0, %v691
        %693 = vmatprep.mubr.f32.mxu0 0.0
        %694 = vmatmul.mubr.f32.gmra.mrb[0].mxu0 %v418
        %v695 = vpop.f32.mrb[0].mxu0
        %v696 = vadd.f32 0.0, %v695
        %v697 = vpop.f32.mrb[0].mxu0
        %v698 = vadd.f32 0.0, %v697
        %699 = vmatprep.mubr.f32.mxu0 0.0
        %700 = vmatmul.mubr.f32.gmra.mrb[0].mxu0 %v421
        %v701 = vpop.f32.mrb[0].mxu0
        %v702 = vadd.f32 0.0, %v701
        %v703 = vpop.f32.mrb[0].mxu0
        %v704 = vadd.f32 0.0, %v703
        %705 = vmatprep.mubr.f32.mxu0 0.0
        %706 = vmatmul.mubr.f32.gmra.mrb[0].mxu0 %v424
        %v707 = vpop.f32.mrb[0].mxu0
        %v708 = vadd.f32 0.0, %v707
        %v709 = vpop.f32.mrb[0].mxu0
        %v710 = vadd.f32 0.0, %v709
        %711 = vmatprep.mubr.f32.mxu0 0.0
        %712 = vmatmul.mubr.f32.gmra.mrb[0].mxu0 %v427
        %v713 = vpop.f32.mrb[0].mxu0
        %v714 = vadd.f32 0.0, %v713
        %v715 = vpop.f32.mrb[0].mxu0
        %v716 = vadd.f32 0.0, %v715
        %717 = vmatprep.mubr.f32.mxu0 0.0
        %718 = vmatmul.mubr.f32.gmra.mrb[0].mxu0 %v430
        %v719 = vpop.f32.mrb[0].mxu0
        %v720 = vadd.f32 0.0, %v719
        %v721 = vpop.f32.mrb[0].mxu0
        %v722 = vadd.f32 0.0, %v721
        %723 = vmatprep.mubr.f32.mxu0 0.0
        %724 = vmatmul.mubr.f32.gmra.mrb[0].mxu0 %v433
        %v725 = vpop.f32.mrb[0].mxu0
        %v726 = vadd.f32 0.0, %v725
        %v727 = vpop.f32.mrb[0].mxu0
        %v728 = vadd.f32 0.0, %v727
        %729 = vmatprep.mubr.f32.mxu0 0.0
        %730 = vmatmul.mubr.f32.gmra.mrb[0].mxu0 %v436
        %v731 = vpop.f32.mrb[0].mxu0
        %v732 = vadd.f32 0.0, %v731
        %v733 = vpop.f32.mrb[0].mxu0
        %v734 = vadd.f32 0.0, %v733
        %735 = vmatprep.mubr.f32.mxu0 0.0
        %736 = vmatmul.mubr.f32.gmra.mrb[0].mxu0 %v439
        %v737 = vpop.f32.mrb[0].mxu0
        %v738 = vadd.f32 0.0, %v737
        %v739 = vpop.f32.mrb[0].mxu0
        %v740 = vadd.f32 0.0, %v739
        %741 = vmatprep.mubr.f32.mxu0 0.0
        %742 = vmatmul.mubr.f32.gmra.mrb[0].mxu0 %v442
        %v743 = vpop.f32.mrb[0].mxu0
        %v744 = vadd.f32 0.0, %v743
        %v745 = vpop.f32.mrb[0].mxu0
        %v746 = vadd.f32 0.0, %v745
        %747 = vmatprep.mubr.f32.mxu0 0.0
        %748 = vmatmul.mubr.f32.gmra.mrb[0].mxu0 %v445
        %v749 = vpop.f32.mrb[0].mxu0
        %v750 = vadd.f32 0.0, %v749
        %v751 = vpop.f32.mrb[0].mxu0
        %v752 = vadd.f32 0.0, %v751
        %753 = vmatprep.mubr.f32.mxu0 0.0
        %754 = vmatmul.mubr.f32.gmra.mrb[0].mxu0 %v448
        %v755 = vpop.f32.mrb[0].mxu0
        %v756 = vadd.f32 0.0, %v755
        %v757 = vpop.f32.mrb[0].mxu0
        %v758 = vadd.f32 0.0, %v757
        %759 = vmatprep.mubr.f32.mxu0 0.0
        %760 = vmatmul.mubr.f32.gmra.mrb[0].mxu0 %v451
        %v761 = vpop.f32.mrb[0].mxu0
        %v762 = vadd.f32 0.0, %v761
        %v763 = vpop.f32.mrb[0].mxu0
        %v764 = vadd.f32 0.0, %v763
        %765 = vmatprep.mubr.f32.mxu0 0.0
        %766 = vmatmul.mubr.f32.gmra.mrb[0].mxu0 %v454
        %v767 = vpop.f32.mrb[0].mxu0
        %v768 = vadd.f32 0.0, %v767
        %v769 = vpop.f32.mrb[0].mxu0
        %v770 = vadd.f32 0.0, %v769
        %771 = vmatprep.mubr.f32.mxu0 0.0
        %772 = vmatmul.mubr.f32.gmra.mrb[0].mxu0 %v457
        %v773 = vpop.f32.mrb[0].mxu0
        %v774 = vadd.f32 0.0, %v773
        %v775 = vpop.f32.mrb[0].mxu0
        %v776 = vadd.f32 0.0, %v775
        %777 = vmatprep.mubr.f32.mxu0 0.0
        %778 = vmatmul.mubr.f32.gmra.mrb[0].mxu0 %v460
        %v779 = vpop.f32.mrb[0].mxu0
        %v780 = vadd.f32 0.0, %v779
        %v781 = vpop.f32.mrb[0].mxu0
        %v782 = vadd.f32 0.0, %v781
        %783 = vdwg.mxu0
        %784 = vmatprep.subr.mxu0 0.0
        %785 = vmatpush1.msra.mxu0 %v371
        %786 = vmatprep.subr.mxu0 0.0
        %787 = vmatpush1.msra.mxu0 0.0
        %788 = vmatprep.subr.mxu0 0.0
        %789 = vmatpush1.msra.mxu0 0.0
        %790 = vmatprep.subr.mxu0 0.0
        %791 = vmatpush1.msra.mxu0 0.0
        %792 = vmatprep.subr.mxu0 0.0
        %793 = vmatpush1.msra.mxu0 0.0
        %794 = vmatprep.subr.mxu0 0.0
        %795 = vmatpush1.msra.mxu0 0.0
        %796 = vmatprep.subr.mxu0 0.0
        %797 = vmatpush1.msra.mxu0 0.0
        %798 = vmatprep.subr.mxu0 0.0
        %799 = vmatpush1.msra.mxu0 0.0
        %800 = vmatprep.subr.mxu0 0.0
        %801 = vmatpush1.msra.mxu0 0.0
        %802 = vmatprep.subr.mxu0 0.0
        %803 = vmatpush1.msra.mxu0 0.0
        %804 = vmatprep.subr.mxu0 0.0
        %805 = vmatpush1.msra.mxu0 0.0
        %806 = vmatprep.subr.mxu0 0.0
        %807 = vmatpush1.msra.mxu0 0.0
        %808 = vmatprep.subr.mxu0 0.0
        %809 = vmatpush1.msra.mxu0 0.0
        %810 = vmatprep.subr.mxu0 0.0
        %811 = vmatpush1.msra.mxu0 0.0
        %812 = vmatprep.subr.mxu0 0.0
        %813 = vmatpush1.msra.mxu0 0.0
        %814 = vmatprep.subr.mxu0 0.0
        %815 = vmatpush1.msra.mxu0 0.0
        %816 = vmatprep.subr.mxu0 0.0
        %817 = vmatpush1.msra.mxu0 0.0
        %818 = vmatprep.subr.mxu0 0.0
        %819 = vmatpush1.msra.mxu0 0.0
        %820 = vmatprep.subr.mxu0 0.0
        %821 = vmatpush1.msra.mxu0 0.0
        %822 = vmatprep.subr.mxu0 0.0
        %823 = vmatpush1.msra.mxu0 0.0
        %824 = vmatprep.subr.mxu0 0.0
        %825 = vmatpush1.msra.mxu0 0.0
        %826 = vmatprep.subr.mxu0 0.0
        %827 = vmatpush1.msra.mxu0 0.0
        %828 = vmatprep.subr.mxu0 0.0
        %829 = vmatpush1.msra.mxu0 0.0
        %830 = vmatprep.subr.mxu0 0.0
        %831 = vmatpush1.msra.mxu0 0.0
        %832 = vmatprep.subr.mxu0 0.0
        %833 = vmatpush1.msra.mxu0 0.0
        %834 = vmatprep.subr.mxu0 0.0
        %835 = vmatpush1.msra.mxu0 0.0
        %836 = vmatprep.subr.mxu0 0.0
        %837 = vmatpush1.msra.mxu0 0.0
        %838 = vmatprep.subr.mxu0 0.0
        %839 = vmatpush1.msra.mxu0 0.0
        %840 = vmatprep.subr.mxu0 0.0
        %841 = vmatpush1.msra.mxu0 0.0
        %842 = vmatprep.subr.mxu0 0.0
        %843 = vmatpush1.msra.mxu0 0.0
        %844 = vmatprep.subr.mxu0 0.0
        %845 = vmatpush1.msra.mxu0 0.0
        %846 = vmatprep.subr.mxu0 0.0
        %847 = vmatpush1.msra.mxu0 0.0
        %848 = vmatprep.mubr.f32.mxu0 0.0
        %849 = vmatmul.mubr.f32.gmra.mrb[0].mxu0 %v415
        %v850 = vpop.f32.mrb[0].mxu0
        %v851 = vadd.f32 0.0, %v850
        %v852 = vpop.f32.mrb[0].mxu0
        %853 = vmatprep.mubr.f32.mxu0 0.0
        %854 = vmatmul.mubr.f32.gmra.mrb[0].mxu0 %v418
        %v855 = vpop.f32.mrb[0].mxu0
        %v856 = vadd.f32 0.0, %v855
        %v857 = vpop.f32.mrb[0].mxu0
        %858 = vmatprep.mubr.f32.mxu0 0.0
        %859 = vmatmul.mubr.f32.gmra.mrb[0].mxu0 %v421
        %v860 = vpop.f32.mrb[0].mxu0
        %v861 = vadd.f32 0.0, %v860
        %v862 = vpop.f32.mrb[0].mxu0
        %863 = vmatprep.mubr.f32.mxu0 0.0
        %864 = vmatmul.mubr.f32.gmra.mrb[0].mxu0 %v424
        %v865 = vpop.f32.mrb[0].mxu0
        %v866 = vadd.f32 0.0, %v865
        %v867 = vpop.f32.mrb[0].mxu0
        %868 = vmatprep.mubr.f32.mxu0 0.0
        %869 = vmatmul.mubr.f32.gmra.mrb[0].mxu0 %v427
        %v870 = vpop.f32.mrb[0].mxu0
        %v871 = vadd.f32 0.0, %v870
        %v872 = vpop.f32.mrb[0].mxu0
        %873 = vmatprep.mubr.f32.mxu0 0.0
        %874 = vmatmul.mubr.f32.gmra.mrb[0].mxu0 %v430
        %v875 = vpop.f32.mrb[0].mxu0
        %v876 = vadd.f32 0.0, %v875
        %v877 = vpop.f32.mrb[0].mxu0
        %878 = vmatprep.mubr.f32.mxu0 0.0
        %879 = vmatmul.mubr.f32.gmra.mrb[0].mxu0 %v433
        %v880 = vpop.f32.mrb[0].mxu0
        %v881 = vadd.f32 0.0, %v880
        %v882 = vpop.f32.mrb[0].mxu0
        %883 = vmatprep.mubr.f32.mxu0 0.0
        %884 = vmatmul.mubr.f32.gmra.mrb[0].mxu0 %v436
        %v885 = vpop.f32.mrb[0].mxu0
        %v886 = vadd.f32 0.0, %v885
        %v887 = vpop.f32.mrb[0].mxu0
        %888 = vmatprep.mubr.f32.mxu0 0.0
        %889 = vmatmul.mubr.f32.gmra.mrb[0].mxu0 %v439
        %v890 = vpop.f32.mrb[0].mxu0
        %v891 = vadd.f32 0.0, %v890
        %v892 = vpop.f32.mrb[0].mxu0
        %893 = vmatprep.mubr.f32.mxu0 0.0
        %894 = vmatmul.mubr.f32.gmra.mrb[0].mxu0 %v442
        %v895 = vpop.f32.mrb[0].mxu0
        %v896 = vadd.f32 0.0, %v895
        %v897 = vpop.f32.mrb[0].mxu0
        %898 = vmatprep.mubr.f32.mxu0 0.0
        %899 = vmatmul.mubr.f32.gmra.mrb[0].mxu0 %v445
        %v900 = vpop.f32.mrb[0].mxu0
        %v901 = vadd.f32 0.0, %v900
        %v902 = vpop.f32.mrb[0].mxu0
        %903 = vmatprep.mubr.f32.mxu0 0.0
        %904 = vmatmul.mubr.f32.gmra.mrb[0].mxu0 %v448
        %v905 = vpop.f32.mrb[0].mxu0
        %v906 = vadd.f32 0.0, %v905
        %v907 = vpop.f32.mrb[0].mxu0
        %908 = vmatprep.mubr.f32.mxu0 0.0
        %909 = vmatmul.mubr.f32.gmra.mrb[0].mxu0 %v451
        %v910 = vpop.f32.mrb[0].mxu0
        %v911 = vadd.f32 0.0, %v910
        %v912 = vpop.f32.mrb[0].mxu0
        %913 = vmatprep.mubr.f32.mxu0 0.0
        %914 = vmatmul.mubr.f32.gmra.mrb[0].mxu0 %v454
        %v915 = vpop.f32.mrb[0].mxu0
        %v916 = vadd.f32 0.0, %v915
        %v917 = vpop.f32.mrb[0].mxu0
        %918 = vmatprep.mubr.f32.mxu0 0.0
        %919 = vmatmul.mubr.f32.gmra.mrb[0].mxu0 %v457
        %v920 = vpop.f32.mrb[0].mxu0
        %v921 = vadd.f32 0.0, %v920
        %v922 = vpop.f32.mrb[0].mxu0
        %923 = vmatprep.mubr.f32.mxu0 0.0
        %924 = vmatmul.mubr.f32.gmra.mrb[0].mxu0 %v460
        %v925 = vpop.f32.mrb[0].mxu0
        %v926 = vadd.f32 0.0, %v925
        %v927 = vpop.f32.mrb[0].mxu0
        %928 = vdwg.mxu0
        %929 = vxpose.xlu0.b32.start [1/16] %v378, 128
        %930 = vxpose.xlu0.b32.cont [2/16] 0.0, 128
        %931 = vxpose.xlu0.b32.cont [3/16] 0.0, 128
        %932 = vxpose.xlu0.b32.cont [4/16] 0.0, 128
        %933 = vxpose.xlu0.b32.cont [5/16] 0.0, 128
        %934 = vxpose.xlu0.b32.cont [6/16] 0.0, 128
        %935 = vxpose.xlu0.b32.cont [7/16] 0.0, 128
        %936 = vxpose.xlu0.b32.cont [8/16] 0.0, 128
        %937 = vxpose.xlu0.b32.cont [9/16] 0.0, 128
        %938 = vxpose.xlu0.b32.cont [10/16] 0.0, 128
        %939 = vxpose.xlu0.b32.cont [11/16] 0.0, 128
        %940 = vxpose.xlu0.b32.cont [12/16] 0.0, 128
        %941 = vxpose.xlu0.b32.cont [13/16] 0.0, 128
        %942 = vxpose.xlu0.b32.cont [14/16] 0.0, 128
        %943 = vxpose.xlu0.b32.cont [15/16] 0.0, 128
        %944 = vxpose.xlu0.b32.end [16/16] 0.0, 128
        %v945 = vpop.trf.xlu0
        %v946 = vpop.trf.xlu0
        %v947 = vpop.trf.xlu0
        %v948 = vpop.trf.xlu0
        %v949 = vpop.trf.xlu0
        %v950 = vpop.trf.xlu0
        %v951 = vpop.trf.xlu0
        %v952 = vpop.trf.xlu0
        %v953 = vpop.trf.xlu0
        %v954 = vpop.trf.xlu0
        %v955 = vpop.trf.xlu0
        %v956 = vpop.trf.xlu0
        %v957 = vpop.trf.xlu0
        %v958 = vpop.trf.xlu0
        %v959 = vpop.trf.xlu0
        %v960 = vpop.trf.xlu0
        %v962 = vsel %vm413, %v945, 0
        %v965 = vsel %vm413, %v946, 0
        %v968 = vsel %vm413, %v947, 0
        %v971 = vsel %vm413, %v948, 0
        %v974 = vsel %vm413, %v949, 0
        %v977 = vsel %vm413, %v950, 0
        %v980 = vsel %vm413, %v951, 0
        %v983 = vsel %vm413, %v952, 0
        %v986 = vsel %vm413, %v953, 0
        %v989 = vsel %vm413, %v954, 0
        %v992 = vsel %vm413, %v955, 0
        %v995 = vsel %vm413, %v956, 0
        %v998 = vsel %vm413, %v957, 0
        %v1001 = vsel %vm413, %v958, 0
        %v1004 = vsel %vm413, %v959, 0
        %v1007 = vsel %vm413, %v960, 0
        %1009 = vmatprep.subr.mxu0 %v373
        %1010 = vmatpush1.msra.mxu0 %v372
        %1011 = vmatprep.subr.mxu0 0.0
        %1012 = vmatpush1.msra.mxu0 0.0
        %1013 = vmatprep.subr.mxu0 0.0
        %1014 = vmatpush1.msra.mxu0 0.0
        %1015 = vmatprep.subr.mxu0 0.0
        %1016 = vmatpush1.msra.mxu0 0.0
        %1017 = vmatprep.subr.mxu0 0.0
        %1018 = vmatpush1.msra.mxu0 0.0
        %1019 = vmatprep.subr.mxu0 0.0
        %1020 = vmatpush1.msra.mxu0 0.0
        %1021 = vmatprep.subr.mxu0 0.0
        %1022 = vmatpush1.msra.mxu0 0.0
        %1023 = vmatprep.subr.mxu0 0.0
        %1024 = vmatpush1.msra.mxu0 0.0
        %1025 = vmatprep.subr.mxu0 0.0
        %1026 = vmatpush1.msra.mxu0 0.0
        %1027 = vmatprep.subr.mxu0 0.0
        %1028 = vmatpush1.msra.mxu0 0.0
        %1029 = vmatprep.subr.mxu0 0.0
        %1030 = vmatpush1.msra.mxu0 0.0
        %1031 = vmatprep.subr.mxu0 0.0
        %1032 = vmatpush1.msra.mxu0 0.0
        %1033 = vmatprep.subr.mxu0 0.0
        %1034 = vmatpush1.msra.mxu0 0.0
        %1035 = vmatprep.subr.mxu0 0.0
        %1036 = vmatpush1.msra.mxu0 0.0
        %1037 = vmatprep.subr.mxu0 0.0
        %1038 = vmatpush1.msra.mxu0 0.0
        %1039 = vmatprep.subr.mxu0 0.0
        %1040 = vmatpush1.msra.mxu0 0.0
        %1041 = vmatprep.subr.mxu0 0.0
        %1042 = vmatpush1.msra.mxu0 0.0
        %1043 = vmatprep.subr.mxu0 0.0
        %1044 = vmatpush1.msra.mxu0 0.0
        %1045 = vmatprep.subr.mxu0 0.0
        %1046 = vmatpush1.msra.mxu0 0.0
        %1047 = vmatprep.subr.mxu0 0.0
        %1048 = vmatpush1.msra.mxu0 0.0
        %1049 = vmatprep.subr.mxu0 0.0
        %1050 = vmatpush1.msra.mxu0 0.0
        %1051 = vmatprep.subr.mxu0 0.0
        %1052 = vmatpush1.msra.mxu0 0.0
        %1053 = vmatprep.subr.mxu0 0.0
        %1054 = vmatpush1.msra.mxu0 0.0
        %1055 = vmatprep.subr.mxu0 0.0
        %1056 = vmatpush1.msra.mxu0 0.0
        %1057 = vmatprep.subr.mxu0 0.0
        %1058 = vmatpush1.msra.mxu0 0.0
        %1059 = vmatprep.subr.mxu0 0.0
        %1060 = vmatpush1.msra.mxu0 0.0
        %1061 = vmatprep.subr.mxu0 0.0
        %1062 = vmatpush1.msra.mxu0 0.0
        %1063 = vmatprep.subr.mxu0 0.0
        %1064 = vmatpush1.msra.mxu0 0.0
        %1065 = vmatprep.subr.mxu0 0.0
        %1066 = vmatpush1.msra.mxu0 0.0
        %1067 = vmatprep.subr.mxu0 0.0
        %1068 = vmatpush1.msra.mxu0 0.0
        %1069 = vmatprep.subr.mxu0 0.0
        %1070 = vmatpush1.msra.mxu0 0.0
        %1071 = vmatprep.subr.mxu0 0.0
        %1072 = vmatpush1.msra.mxu0 0.0
        %1073 = vmatprep.mubr.f32.mxu0 0.0
        %1074 = vmatmul.mubr.f32.gmra.mrb[0].mxu0 %v962
        %v1075 = vpop.f32.mrb[0].mxu0
        %v1076 = vadd.f32 0.0, %v1075
        %v1077 = vpop.f32.mrb[0].mxu0
        %v1078 = vadd.f32 0.0, %v1077
        %1079 = vmatprep.mubr.f32.mxu0 0.0
        %1080 = vmatmul.mubr.f32.gmra.mrb[0].mxu0 %v965
        %v1081 = vpop.f32.mrb[0].mxu0
        %v1082 = vadd.f32 0.0, %v1081
        %v1083 = vpop.f32.mrb[0].mxu0
        %v1084 = vadd.f32 0.0, %v1083
        %1085 = vmatprep.mubr.f32.mxu0 0.0
        %1086 = vmatmul.mubr.f32.gmra.mrb[0].mxu0 %v968
        %v1087 = vpop.f32.mrb[0].mxu0
        %v1088 = vadd.f32 0.0, %v1087
        %v1089 = vpop.f32.mrb[0].mxu0
        %v1090 = vadd.f32 0.0, %v1089
        %1091 = vmatprep.mubr.f32.mxu0 0.0
        %1092 = vmatmul.mubr.f32.gmra.mrb[0].mxu0 %v971
        %v1093 = vpop.f32.mrb[0].mxu0
        %v1094 = vadd.f32 0.0, %v1093
        %v1095 = vpop.f32.mrb[0].mxu0
        %v1096 = vadd.f32 0.0, %v1095
        %1097 = vmatprep.mubr.f32.mxu0 0.0
        %1098 = vmatmul.mubr.f32.gmra.mrb[0].mxu0 %v974
        %v1099 = vpop.f32.mrb[0].mxu0
        %v1100 = vadd.f32 0.0, %v1099
        %v1101 = vpop.f32.mrb[0].mxu0
        %v1102 = vadd.f32 0.0, %v1101
        %1103 = vmatprep.mubr.f32.mxu0 0.0
        %1104 = vmatmul.mubr.f32.gmra.mrb[0].mxu0 %v977
        %v1105 = vpop.f32.mrb[0].mxu0
        %v1106 = vadd.f32 0.0, %v1105
        %v1107 = vpop.f32.mrb[0].mxu0
        %v1108 = vadd.f32 0.0, %v1107
        %1109 = vmatprep.mubr.f32.mxu0 0.0
        %1110 = vmatmul.mubr.f32.gmra.mrb[0].mxu0 %v980
        %v1111 = vpop.f32.mrb[0].mxu0
        %v1112 = vadd.f32 0.0, %v1111
        %v1113 = vpop.f32.mrb[0].mxu0
        %v1114 = vadd.f32 0.0, %v1113
        %1115 = vmatprep.mubr.f32.mxu0 0.0
        %1116 = vmatmul.mubr.f32.gmra.mrb[0].mxu0 %v983
        %v1117 = vpop.f32.mrb[0].mxu0
        %v1118 = vadd.f32 0.0, %v1117
        %v1119 = vpop.f32.mrb[0].mxu0
        %v1120 = vadd.f32 0.0, %v1119
        %1121 = vmatprep.mubr.f32.mxu0 0.0
        %1122 = vmatmul.mubr.f32.gmra.mrb[0].mxu0 %v986
        %v1123 = vpop.f32.mrb[0].mxu0
        %v1124 = vadd.f32 0.0, %v1123
        %v1125 = vpop.f32.mrb[0].mxu0
        %v1126 = vadd.f32 0.0, %v1125
        %1127 = vmatprep.mubr.f32.mxu0 0.0
        %1128 = vmatmul.mubr.f32.gmra.mrb[0].mxu0 %v989
        %v1129 = vpop.f32.mrb[0].mxu0
        %v1130 = vadd.f32 0.0, %v1129
        %v1131 = vpop.f32.mrb[0].mxu0
        %v1132 = vadd.f32 0.0, %v1131
        %1133 = vmatprep.mubr.f32.mxu0 0.0
        %1134 = vmatmul.mubr.f32.gmra.mrb[0].mxu0 %v992
        %v1135 = vpop.f32.mrb[0].mxu0
        %v1136 = vadd.f32 0.0, %v1135
        %v1137 = vpop.f32.mrb[0].mxu0
        %v1138 = vadd.f32 0.0, %v1137
        %1139 = vmatprep.mubr.f32.mxu0 0.0
        %1140 = vmatmul.mubr.f32.gmra.mrb[0].mxu0 %v995
        %v1141 = vpop.f32.mrb[0].mxu0
        %v1142 = vadd.f32 0.0, %v1141
        %v1143 = vpop.f32.mrb[0].mxu0
        %v1144 = vadd.f32 0.0, %v1143
        %1145 = vmatprep.mubr.f32.mxu0 0.0
        %1146 = vmatmul.mubr.f32.gmra.mrb[0].mxu0 %v998
        %v1147 = vpop.f32.mrb[0].mxu0
        %v1148 = vadd.f32 0.0, %v1147
        %v1149 = vpop.f32.mrb[0].mxu0
        %v1150 = vadd.f32 0.0, %v1149
        %1151 = vmatprep.mubr.f32.mxu0 0.0
        %1152 = vmatmul.mubr.f32.gmra.mrb[0].mxu0 %v1001
        %v1153 = vpop.f32.mrb[0].mxu0
        %v1154 = vadd.f32 0.0, %v1153
        %v1155 = vpop.f32.mrb[0].mxu0
        %v1156 = vadd.f32 0.0, %v1155
        %1157 = vmatprep.mubr.f32.mxu0 0.0
        %1158 = vmatmul.mubr.f32.gmra.mrb[0].mxu0 %v1004
        %v1159 = vpop.f32.mrb[0].mxu0
        %v1160 = vadd.f32 0.0, %v1159
        %v1161 = vpop.f32.mrb[0].mxu0
        %v1162 = vadd.f32 0.0, %v1161
        %1163 = vmatprep.mubr.f32.mxu0 0.0
        %1164 = vmatmul.mubr.f32.gmra.mrb[0].mxu0 %v1007
        %v1165 = vpop.f32.mrb[0].mxu0
        %v1166 = vadd.f32 0.0, %v1165
        %v1167 = vpop.f32.mrb[0].mxu0
        %v1168 = vadd.f32 0.0, %v1167
        %1169 = vdwg.mxu0
        %1170 = vmatprep.subr.mxu0 %v375
        %1171 = vmatpush1.msra.mxu0 %v374
        %1172 = vmatprep.subr.mxu0 0.0
        %1173 = vmatpush1.msra.mxu0 0.0
        %1174 = vmatprep.subr.mxu0 0.0
        %1175 = vmatpush1.msra.mxu0 0.0
        %1176 = vmatprep.subr.mxu0 0.0
        %1177 = vmatpush1.msra.mxu0 0.0
        %1178 = vmatprep.subr.mxu0 0.0
        %1179 = vmatpush1.msra.mxu0 0.0
        %1180 = vmatprep.subr.mxu0 0.0
        %1181 = vmatpush1.msra.mxu0 0.0
        %1182 = vmatprep.subr.mxu0 0.0
        %1183 = vmatpush1.msra.mxu0 0.0
        %1184 = vmatprep.subr.mxu0 0.0
        %1185 = vmatpush1.msra.mxu0 0.0
        %1186 = vmatprep.subr.mxu0 0.0
        %1187 = vmatpush1.msra.mxu0 0.0
        %1188 = vmatprep.subr.mxu0 0.0
        %1189 = vmatpush1.msra.mxu0 0.0
        %1190 = vmatprep.subr.mxu0 0.0
        %1191 = vmatpush1.msra.mxu0 0.0
        %1192 = vmatprep.subr.mxu0 0.0
        %1193 = vmatpush1.msra.mxu0 0.0
        %1194 = vmatprep.subr.mxu0 0.0
        %1195 = vmatpush1.msra.mxu0 0.0
        %1196 = vmatprep.subr.mxu0 0.0
        %1197 = vmatpush1.msra.mxu0 0.0
        %1198 = vmatprep.subr.mxu0 0.0
        %1199 = vmatpush1.msra.mxu0 0.0
        %1200 = vmatprep.subr.mxu0 0.0
        %1201 = vmatpush1.msra.mxu0 0.0
        %1202 = vmatprep.subr.mxu0 0.0
        %1203 = vmatpush1.msra.mxu0 0.0
        %1204 = vmatprep.subr.mxu0 0.0
        %1205 = vmatpush1.msra.mxu0 0.0
        %1206 = vmatprep.subr.mxu0 0.0
        %1207 = vmatpush1.msra.mxu0 0.0
        %1208 = vmatprep.subr.mxu0 0.0
        %1209 = vmatpush1.msra.mxu0 0.0
        %1210 = vmatprep.subr.mxu0 0.0
        %1211 = vmatpush1.msra.mxu0 0.0
        %1212 = vmatprep.subr.mxu0 0.0
        %1213 = vmatpush1.msra.mxu0 0.0
        %1214 = vmatprep.subr.mxu0 0.0
        %1215 = vmatpush1.msra.mxu0 0.0
        %1216 = vmatprep.subr.mxu0 0.0
        %1217 = vmatpush1.msra.mxu0 0.0
        %1218 = vmatprep.subr.mxu0 0.0
        %1219 = vmatpush1.msra.mxu0 0.0
        %1220 = vmatprep.subr.mxu0 0.0
        %1221 = vmatpush1.msra.mxu0 0.0
        %1222 = vmatprep.subr.mxu0 0.0
        %1223 = vmatpush1.msra.mxu0 0.0
        %1224 = vmatprep.subr.mxu0 0.0
        %1225 = vmatpush1.msra.mxu0 0.0
        %1226 = vmatprep.subr.mxu0 0.0
        %1227 = vmatpush1.msra.mxu0 0.0
        %1228 = vmatprep.subr.mxu0 0.0
        %1229 = vmatpush1.msra.mxu0 0.0
        %1230 = vmatprep.subr.mxu0 0.0
        %1231 = vmatpush1.msra.mxu0 0.0
        %1232 = vmatprep.subr.mxu0 0.0
        %1233 = vmatpush1.msra.mxu0 0.0
        %1234 = vmatprep.mubr.f32.mxu0 0.0
        %1235 = vmatmul.mubr.f32.gmra.mrb[0].mxu0 %v962
        %v1236 = vpop.f32.mrb[0].mxu0
        %v1237 = vadd.f32 0.0, %v1236
        %v1238 = vpop.f32.mrb[0].mxu0
        %v1239 = vadd.f32 0.0, %v1238
        %1240 = vmatprep.mubr.f32.mxu0 0.0
        %1241 = vmatmul.mubr.f32.gmra.mrb[0].mxu0 %v965
        %v1242 = vpop.f32.mrb[0].mxu0
        %v1243 = vadd.f32 0.0, %v1242
        %v1244 = vpop.f32.mrb[0].mxu0
        %v1245 = vadd.f32 0.0, %v1244
        %1246 = vmatprep.mubr.f32.mxu0 0.0
        %1247 = vmatmul.mubr.f32.gmra.mrb[0].mxu0 %v968
        %v1248 = vpop.f32.mrb[0].mxu0
        %v1249 = vadd.f32 0.0, %v1248
        %v1250 = vpop.f32.mrb[0].mxu0
        %v1251 = vadd.f32 0.0, %v1250
        %1252 = vmatprep.mubr.f32.mxu0 0.0
        %1253 = vmatmul.mubr.f32.gmra.mrb[0].mxu0 %v971
        %v1254 = vpop.f32.mrb[0].mxu0
        %v1255 = vadd.f32 0.0, %v1254
        %v1256 = vpop.f32.mrb[0].mxu0
        %v1257 = vadd.f32 0.0, %v1256
        %1258 = vmatprep.mubr.f32.mxu0 0.0
        %1259 = vmatmul.mubr.f32.gmra.mrb[0].mxu0 %v974
        %v1260 = vpop.f32.mrb[0].mxu0
        %v1261 = vadd.f32 0.0, %v1260
        %v1262 = vpop.f32.mrb[0].mxu0
        %v1263 = vadd.f32 0.0, %v1262
        %1264 = vmatprep.mubr.f32.mxu0 0.0
        %1265 = vmatmul.mubr.f32.gmra.mrb[0].mxu0 %v977
        %v1266 = vpop.f32.mrb[0].mxu0
        %v1267 = vadd.f32 0.0, %v1266
        %v1268 = vpop.f32.mrb[0].mxu0
        %v1269 = vadd.f32 0.0, %v1268
        %1270 = vmatprep.mubr.f32.mxu0 0.0
        %1271 = vmatmul.mubr.f32.gmra.mrb[0].mxu0 %v980
        %v1272 = vpop.f32.mrb[0].mxu0
        %v1273 = vadd.f32 0.0, %v1272
        %v1274 = vpop.f32.mrb[0].mxu0
        %v1275 = vadd.f32 0.0, %v1274
        %1276 = vmatprep.mubr.f32.mxu0 0.0
        %1277 = vmatmul.mubr.f32.gmra.mrb[0].mxu0 %v983
        %v1278 = vpop.f32.mrb[0].mxu0
        %v1279 = vadd.f32 0.0, %v1278
        %v1280 = vpop.f32.mrb[0].mxu0
        %v1281 = vadd.f32 0.0, %v1280
        %1282 = vmatprep.mubr.f32.mxu0 0.0
        %1283 = vmatmul.mubr.f32.gmra.mrb[0].mxu0 %v986
        %v1284 = vpop.f32.mrb[0].mxu0
        %v1285 = vadd.f32 0.0, %v1284
        %v1286 = vpop.f32.mrb[0].mxu0
        %v1287 = vadd.f32 0.0, %v1286
        %1288 = vmatprep.mubr.f32.mxu0 0.0
        %1289 = vmatmul.mubr.f32.gmra.mrb[0].mxu0 %v989
        %v1290 = vpop.f32.mrb[0].mxu0
        %v1291 = vadd.f32 0.0, %v1290
        %v1292 = vpop.f32.mrb[0].mxu0
        %v1293 = vadd.f32 0.0, %v1292
        %1294 = vmatprep.mubr.f32.mxu0 0.0
        %1295 = vmatmul.mubr.f32.gmra.mrb[0].mxu0 %v992
        %v1296 = vpop.f32.mrb[0].mxu0
        %v1297 = vadd.f32 0.0, %v1296
        %v1298 = vpop.f32.mrb[0].mxu0
        %v1299 = vadd.f32 0.0, %v1298
        %1300 = vmatprep.mubr.f32.mxu0 0.0
        %1301 = vmatmul.mubr.f32.gmra.mrb[0].mxu0 %v995
        %v1302 = vpop.f32.mrb[0].mxu0
        %v1303 = vadd.f32 0.0, %v1302
        %v1304 = vpop.f32.mrb[0].mxu0
        %v1305 = vadd.f32 0.0, %v1304
        %1306 = vmatprep.mubr.f32.mxu0 0.0
        %1307 = vmatmul.mubr.f32.gmra.mrb[0].mxu0 %v998
        %v1308 = vpop.f32.mrb[0].mxu0
        %v1309 = vadd.f32 0.0, %v1308
        %v1310 = vpop.f32.mrb[0].mxu0
        %v1311 = vadd.f32 0.0, %v1310
        %1312 = vmatprep.mubr.f32.mxu0 0.0
        %1313 = vmatmul.mubr.f32.gmra.mrb[0].mxu0 %v1001
        %v1314 = vpop.f32.mrb[0].mxu0
        %v1315 = vadd.f32 0.0, %v1314
        %v1316 = vpop.f32.mrb[0].mxu0
        %v1317 = vadd.f32 0.0, %v1316
        %1318 = vmatprep.mubr.f32.mxu0 0.0
        %1319 = vmatmul.mubr.f32.gmra.mrb[0].mxu0 %v1004
        %v1320 = vpop.f32.mrb[0].mxu0
        %v1321 = vadd.f32 0.0, %v1320
        %v1322 = vpop.f32.mrb[0].mxu0
        %v1323 = vadd.f32 0.0, %v1322
        %1324 = vmatprep.mubr.f32.mxu0 0.0
        %1325 = vmatmul.mubr.f32.gmra.mrb[0].mxu0 %v1007
        %v1326 = vpop.f32.mrb[0].mxu0
        %v1327 = vadd.f32 0.0, %v1326
        %v1328 = vpop.f32.mrb[0].mxu0
        %v1329 = vadd.f32 0.0, %v1328
        %1330 = vdwg.mxu0
        %1331 = vmatprep.subr.mxu0 0.0
        %1332 = vmatpush1.msra.mxu0 %v376
        %1333 = vmatprep.subr.mxu0 0.0
        %1334 = vmatpush1.msra.mxu0 0.0
        %1335 = vmatprep.subr.mxu0 0.0
        %1336 = vmatpush1.msra.mxu0 0.0
        %1337 = vmatprep.subr.mxu0 0.0
        %1338 = vmatpush1.msra.mxu0 0.0
        %1339 = vmatprep.subr.mxu0 0.0
        %1340 = vmatpush1.msra.mxu0 0.0
        %1341 = vmatprep.subr.mxu0 0.0
        %1342 = vmatpush1.msra.mxu0 0.0
        %1343 = vmatprep.subr.mxu0 0.0
        %1344 = vmatpush1.msra.mxu0 0.0
        %1345 = vmatprep.subr.mxu0 0.0
        %1346 = vmatpush1.msra.mxu0 0.0
        %1347 = vmatprep.subr.mxu0 0.0
        %1348 = vmatpush1.msra.mxu0 0.0
        %1349 = vmatprep.subr.mxu0 0.0
        %1350 = vmatpush1.msra.mxu0 0.0
        %1351 = vmatprep.subr.mxu0 0.0
        %1352 = vmatpush1.msra.mxu0 0.0
        %1353 = vmatprep.subr.mxu0 0.0
        %1354 = vmatpush1.msra.mxu0 0.0
        %1355 = vmatprep.subr.mxu0 0.0
        %1356 = vmatpush1.msra.mxu0 0.0
        %1357 = vmatprep.subr.mxu0 0.0
        %1358 = vmatpush1.msra.mxu0 0.0
        %1359 = vmatprep.subr.mxu0 0.0
        %1360 = vmatpush1.msra.mxu0 0.0
        %1361 = vmatprep.subr.mxu0 0.0
        %1362 = vmatpush1.msra.mxu0 0.0
        %1363 = vmatprep.subr.mxu0 0.0
        %1364 = vmatpush1.msra.mxu0 0.0
        %1365 = vmatprep.subr.mxu0 0.0
        %1366 = vmatpush1.msra.mxu0 0.0
        %1367 = vmatprep.subr.mxu0 0.0
        %1368 = vmatpush1.msra.mxu0 0.0
        %1369 = vmatprep.subr.mxu0 0.0
        %1370 = vmatpush1.msra.mxu0 0.0
        %1371 = vmatprep.subr.mxu0 0.0
        %1372 = vmatpush1.msra.mxu0 0.0
        %1373 = vmatprep.subr.mxu0 0.0
        %1374 = vmatpush1.msra.mxu0 0.0
        %1375 = vmatprep.subr.mxu0 0.0
        %1376 = vmatpush1.msra.mxu0 0.0
        %1377 = vmatprep.subr.mxu0 0.0
        %1378 = vmatpush1.msra.mxu0 0.0
        %1379 = vmatprep.subr.mxu0 0.0
        %1380 = vmatpush1.msra.mxu0 0.0
        %1381 = vmatprep.subr.mxu0 0.0
        %1382 = vmatpush1.msra.mxu0 0.0
        %1383 = vmatprep.subr.mxu0 0.0
        %1384 = vmatpush1.msra.mxu0 0.0
        %1385 = vmatprep.subr.mxu0 0.0
        %1386 = vmatpush1.msra.mxu0 0.0
        %1387 = vmatprep.subr.mxu0 0.0
        %1388 = vmatpush1.msra.mxu0 0.0
        %1389 = vmatprep.subr.mxu0 0.0
        %1390 = vmatpush1.msra.mxu0 0.0
        %1391 = vmatprep.subr.mxu0 0.0
        %1392 = vmatpush1.msra.mxu0 0.0
        %1393 = vmatprep.subr.mxu0 0.0
        %1394 = vmatpush1.msra.mxu0 0.0
        %1395 = vmatprep.mubr.f32.mxu0 0.0
        %1396 = vmatmul.mubr.f32.gmra.mrb[0].mxu0 %v962
        %v1397 = vpop.f32.mrb[0].mxu0
        %v1398 = vadd.f32 0.0, %v1397
        %v1399 = vpop.f32.mrb[0].mxu0
        %1400 = vmatprep.mubr.f32.mxu0 0.0
        %1401 = vmatmul.mubr.f32.gmra.mrb[0].mxu0 %v965
        %v1402 = vpop.f32.mrb[0].mxu0
        %v1403 = vadd.f32 0.0, %v1402
        %v1404 = vpop.f32.mrb[0].mxu0
        %1405 = vmatprep.mubr.f32.mxu0 0.0
        %1406 = vmatmul.mubr.f32.gmra.mrb[0].mxu0 %v968
        %v1407 = vpop.f32.mrb[0].mxu0
        %v1408 = vadd.f32 0.0, %v1407
        %v1409 = vpop.f32.mrb[0].mxu0
        %1410 = vmatprep.mubr.f32.mxu0 0.0
        %1411 = vmatmul.mubr.f32.gmra.mrb[0].mxu0 %v971
        %v1412 = vpop.f32.mrb[0].mxu0
        %v1413 = vadd.f32 0.0, %v1412
        %v1414 = vpop.f32.mrb[0].mxu0
        %1415 = vmatprep.mubr.f32.mxu0 0.0
        %1416 = vmatmul.mubr.f32.gmra.mrb[0].mxu0 %v974
        %v1417 = vpop.f32.mrb[0].mxu0
        %v1418 = vadd.f32 0.0, %v1417
        %v1419 = vpop.f32.mrb[0].mxu0
        %1420 = vmatprep.mubr.f32.mxu0 0.0
        %1421 = vmatmul.mubr.f32.gmra.mrb[0].mxu0 %v977
        %v1422 = vpop.f32.mrb[0].mxu0
        %v1423 = vadd.f32 0.0, %v1422
        %v1424 = vpop.f32.mrb[0].mxu0
        %1425 = vmatprep.mubr.f32.mxu0 0.0
        %1426 = vmatmul.mubr.f32.gmra.mrb[0].mxu0 %v980
        %v1427 = vpop.f32.mrb[0].mxu0
        %v1428 = vadd.f32 0.0, %v1427
        %v1429 = vpop.f32.mrb[0].mxu0
        %1430 = vmatprep.mubr.f32.mxu0 0.0
        %1431 = vmatmul.mubr.f32.gmra.mrb[0].mxu0 %v983
        %v1432 = vpop.f32.mrb[0].mxu0
        %v1433 = vadd.f32 0.0, %v1432
        %v1434 = vpop.f32.mrb[0].mxu0
        %1435 = vmatprep.mubr.f32.mxu0 0.0
        %1436 = vmatmul.mubr.f32.gmra.mrb[0].mxu0 %v986
        %v1437 = vpop.f32.mrb[0].mxu0
        %v1438 = vadd.f32 0.0, %v1437
        %v1439 = vpop.f32.mrb[0].mxu0
        %1440 = vmatprep.mubr.f32.mxu0 0.0
        %1441 = vmatmul.mubr.f32.gmra.mrb[0].mxu0 %v989
        %v1442 = vpop.f32.mrb[0].mxu0
        %v1443 = vadd.f32 0.0, %v1442
        %v1444 = vpop.f32.mrb[0].mxu0
        %1445 = vmatprep.mubr.f32.mxu0 0.0
        %1446 = vmatmul.mubr.f32.gmra.mrb[0].mxu0 %v992
        %v1447 = vpop.f32.mrb[0].mxu0
        %v1448 = vadd.f32 0.0, %v1447
        %v1449 = vpop.f32.mrb[0].mxu0
        %1450 = vmatprep.mubr.f32.mxu0 0.0
        %1451 = vmatmul.mubr.f32.gmra.mrb[0].mxu0 %v995
        %v1452 = vpop.f32.mrb[0].mxu0
        %v1453 = vadd.f32 0.0, %v1452
        %v1454 = vpop.f32.mrb[0].mxu0
        %1455 = vmatprep.mubr.f32.mxu0 0.0
        %1456 = vmatmul.mubr.f32.gmra.mrb[0].mxu0 %v998
        %v1457 = vpop.f32.mrb[0].mxu0
        %v1458 = vadd.f32 0.0, %v1457
        %v1459 = vpop.f32.mrb[0].mxu0
        %1460 = vmatprep.mubr.f32.mxu0 0.0
        %1461 = vmatmul.mubr.f32.gmra.mrb[0].mxu0 %v1001
        %v1462 = vpop.f32.mrb[0].mxu0
        %v1463 = vadd.f32 0.0, %v1462
        %v1464 = vpop.f32.mrb[0].mxu0
        %1465 = vmatprep.mubr.f32.mxu0 0.0
        %1466 = vmatmul.mubr.f32.gmra.mrb[0].mxu0 %v1004
        %v1467 = vpop.f32.mrb[0].mxu0
        %v1468 = vadd.f32 0.0, %v1467
        %v1469 = vpop.f32.mrb[0].mxu0
        %1470 = vmatprep.mubr.f32.mxu0 0.0
        %1471 = vmatmul.mubr.f32.gmra.mrb[0].mxu0 %v1007
        %v1472 = vpop.f32.mrb[0].mxu0
        %v1473 = vadd.f32 0.0, %v1472
        %v1474 = vpop.f32.mrb[0].mxu0
        %1475 = vdwg.mxu0
        %s1476 = smul.u32 %s32, 128
        %v1477 = vlaneseq
        %v1478 = vshrl.u32 %v1477, 7
        %v1479 = vadd.s32 %v1478, 8
        %v1480 = vadd.s32 %v1478, 16
        %v1481 = vadd.s32 %v1478, 24
        %v1482 = vadd.s32 %v1478, 32
        %v1483 = vadd.s32 %v1478, 40
        %v1484 = vadd.s32 %v1478, 48
        %v1485 = vadd.s32 %v1478, 56
        %v1486 = vadd.s32 %v1478, 64
        %v1487 = vadd.s32 %v1478, 72
        %v1488 = vadd.s32 %v1478, 80
        %v1489 = vadd.s32 %v1478, 88
        %v1490 = vadd.s32 %v1478, 96
        %v1491 = vadd.s32 %v1478, 104
        %v1492 = vadd.s32 %v1478, 112
        %v1493 = vadd.s32 %v1478, 120
        %v1494 = vstv %s1476
        %v1495 = vadd.s32 %v1494, %v1478
        %v1496 = vadd.s32 %v1494, %v1479
        %v1497 = vadd.s32 %v1494, %v1480
        %v1498 = vadd.s32 %v1494, %v1481
        %v1499 = vadd.s32 %v1494, %v1482
        %v1500 = vadd.s32 %v1494, %v1483
        %v1501 = vadd.s32 %v1494, %v1484
        %v1502 = vadd.s32 %v1494, %v1485
        %v1503 = vadd.s32 %v1494, %v1486
        %v1504 = vadd.s32 %v1494, %v1487
        %v1505 = vadd.s32 %v1494, %v1488
        %v1506 = vadd.s32 %v1494, %v1489
        %v1507 = vadd.s32 %v1494, %v1490
        %v1508 = vadd.s32 %v1494, %v1491
        %v1509 = vadd.s32 %v1494, %v1492
        %v1510 = vadd.s32 %v1494, %v1493
        %vm1511 = vcmp.lt.s32.totalorder %v1495, 600
        %vm1512 = vcmp.lt.s32.totalorder %v1496, 600
        %vm1513 = vcmp.lt.s32.totalorder %v1497, 600
        %vm1514 = vcmp.lt.s32.totalorder %v1498, 600
        %vm1515 = vcmp.lt.s32.totalorder %v1499, 600
        %vm1516 = vcmp.lt.s32.totalorder %v1500, 600
        %vm1517 = vcmp.lt.s32.totalorder %v1501, 600
        %vm1518 = vcmp.lt.s32.totalorder %v1502, 600
        %vm1519 = vcmp.lt.s32.totalorder %v1503, 600
        %vm1520 = vcmp.lt.s32.totalorder %v1504, 600
        %vm1521 = vcmp.lt.s32.totalorder %v1505, 600
        %vm1522 = vcmp.lt.s32.totalorder %v1506, 600
        %vm1523 = vcmp.lt.s32.totalorder %v1507, 600
        %vm1524 = vcmp.lt.s32.totalorder %v1508, 600
        %vm1525 = vcmp.lt.s32.totalorder %v1509, 600
        %vm1526 = vcmp.lt.s32.totalorder %v1510, 600
        %v1527 = vsel %vm1511, %v529, -1e+30
        %v1528 = vsel %vm1511, %v531, -1e+30
        %v1529 = vsel %vm1511, %v690, -1e+30
        %v1530 = vsel %vm1511, %v692, -1e+30
        %v1531 = vsel %vm1511, %v851, -1e+30
        %v1532 = vsel %vm1512, %v535, -1e+30
        %v1533 = vsel %vm1512, %v537, -1e+30
        %v1534 = vsel %vm1512, %v696, -1e+30
        %v1535 = vsel %vm1512, %v698, -1e+30
        %v1536 = vsel %vm1512, %v856, -1e+30
        %v1537 = vsel %vm1513, %v541, -1e+30
        %v1538 = vsel %vm1513, %v543, -1e+30
        %v1539 = vsel %vm1513, %v702, -1e+30
        %v1540 = vsel %vm1513, %v704, -1e+30
        %v1541 = vsel %vm1513, %v861, -1e+30
        %v1542 = vsel %vm1514, %v547, -1e+30
        %v1543 = vsel %vm1514, %v549, -1e+30
        %v1544 = vsel %vm1514, %v708, -1e+30
        %v1545 = vsel %vm1514, %v710, -1e+30
        %v1546 = vsel %vm1514, %v866, -1e+30
        %v1547 = vsel %vm1515, %v553, -1e+30
        %v1548 = vsel %vm1515, %v555, -1e+30
        %v1549 = vsel %vm1515, %v714, -1e+30
        %v1550 = vsel %vm1515, %v716, -1e+30
        %v1551 = vsel %vm1515, %v871, -1e+30
        %v1552 = vsel %vm1516, %v559, -1e+30
        %v1553 = vsel %vm1516, %v561, -1e+30
        %v1554 = vsel %vm1516, %v720, -1e+30
        %v1555 = vsel %vm1516, %v722, -1e+30
        %v1556 = vsel %vm1516, %v876, -1e+30
        %v1557 = vsel %vm1517, %v565, -1e+30
        %v1558 = vsel %vm1517, %v567, -1e+30
        %v1559 = vsel %vm1517, %v726, -1e+30
        %v1560 = vsel %vm1517, %v728, -1e+30
        %v1561 = vsel %vm1517, %v881, -1e+30
        %v1562 = vsel %vm1518, %v571, -1e+30
        %v1563 = vsel %vm1518, %v573, -1e+30
        %v1564 = vsel %vm1518, %v732, -1e+30
        %v1565 = vsel %vm1518, %v734, -1e+30
        %v1566 = vsel %vm1518, %v886, -1e+30
        %v1567 = vsel %vm1519, %v577, -1e+30
        %v1568 = vsel %vm1519, %v579, -1e+30
        %v1569 = vsel %vm1519, %v738, -1e+30
        %v1570 = vsel %vm1519, %v740, -1e+30
        %v1571 = vsel %vm1519, %v891, -1e+30
        %v1572 = vsel %vm1520, %v583, -1e+30
        %v1573 = vsel %vm1520, %v585, -1e+30
        %v1574 = vsel %vm1520, %v744, -1e+30
        %v1575 = vsel %vm1520, %v746, -1e+30
        %v1576 = vsel %vm1520, %v896, -1e+30
        %v1577 = vsel %vm1521, %v589, -1e+30
        %v1578 = vsel %vm1521, %v591, -1e+30
        %v1579 = vsel %vm1521, %v750, -1e+30
        %v1580 = vsel %vm1521, %v752, -1e+30
        %v1581 = vsel %vm1521, %v901, -1e+30
        %v1582 = vsel %vm1522, %v595, -1e+30
        %v1583 = vsel %vm1522, %v597, -1e+30
        %v1584 = vsel %vm1522, %v756, -1e+30
        %v1585 = vsel %vm1522, %v758, -1e+30
        %v1586 = vsel %vm1522, %v906, -1e+30
        %v1587 = vsel %vm1523, %v601, -1e+30
        %v1588 = vsel %vm1523, %v603, -1e+30
        %v1589 = vsel %vm1523, %v762, -1e+30
        %v1590 = vsel %vm1523, %v764, -1e+30
        %v1591 = vsel %vm1523, %v911, -1e+30
        %v1592 = vsel %vm1524, %v607, -1e+30
        %v1593 = vsel %vm1524, %v609, -1e+30
        %v1594 = vsel %vm1524, %v768, -1e+30
        %v1595 = vsel %vm1524, %v770, -1e+30
        %v1596 = vsel %vm1524, %v916, -1e+30
        %v1597 = vsel %vm1525, %v613, -1e+30
        %v1598 = vsel %vm1525, %v615, -1e+30
        %v1599 = vsel %vm1525, %v774, -1e+30
        %v1600 = vsel %vm1525, %v776, -1e+30
        %v1601 = vsel %vm1525, %v921, -1e+30
        %v1602 = vsel %vm1526, %v619, -1e+30
        %v1603 = vsel %vm1526, %v621, -1e+30
        %v1604 = vsel %vm1526, %v780, -1e+30
        %v1605 = vsel %vm1526, %v782, -1e+30
        %v1606 = vsel %vm1526, %v926, -1e+30
        %v1607 = vsel %vm1511, %v1076, -1e+30
        %v1608 = vsel %vm1511, %v1078, -1e+30
        %v1609 = vsel %vm1511, %v1237, -1e+30
        %v1610 = vsel %vm1511, %v1239, -1e+30
        %v1611 = vsel %vm1511, %v1398, -1e+30
        %v1612 = vsel %vm1512, %v1082, -1e+30
        %v1613 = vsel %vm1512, %v1084, -1e+30
        %v1614 = vsel %vm1512, %v1243, -1e+30
        %v1615 = vsel %vm1512, %v1245, -1e+30
        %v1616 = vsel %vm1512, %v1403, -1e+30
        %v1617 = vsel %vm1513, %v1088, -1e+30
        %v1618 = vsel %vm1513, %v1090, -1e+30
        %v1619 = vsel %vm1513, %v1249, -1e+30
        %v1620 = vsel %vm1513, %v1251, -1e+30
        %v1621 = vsel %vm1513, %v1408, -1e+30
        %v1622 = vsel %vm1514, %v1094, -1e+30
        %v1623 = vsel %vm1514, %v1096, -1e+30
        %v1624 = vsel %vm1514, %v1255, -1e+30
        %v1625 = vsel %vm1514, %v1257, -1e+30
        %v1626 = vsel %vm1514, %v1413, -1e+30
        %v1627 = vsel %vm1515, %v1100, -1e+30
        %v1628 = vsel %vm1515, %v1102, -1e+30
        %v1629 = vsel %vm1515, %v1261, -1e+30
        %v1630 = vsel %vm1515, %v1263, -1e+30
        %v1631 = vsel %vm1515, %v1418, -1e+30
        %v1632 = vsel %vm1516, %v1106, -1e+30
        %v1633 = vsel %vm1516, %v1108, -1e+30
        %v1634 = vsel %vm1516, %v1267, -1e+30
        %v1635 = vsel %vm1516, %v1269, -1e+30
        %v1636 = vsel %vm1516, %v1423, -1e+30
        %v1637 = vsel %vm1517, %v1112, -1e+30
        %v1638 = vsel %vm1517, %v1114, -1e+30
        %v1639 = vsel %vm1517, %v1273, -1e+30
        %v1640 = vsel %vm1517, %v1275, -1e+30
        %v1641 = vsel %vm1517, %v1428, -1e+30
        %v1642 = vsel %vm1518, %v1118, -1e+30
        %v1643 = vsel %vm1518, %v1120, -1e+30
        %v1644 = vsel %vm1518, %v1279, -1e+30
        %v1645 = vsel %vm1518, %v1281, -1e+30
        %v1646 = vsel %vm1518, %v1433, -1e+30
        %v1647 = vsel %vm1519, %v1124, -1e+30
        %v1648 = vsel %vm1519, %v1126, -1e+30
        %v1649 = vsel %vm1519, %v1285, -1e+30
        %v1650 = vsel %vm1519, %v1287, -1e+30
        %v1651 = vsel %vm1519, %v1438, -1e+30
        %v1652 = vsel %vm1520, %v1130, -1e+30
        %v1653 = vsel %vm1520, %v1132, -1e+30
        %v1654 = vsel %vm1520, %v1291, -1e+30
        %v1655 = vsel %vm1520, %v1293, -1e+30
        %v1656 = vsel %vm1520, %v1443, -1e+30
        %v1657 = vsel %vm1521, %v1136, -1e+30
        %v1658 = vsel %vm1521, %v1138, -1e+30
        %v1659 = vsel %vm1521, %v1297, -1e+30
        %v1660 = vsel %vm1521, %v1299, -1e+30
        %v1661 = vsel %vm1521, %v1448, -1e+30
        %v1662 = vsel %vm1522, %v1142, -1e+30
        %v1663 = vsel %vm1522, %v1144, -1e+30
        %v1664 = vsel %vm1522, %v1303, -1e+30
        %v1665 = vsel %vm1522, %v1305, -1e+30
        %v1666 = vsel %vm1522, %v1453, -1e+30
        %v1667 = vsel %vm1523, %v1148, -1e+30
        %v1668 = vsel %vm1523, %v1150, -1e+30
        %v1669 = vsel %vm1523, %v1309, -1e+30
        %v1670 = vsel %vm1523, %v1311, -1e+30
        %v1671 = vsel %vm1523, %v1458, -1e+30
        %v1672 = vsel %vm1524, %v1154, -1e+30
        %v1673 = vsel %vm1524, %v1156, -1e+30
        %v1674 = vsel %vm1524, %v1315, -1e+30
        %v1675 = vsel %vm1524, %v1317, -1e+30
        %v1676 = vsel %vm1524, %v1463, -1e+30
        %v1677 = vsel %vm1525, %v1160, -1e+30
        %v1678 = vsel %vm1525, %v1162, -1e+30
        %v1679 = vsel %vm1525, %v1321, -1e+30
        %v1680 = vsel %vm1525, %v1323, -1e+30
        %v1681 = vsel %vm1525, %v1468, -1e+30
        %v1682 = vsel %vm1526, %v1166, -1e+30
        %v1683 = vsel %vm1526, %v1168, -1e+30
        %v1684 = vsel %vm1526, %v1327, -1e+30
        %v1685 = vsel %vm1526, %v1329, -1e+30
        %v1686 = vsel %vm1526, %v1473, -1e+30
        %v1687 = vld [vmem:[#allocation2] sm:$0x1f]
        %v1688 = vld [vmem:[#allocation2 + $0x5] sm:$0x1f]
        %v1689 = vmax.f32 %v1527, %v1532
        %v1690 = vmax.f32 %v1689, %v1537
        %v1691 = vmax.f32 %v1690, %v1542
        %v1692 = vmax.f32 %v1691, %v1547
        %v1693 = vmax.f32 %v1692, %v1552
        %v1694 = vmax.f32 %v1693, %v1557
        %v1695 = vmax.f32 %v1694, %v1562
        %v1696 = vmax.f32 %v1695, %v1567
        %v1697 = vmax.f32 %v1696, %v1572
        %v1698 = vmax.f32 %v1697, %v1577
        %v1699 = vmax.f32 %v1698, %v1582
        %v1700 = vmax.f32 %v1699, %v1587
        %v1701 = vmax.f32 %v1700, %v1592
        %v1702 = vmax.f32 %v1701, %v1597
        %v1703 = vmax.f32 %v1702, %v1602
        %v1704 = vrot.slane %v1703, 4
        %v1705 = vmax.f32 %v1703, %v1704
        %v1706 = vrot.slane %v1705, 2
        %v1707 = vmax.f32 %v1705, %v1706
        %v1708 = vrot.slane %v1707, 1
        %v1709 = vmax.f32 %v1707, %v1708
        %v1710 = vmax.f32 %v1528, %v1533
        %v1711 = vmax.f32 %v1710, %v1538
        %v1712 = vmax.f32 %v1711, %v1543
        %v1713 = vmax.f32 %v1712, %v1548
        %v1714 = vmax.f32 %v1713, %v1553
        %v1715 = vmax.f32 %v1714, %v1558
        %v1716 = vmax.f32 %v1715, %v1563
        %v1717 = vmax.f32 %v1716, %v1568
        %v1718 = vmax.f32 %v1717, %v1573
        %v1719 = vmax.f32 %v1718, %v1578
        %v1720 = vmax.f32 %v1719, %v1583
        %v1721 = vmax.f32 %v1720, %v1588
        %v1722 = vmax.f32 %v1721, %v1593
        %v1723 = vmax.f32 %v1722, %v1598
        %v1724 = vmax.f32 %v1723, %v1603
        %v1725 = vrot.slane %v1724, 4
        %v1726 = vmax.f32 %v1724, %v1725
        %v1727 = vrot.slane %v1726, 2
        %v1728 = vmax.f32 %v1726, %v1727
        %v1729 = vrot.slane %v1728, 1
        %v1730 = vmax.f32 %v1728, %v1729
        %v1731 = vmax.f32 %v1529, %v1534
        %v1732 = vmax.f32 %v1731, %v1539
        %v1733 = vmax.f32 %v1732, %v1544
        %v1734 = vmax.f32 %v1733, %v1549
        %v1735 = vmax.f32 %v1734, %v1554
        %v1736 = vmax.f32 %v1735, %v1559
        %v1737 = vmax.f32 %v1736, %v1564
        %v1738 = vmax.f32 %v1737, %v1569
        %v1739 = vmax.f32 %v1738, %v1574
        %v1740 = vmax.f32 %v1739, %v1579
        %v1741 = vmax.f32 %v1740, %v1584
        %v1742 = vmax.f32 %v1741, %v1589
        %v1743 = vmax.f32 %v1742, %v1594
        %v1744 = vmax.f32 %v1743, %v1599
        %v1745 = vmax.f32 %v1744, %v1604
        %v1746 = vrot.slane %v1745, 4
        %v1747 = vmax.f32 %v1745, %v1746
        %v1748 = vrot.slane %v1747, 2
        %v1749 = vmax.f32 %v1747, %v1748
        %v1750 = vrot.slane %v1749, 1
        %v1751 = vmax.f32 %v1749, %v1750
        %v1752 = vmax.f32 %v1530, %v1535
        %v1753 = vmax.f32 %v1752, %v1540
        %v1754 = vmax.f32 %v1753, %v1545
        %v1755 = vmax.f32 %v1754, %v1550
        %v1756 = vmax.f32 %v1755, %v1555
        %v1757 = vmax.f32 %v1756, %v1560
        %v1758 = vmax.f32 %v1757, %v1565
        %v1759 = vmax.f32 %v1758, %v1570
        %v1760 = vmax.f32 %v1759, %v1575
        %v1761 = vmax.f32 %v1760, %v1580
        %v1762 = vmax.f32 %v1761, %v1585
        %v1763 = vmax.f32 %v1762, %v1590
        %v1764 = vmax.f32 %v1763, %v1595
        %v1765 = vmax.f32 %v1764, %v1600
        %v1766 = vmax.f32 %v1765, %v1605
        %v1767 = vrot.slane %v1766, 4
        %v1768 = vmax.f32 %v1766, %v1767
        %v1769 = vrot.slane %v1768, 2
        %v1770 = vmax.f32 %v1768, %v1769
        %v1771 = vrot.slane %v1770, 1
        %v1772 = vmax.f32 %v1770, %v1771
        %v1773 = vmax.f32 %v1531, %v1536
        %v1774 = vmax.f32 %v1773, %v1541
        %v1775 = vmax.f32 %v1774, %v1546
        %v1776 = vmax.f32 %v1775, %v1551
        %v1777 = vmax.f32 %v1776, %v1556
        %v1778 = vmax.f32 %v1777, %v1561
        %v1779 = vmax.f32 %v1778, %v1566
        %v1780 = vmax.f32 %v1779, %v1571
        %v1781 = vmax.f32 %v1780, %v1576
        %v1782 = vmax.f32 %v1781, %v1581
        %v1783 = vmax.f32 %v1782, %v1586
        %v1784 = vmax.f32 %v1783, %v1591
        %v1785 = vmax.f32 %v1784, %v1596
        %v1786 = vmax.f32 %v1785, %v1601
        %v1787 = vmax.f32 %v1786, %v1606
        %v1788 = vrot.slane %v1787, 4
        %v1789 = vmax.f32 %v1787, %v1788
        %v1790 = vrot.slane %v1789, 2
        %v1791 = vmax.f32 %v1789, %v1790
        %v1792 = vrot.slane %v1791, 1
        %v1793 = vmax.f32 %v1791, %v1792
        %v1794 = vmax.f32 %v1607, %v1612
        %v1795 = vmax.f32 %v1794, %v1617
        %v1796 = vmax.f32 %v1795, %v1622
        %v1797 = vmax.f32 %v1796, %v1627
        %v1798 = vmax.f32 %v1797, %v1632
        %v1799 = vmax.f32 %v1798, %v1637
        %v1800 = vmax.f32 %v1799, %v1642
        %v1801 = vmax.f32 %v1800, %v1647
        %v1802 = vmax.f32 %v1801, %v1652
        %v1803 = vmax.f32 %v1802, %v1657
        %v1804 = vmax.f32 %v1803, %v1662
        %v1805 = vmax.f32 %v1804, %v1667
        %v1806 = vmax.f32 %v1805, %v1672
        %v1807 = vmax.f32 %v1806, %v1677
        %v1808 = vmax.f32 %v1807, %v1682
        %v1809 = vrot.slane %v1808, 4
        %v1810 = vmax.f32 %v1808, %v1809
        %v1811 = vrot.slane %v1810, 2
        %v1812 = vmax.f32 %v1810, %v1811
        %v1813 = vrot.slane %v1812, 1
        %v1814 = vmax.f32 %v1812, %v1813
        %v1815 = vmax.f32 %v1608, %v1613
        %v1816 = vmax.f32 %v1815, %v1618
        %v1817 = vmax.f32 %v1816, %v1623
        %v1818 = vmax.f32 %v1817, %v1628
        %v1819 = vmax.f32 %v1818, %v1633
        %v1820 = vmax.f32 %v1819, %v1638
        %v1821 = vmax.f32 %v1820, %v1643
        %v1822 = vmax.f32 %v1821, %v1648
        %v1823 = vmax.f32 %v1822, %v1653
        %v1824 = vmax.f32 %v1823, %v1658
        %v1825 = vmax.f32 %v1824, %v1663
        %v1826 = vmax.f32 %v1825, %v1668
        %v1827 = vmax.f32 %v1826, %v1673
        %v1828 = vmax.f32 %v1827, %v1678
        %v1829 = vmax.f32 %v1828, %v1683
        %v1830 = vrot.slane %v1829, 4
        %v1831 = vmax.f32 %v1829, %v1830
        %v1832 = vrot.slane %v1831, 2
        %v1833 = vmax.f32 %v1831, %v1832
        %v1834 = vrot.slane %v1833, 1
        %v1835 = vmax.f32 %v1833, %v1834
        %v1836 = vmax.f32 %v1609, %v1614
        %v1837 = vmax.f32 %v1836, %v1619
        %v1838 = vmax.f32 %v1837, %v1624
        %v1839 = vmax.f32 %v1838, %v1629
        %v1840 = vmax.f32 %v1839, %v1634
        %v1841 = vmax.f32 %v1840, %v1639
        %v1842 = vmax.f32 %v1841, %v1644
        %v1843 = vmax.f32 %v1842, %v1649
        %v1844 = vmax.f32 %v1843, %v1654
        %v1845 = vmax.f32 %v1844, %v1659
        %v1846 = vmax.f32 %v1845, %v1664
        %v1847 = vmax.f32 %v1846, %v1669
        %v1848 = vmax.f32 %v1847, %v1674
        %v1849 = vmax.f32 %v1848, %v1679
        %v1850 = vmax.f32 %v1849, %v1684
        %v1851 = vrot.slane %v1850, 4
        %v1852 = vmax.f32 %v1850, %v1851
        %v1853 = vrot.slane %v1852, 2
        %v1854 = vmax.f32 %v1852, %v1853
        %v1855 = vrot.slane %v1854, 1
        %v1856 = vmax.f32 %v1854, %v1855
        %v1857 = vmax.f32 %v1610, %v1615
        %v1858 = vmax.f32 %v1857, %v1620
        %v1859 = vmax.f32 %v1858, %v1625
        %v1860 = vmax.f32 %v1859, %v1630
        %v1861 = vmax.f32 %v1860, %v1635
        %v1862 = vmax.f32 %v1861, %v1640
        %v1863 = vmax.f32 %v1862, %v1645
        %v1864 = vmax.f32 %v1863, %v1650
        %v1865 = vmax.f32 %v1864, %v1655
        %v1866 = vmax.f32 %v1865, %v1660
        %v1867 = vmax.f32 %v1866, %v1665
        %v1868 = vmax.f32 %v1867, %v1670
        %v1869 = vmax.f32 %v1868, %v1675
        %v1870 = vmax.f32 %v1869, %v1680
        %v1871 = vmax.f32 %v1870, %v1685
        %v1872 = vrot.slane %v1871, 4
        %v1873 = vmax.f32 %v1871, %v1872
        %v1874 = vrot.slane %v1873, 2
        %v1875 = vmax.f32 %v1873, %v1874
        %v1876 = vrot.slane %v1875, 1
        %v1877 = vmax.f32 %v1875, %v1876
        %v1878 = vmax.f32 %v1611, %v1616
        %v1879 = vmax.f32 %v1878, %v1621
        %v1880 = vmax.f32 %v1879, %v1626
        %v1881 = vmax.f32 %v1880, %v1631
        %v1882 = vmax.f32 %v1881, %v1636
        %v1883 = vmax.f32 %v1882, %v1641
        %v1884 = vmax.f32 %v1883, %v1646
        %v1885 = vmax.f32 %v1884, %v1651
        %v1886 = vmax.f32 %v1885, %v1656
        %v1887 = vmax.f32 %v1886, %v1661
        %v1888 = vmax.f32 %v1887, %v1666
        %v1889 = vmax.f32 %v1888, %v1671
        %v1890 = vmax.f32 %v1889, %v1676
        %v1891 = vmax.f32 %v1890, %v1681
        %v1892 = vmax.f32 %v1891, %v1686
        %v1893 = vrot.slane %v1892, 4
        %v1894 = vmax.f32 %v1892, %v1893
        %v1895 = vrot.slane %v1894, 2
        %v1896 = vmax.f32 %v1894, %v1895
        %v1897 = vrot.slane %v1896, 1
        %v1898 = vmax.f32 %v1896, %v1897
        %v1909 = vcombine.low %v1709, %v1730
        %v1910 = vcombine.low %v1751, %v1772
        %v1912 = vunpack.c.l.s4 1966171168
        %v1913 = vunpack.c.0.s8 %v1912
        %v1914 = vlaneseq
        %v1915 = vshrl.u32 %v1914, 7
        %v1916 = vsub.s32 %v1913, %v1915
        %v1917 = vrot.slane %v1909, %v1916
        %v1919 = vunpack.c.l.s4 1966171168
        %v1920 = vunpack.c.0.s8 %v1919
        %v1921 = vlaneseq
        %v1922 = vshrl.u32 %v1921, 7
        %v1923 = vsub.s32 %v1920, %v1922
        %v1924 = vrot.slane %v1910, %v1923
        %v1926 = vunpack.c.l.s4 1966171168
        %v1927 = vunpack.c.0.s8 %v1926
        %v1928 = vlaneseq
        %v1929 = vshrl.u32 %v1928, 7
        %v1930 = vsub.s32 %v1927, %v1929
        %v1931 = vrot.slane %v1793, %v1930
        %v1932 = vcombine.low %v1917, %v1924
        %v1934 = vunpack.c.l.s4 1966171168
        %v1935 = vunpack.c.0.s8 %v1934
        %v1936 = vlaneseq
        %v1937 = vshrl.u32 %v1936, 7
        %v1938 = vsub.s32 %v1935, %v1937
        %v1939 = vrot.slane %v1932, %v1938
        %v1941 = vunpack.c.l.s4 1966171168
        %v1942 = vunpack.c.0.s8 %v1941
        %v1943 = vlaneseq
        %v1944 = vshrl.u32 %v1943, 7
        %v1945 = vsub.s32 %v1942, %v1944
        %v1946 = vrot.slane %v1931, %v1945
        %v1947 = vcombine.low %v1939, %v1946
        %v1948 = vcombine.low %v1814, %v1835
        %v1949 = vcombine.low %v1856, %v1877
        %v1951 = vunpack.c.l.s4 1966171168
        %v1952 = vunpack.c.0.s8 %v1951
        %v1953 = vlaneseq
        %v1954 = vshrl.u32 %v1953, 7
        %v1955 = vsub.s32 %v1952, %v1954
        %v1956 = vrot.slane %v1948, %v1955
        %v1958 = vunpack.c.l.s4 1966171168
        %v1959 = vunpack.c.0.s8 %v1958
        %v1960 = vlaneseq
        %v1961 = vshrl.u32 %v1960, 7
        %v1962 = vsub.s32 %v1959, %v1961
        %v1963 = vrot.slane %v1949, %v1962
        %v1965 = vunpack.c.l.s4 1966171168
        %v1966 = vunpack.c.0.s8 %v1965
        %v1967 = vlaneseq
        %v1968 = vshrl.u32 %v1967, 7
        %v1969 = vsub.s32 %v1966, %v1968
        %v1970 = vrot.slane %v1898, %v1969
        %v1971 = vcombine.low %v1956, %v1963
        %v1973 = vunpack.c.l.s4 1966171168
        %v1974 = vunpack.c.0.s8 %v1973
        %v1975 = vlaneseq
        %v1976 = vshrl.u32 %v1975, 7
        %v1977 = vsub.s32 %v1974, %v1976
        %v1978 = vrot.slane %v1971, %v1977
        %v1980 = vunpack.c.l.s4 1966171168
        %v1981 = vunpack.c.0.s8 %v1980
        %v1982 = vlaneseq
        %v1983 = vshrl.u32 %v1982, 7
        %v1984 = vsub.s32 %v1981, %v1983
        %v1985 = vrot.slane %v1970, %v1984
        %v1986 = vcombine.low %v1978, %v1985
        %v1989 = vmax.f32 %v1687, %v1947
        %v1990 = vmax.f32 %v1688, %v1986
        %v1991 = vsub.f32 %v1687, %v1989
        %v1992 = vsub.f32 %v1688, %v1990
        %v1993 = vmul.f32 %v1991, 1.442695
        %v1994 = vpow.pop %v1993
        %v1995 = vmul.f32 %v1992, 1.442695
        %v1996 = vpow.pop %v1995
        %v1999 = vlaneseq
        %v2000 = vshrl.u32 %v1999, 7
        %v2001 = vsub.s32 0, %v2000
        %v2002 = vrot.slane %v1989, %v2001
        %v2003 = vlaneseq
        %v2004 = vshrl.u32 %v2003, 7
        %v2005 = vsub.s32 1, %v2004
        %v2006 = vrot.slane %v1989, %v2005
        %v2007 = vlaneseq
        %v2008 = vshrl.u32 %v2007, 7
        %v2009 = vsub.s32 2, %v2008
        %v2010 = vrot.slane %v1989, %v2009
        %v2011 = vlaneseq
        %v2012 = vshrl.u32 %v2011, 7
        %v2013 = vsub.s32 3, %v2012
        %v2014 = vrot.slane %v1989, %v2013
        %v2015 = vlaneseq
        %v2016 = vshrl.u32 %v2015, 7
        %v2017 = vsub.s32 4, %v2016
        %v2018 = vrot.slane %v1989, %v2017
        %v2019 = vlaneseq
        %v2020 = vshrl.u32 %v2019, 7
        %v2021 = vsub.s32 0, %v2020
        %v2022 = vrot.slane %v1990, %v2021
        %v2023 = vlaneseq
        %v2024 = vshrl.u32 %v2023, 7
        %v2025 = vsub.s32 1, %v2024
        %v2026 = vrot.slane %v1990, %v2025
        %v2027 = vlaneseq
        %v2028 = vshrl.u32 %v2027, 7
        %v2029 = vsub.s32 2, %v2028
        %v2030 = vrot.slane %v1990, %v2029
        %v2031 = vlaneseq
        %v2032 = vshrl.u32 %v2031, 7
        %v2033 = vsub.s32 3, %v2032
        %v2034 = vrot.slane %v1990, %v2033
        %v2035 = vlaneseq
        %v2036 = vshrl.u32 %v2035, 7
        %v2037 = vsub.s32 4, %v2036
        %v2038 = vrot.slane %v1990, %v2037
        %v2049 = vsub.f32 %v1527, %v2002
        %v2050 = vsub.f32 %v1528, %v2006
        %v2051 = vsub.f32 %v1529, %v2010
        %v2052 = vsub.f32 %v1530, %v2014
        %v2053 = vsub.f32 %v1531, %v2018
        %v2054 = vsub.f32 %v1532, %v2002
        %v2055 = vsub.f32 %v1533, %v2006
        %v2056 = vsub.f32 %v1534, %v2010
        %v2057 = vsub.f32 %v1535, %v2014
        %v2058 = vsub.f32 %v1536, %v2018
        %v2059 = vsub.f32 %v1537, %v2002
        %v2060 = vsub.f32 %v1538, %v2006
        %v2061 = vsub.f32 %v1539, %v2010
        %v2062 = vsub.f32 %v1540, %v2014
        %v2063 = vsub.f32 %v1541, %v2018
        %v2064 = vsub.f32 %v1542, %v2002
        %v2065 = vsub.f32 %v1543, %v2006
        %v2066 = vsub.f32 %v1544, %v2010
        %v2067 = vsub.f32 %v1545, %v2014
        %v2068 = vsub.f32 %v1546, %v2018
        %v2069 = vsub.f32 %v1547, %v2002
        %v2070 = vsub.f32 %v1548, %v2006
        %v2071 = vsub.f32 %v1549, %v2010
        %v2072 = vsub.f32 %v1550, %v2014
        %v2073 = vsub.f32 %v1551, %v2018
        %v2074 = vsub.f32 %v1552, %v2002
        %v2075 = vsub.f32 %v1553, %v2006
        %v2076 = vsub.f32 %v1554, %v2010
        %v2077 = vsub.f32 %v1555, %v2014
        %v2078 = vsub.f32 %v1556, %v2018
        %v2079 = vsub.f32 %v1557, %v2002
        %v2080 = vsub.f32 %v1558, %v2006
        %v2081 = vsub.f32 %v1559, %v2010
        %v2082 = vsub.f32 %v1560, %v2014
        %v2083 = vsub.f32 %v1561, %v2018
        %v2084 = vsub.f32 %v1562, %v2002
        %v2085 = vsub.f32 %v1563, %v2006
        %v2086 = vsub.f32 %v1564, %v2010
        %v2087 = vsub.f32 %v1565, %v2014
        %v2088 = vsub.f32 %v1566, %v2018
        %v2089 = vsub.f32 %v1567, %v2002
        %v2090 = vsub.f32 %v1568, %v2006
        %v2091 = vsub.f32 %v1569, %v2010
        %v2092 = vsub.f32 %v1570, %v2014
        %v2093 = vsub.f32 %v1571, %v2018
        %v2094 = vsub.f32 %v1572, %v2002
        %v2095 = vsub.f32 %v1573, %v2006
        %v2096 = vsub.f32 %v1574, %v2010
        %v2097 = vsub.f32 %v1575, %v2014
        %v2098 = vsub.f32 %v1576, %v2018
        %v2099 = vsub.f32 %v1577, %v2002
        %v2100 = vsub.f32 %v1578, %v2006
        %v2101 = vsub.f32 %v1579, %v2010
        %v2102 = vsub.f32 %v1580, %v2014
        %v2103 = vsub.f32 %v1581, %v2018
        %v2104 = vsub.f32 %v1582, %v2002
        %v2105 = vsub.f32 %v1583, %v2006
        %v2106 = vsub.f32 %v1584, %v2010
        %v2107 = vsub.f32 %v1585, %v2014
        %v2108 = vsub.f32 %v1586, %v2018
        %v2109 = vsub.f32 %v1587, %v2002
        %v2110 = vsub.f32 %v1588, %v2006
        %v2111 = vsub.f32 %v1589, %v2010
        %v2112 = vsub.f32 %v1590, %v2014
        %v2113 = vsub.f32 %v1591, %v2018
        %v2114 = vsub.f32 %v1592, %v2002
        %v2115 = vsub.f32 %v1593, %v2006
        %v2116 = vsub.f32 %v1594, %v2010
        %v2117 = vsub.f32 %v1595, %v2014
        %v2118 = vsub.f32 %v1596, %v2018
        %v2119 = vsub.f32 %v1597, %v2002
        %v2120 = vsub.f32 %v1598, %v2006
        %v2121 = vsub.f32 %v1599, %v2010
        %v2122 = vsub.f32 %v1600, %v2014
        %v2123 = vsub.f32 %v1601, %v2018
        %v2124 = vsub.f32 %v1602, %v2002
        %v2125 = vsub.f32 %v1603, %v2006
        %v2126 = vsub.f32 %v1604, %v2010
        %v2127 = vsub.f32 %v1605, %v2014
        %v2128 = vsub.f32 %v1606, %v2018
        %v2129 = vsub.f32 %v1607, %v2022
        %v2130 = vsub.f32 %v1608, %v2026
        %v2131 = vsub.f32 %v1609, %v2030
        %v2132 = vsub.f32 %v1610, %v2034
        %v2133 = vsub.f32 %v1611, %v2038
        %v2134 = vsub.f32 %v1612, %v2022
        %v2135 = vsub.f32 %v1613, %v2026
        %v2136 = vsub.f32 %v1614, %v2030
        %v2137 = vsub.f32 %v1615, %v2034
        %v2138 = vsub.f32 %v1616, %v2038
        %v2139 = vsub.f32 %v1617, %v2022
        %v2140 = vsub.f32 %v1618, %v2026
        %v2141 = vsub.f32 %v1619, %v2030
        %v2142 = vsub.f32 %v1620, %v2034
        %v2143 = vsub.f32 %v1621, %v2038
        %v2144 = vsub.f32 %v1622, %v2022
        %v2145 = vsub.f32 %v1623, %v2026
        %v2146 = vsub.f32 %v1624, %v2030
        %v2147 = vsub.f32 %v1625, %v2034
        %v2148 = vsub.f32 %v1626, %v2038
        %v2149 = vsub.f32 %v1627, %v2022
        %v2150 = vsub.f32 %v1628, %v2026
        %v2151 = vsub.f32 %v1629, %v2030
        %v2152 = vsub.f32 %v1630, %v2034
        %v2153 = vsub.f32 %v1631, %v2038
        %v2154 = vsub.f32 %v1632, %v2022
        %v2155 = vsub.f32 %v1633, %v2026
        %v2156 = vsub.f32 %v1634, %v2030
        %v2157 = vsub.f32 %v1635, %v2034
        %v2158 = vsub.f32 %v1636, %v2038
        %v2159 = vsub.f32 %v1637, %v2022
        %v2160 = vsub.f32 %v1638, %v2026
        %v2161 = vsub.f32 %v1639, %v2030
        %v2162 = vsub.f32 %v1640, %v2034
        %v2163 = vsub.f32 %v1641, %v2038
        %v2164 = vsub.f32 %v1642, %v2022
        %v2165 = vsub.f32 %v1643, %v2026
        %v2166 = vsub.f32 %v1644, %v2030
        %v2167 = vsub.f32 %v1645, %v2034
        %v2168 = vsub.f32 %v1646, %v2038
        %v2169 = vsub.f32 %v1647, %v2022
        %v2170 = vsub.f32 %v1648, %v2026
        %v2171 = vsub.f32 %v1649, %v2030
        %v2172 = vsub.f32 %v1650, %v2034
        %v2173 = vsub.f32 %v1651, %v2038
        %v2174 = vsub.f32 %v1652, %v2022
        %v2175 = vsub.f32 %v1653, %v2026
        %v2176 = vsub.f32 %v1654, %v2030
        %v2177 = vsub.f32 %v1655, %v2034
        %v2178 = vsub.f32 %v1656, %v2038
        %v2179 = vsub.f32 %v1657, %v2022
        %v2180 = vsub.f32 %v1658, %v2026
        %v2181 = vsub.f32 %v1659, %v2030
        %v2182 = vsub.f32 %v1660, %v2034
        %v2183 = vsub.f32 %v1661, %v2038
        %v2184 = vsub.f32 %v1662, %v2022
        %v2185 = vsub.f32 %v1663, %v2026
        %v2186 = vsub.f32 %v1664, %v2030
        %v2187 = vsub.f32 %v1665, %v2034
        %v2188 = vsub.f32 %v1666, %v2038
        %v2189 = vsub.f32 %v1667, %v2022
        %v2190 = vsub.f32 %v1668, %v2026
        %v2191 = vsub.f32 %v1669, %v2030
        %v2192 = vsub.f32 %v1670, %v2034
        %v2193 = vsub.f32 %v1671, %v2038
        %v2194 = vsub.f32 %v1672, %v2022
        %v2195 = vsub.f32 %v1673, %v2026
        %v2196 = vsub.f32 %v1674, %v2030
        %v2197 = vsub.f32 %v1675, %v2034
        %v2198 = vsub.f32 %v1676, %v2038
        %v2199 = vsub.f32 %v1677, %v2022
        %v2200 = vsub.f32 %v1678, %v2026
        %v2201 = vsub.f32 %v1679, %v2030
        %v2202 = vsub.f32 %v1680, %v2034
        %v2203 = vsub.f32 %v1681, %v2038
        %v2204 = vsub.f32 %v1682, %v2022
        %v2205 = vsub.f32 %v1683, %v2026
        %v2206 = vsub.f32 %v1684, %v2030
        %v2207 = vsub.f32 %v1685, %v2034
        %v2208 = vsub.f32 %v1686, %v2038
        %v2209 = vmul.f32 %v2049, 1.442695
        %v2210 = vpow.pop %v2209
        %v2211 = vmul.f32 %v2050, 1.442695
        %v2212 = vpow.pop %v2211
        %v2213 = vmul.f32 %v2051, 1.442695
        %v2214 = vpow.pop %v2213
        %v2215 = vmul.f32 %v2052, 1.442695
        %v2216 = vpow.pop %v2215
        %v2217 = vmul.f32 %v2053, 1.442695
        %v2218 = vpow.pop %v2217
        %v2219 = vmul.f32 %v2054, 1.442695
        %v2220 = vpow.pop %v2219
        %v2221 = vmul.f32 %v2055, 1.442695
        %v2222 = vpow.pop %v2221
        %v2223 = vmul.f32 %v2056, 1.442695
        %v2224 = vpow.pop %v2223
        %v2225 = vmul.f32 %v2057, 1.442695
        %v2226 = vpow.pop %v2225
        %v2227 = vmul.f32 %v2058, 1.442695
        %v2228 = vpow.pop %v2227
        %v2229 = vmul.f32 %v2059, 1.442695
        %v2230 = vpow.pop %v2229
        %v2231 = vmul.f32 %v2060, 1.442695
        %v2232 = vpow.pop %v2231
        %v2233 = vmul.f32 %v2061, 1.442695
        %v2234 = vpow.pop %v2233
        %v2235 = vmul.f32 %v2062, 1.442695
        %v2236 = vpow.pop %v2235
        %v2237 = vmul.f32 %v2063, 1.442695
        %v2238 = vpow.pop %v2237
        %v2239 = vmul.f32 %v2064, 1.442695
        %v2240 = vpow.pop %v2239
        %v2241 = vmul.f32 %v2065, 1.442695
        %v2242 = vpow.pop %v2241
        %v2243 = vmul.f32 %v2066, 1.442695
        %v2244 = vpow.pop %v2243
        %v2245 = vmul.f32 %v2067, 1.442695
        %v2246 = vpow.pop %v2245
        %v2247 = vmul.f32 %v2068, 1.442695
        %v2248 = vpow.pop %v2247
        %v2249 = vmul.f32 %v2069, 1.442695
        %v2250 = vpow.pop %v2249
        %v2251 = vmul.f32 %v2070, 1.442695
        %v2252 = vpow.pop %v2251
        %v2253 = vmul.f32 %v2071, 1.442695
        %v2254 = vpow.pop %v2253
        %v2255 = vmul.f32 %v2072, 1.442695
        %v2256 = vpow.pop %v2255
        %v2257 = vmul.f32 %v2073, 1.442695
        %v2258 = vpow.pop %v2257
        %v2259 = vmul.f32 %v2074, 1.442695
        %v2260 = vpow.pop %v2259
        %v2261 = vmul.f32 %v2075, 1.442695
        %v2262 = vpow.pop %v2261
        %v2263 = vmul.f32 %v2076, 1.442695
        %v2264 = vpow.pop %v2263
        %v2265 = vmul.f32 %v2077, 1.442695
        %v2266 = vpow.pop %v2265
        %v2267 = vmul.f32 %v2078, 1.442695
        %v2268 = vpow.pop %v2267
        %v2269 = vmul.f32 %v2079, 1.442695
        %v2270 = vpow.pop %v2269
        %v2271 = vmul.f32 %v2080, 1.442695
        %v2272 = vpow.pop %v2271
        %v2273 = vmul.f32 %v2081, 1.442695
        %v2274 = vpow.pop %v2273
        %v2275 = vmul.f32 %v2082, 1.442695
        %v2276 = vpow.pop %v2275
        %v2277 = vmul.f32 %v2083, 1.442695
        %v2278 = vpow.pop %v2277
        %v2279 = vmul.f32 %v2084, 1.442695
        %v2280 = vpow.pop %v2279
        %v2281 = vmul.f32 %v2085, 1.442695
        %v2282 = vpow.pop %v2281
        %v2283 = vmul.f32 %v2086, 1.442695
        %v2284 = vpow.pop %v2283
        %v2285 = vmul.f32 %v2087, 1.442695
        %v2286 = vpow.pop %v2285
        %v2287 = vmul.f32 %v2088, 1.442695
        %v2288 = vpow.pop %v2287
        %v2289 = vmul.f32 %v2089, 1.442695
        %v2290 = vpow.pop %v2289
        %v2291 = vmul.f32 %v2090, 1.442695
        %v2292 = vpow.pop %v2291
        %v2293 = vmul.f32 %v2091, 1.442695
        %v2294 = vpow.pop %v2293
        %v2295 = vmul.f32 %v2092, 1.442695
        %v2296 = vpow.pop %v2295
        %v2297 = vmul.f32 %v2093, 1.442695
        %v2298 = vpow.pop %v2297
        %v2299 = vmul.f32 %v2094, 1.442695
        %v2300 = vpow.pop %v2299
        %v2301 = vmul.f32 %v2095, 1.442695
        %v2302 = vpow.pop %v2301
        %v2303 = vmul.f32 %v2096, 1.442695
        %v2304 = vpow.pop %v2303
        %v2305 = vmul.f32 %v2097, 1.442695
        %v2306 = vpow.pop %v2305
        %v2307 = vmul.f32 %v2098, 1.442695
        %v2308 = vpow.pop %v2307
        %v2309 = vmul.f32 %v2099, 1.442695
        %v2310 = vpow.pop %v2309
        %v2311 = vmul.f32 %v2100, 1.442695
        %v2312 = vpow.pop %v2311
        %v2313 = vmul.f32 %v2101, 1.442695
        %v2314 = vpow.pop %v2313
        %v2315 = vmul.f32 %v2102, 1.442695
        %v2316 = vpow.pop %v2315
        %v2317 = vmul.f32 %v2103, 1.442695
        %v2318 = vpow.pop %v2317
        %v2319 = vmul.f32 %v2104, 1.442695
        %v2320 = vpow.pop %v2319
        %v2321 = vmul.f32 %v2105, 1.442695
        %v2322 = vpow.pop %v2321
        %v2323 = vmul.f32 %v2106, 1.442695
        %v2324 = vpow.pop %v2323
        %v2325 = vmul.f32 %v2107, 1.442695
        %v2326 = vpow.pop %v2325
        %v2327 = vmul.f32 %v2108, 1.442695
        %v2328 = vpow.pop %v2327
        %v2329 = vmul.f32 %v2109, 1.442695
        %v2330 = vpow.pop %v2329
        %v2331 = vmul.f32 %v2110, 1.442695
        %v2332 = vpow.pop %v2331
        %v2333 = vmul.f32 %v2111, 1.442695
        %v2334 = vpow.pop %v2333
        %v2335 = vmul.f32 %v2112, 1.442695
        %v2336 = vpow.pop %v2335
        %v2337 = vmul.f32 %v2113, 1.442695
        %v2338 = vpow.pop %v2337
        %v2339 = vmul.f32 %v2114, 1.442695
        %v2340 = vpow.pop %v2339
        %v2341 = vmul.f32 %v2115, 1.442695
        %v2342 = vpow.pop %v2341
        %v2343 = vmul.f32 %v2116, 1.442695
        %v2344 = vpow.pop %v2343
        %v2345 = vmul.f32 %v2117, 1.442695
        %v2346 = vpow.pop %v2345
        %v2347 = vmul.f32 %v2118, 1.442695
        %v2348 = vpow.pop %v2347
        %v2349 = vmul.f32 %v2119, 1.442695
        %v2350 = vpow.pop %v2349
        %v2351 = vmul.f32 %v2120, 1.442695
        %v2352 = vpow.pop %v2351
        %v2353 = vmul.f32 %v2121, 1.442695
        %v2354 = vpow.pop %v2353
        %v2355 = vmul.f32 %v2122, 1.442695
        %v2356 = vpow.pop %v2355
        %v2357 = vmul.f32 %v2123, 1.442695
        %v2358 = vpow.pop %v2357
        %v2359 = vmul.f32 %v2124, 1.442695
        %v2360 = vpow.pop %v2359
        %v2361 = vmul.f32 %v2125, 1.442695
        %v2362 = vpow.pop %v2361
        %v2363 = vmul.f32 %v2126, 1.442695
        %v2364 = vpow.pop %v2363
        %v2365 = vmul.f32 %v2127, 1.442695
        %v2366 = vpow.pop %v2365
        %v2367 = vmul.f32 %v2128, 1.442695
        %v2368 = vpow.pop %v2367
        %v2369 = vmul.f32 %v2129, 1.442695
        %v2370 = vpow.pop %v2369
        %v2371 = vmul.f32 %v2130, 1.442695
        %v2372 = vpow.pop %v2371
        %v2373 = vmul.f32 %v2131, 1.442695
        %v2374 = vpow.pop %v2373
        %v2375 = vmul.f32 %v2132, 1.442695
        %v2376 = vpow.pop %v2375
        %v2377 = vmul.f32 %v2133, 1.442695
        %v2378 = vpow.pop %v2377
        %v2379 = vmul.f32 %v2134, 1.442695
        %v2380 = vpow.pop %v2379
        %v2381 = vmul.f32 %v2135, 1.442695
        %v2382 = vpow.pop %v2381
        %v2383 = vmul.f32 %v2136, 1.442695
        %v2384 = vpow.pop %v2383
        %v2385 = vmul.f32 %v2137, 1.442695
        %v2386 = vpow.pop %v2385
        %v2387 = vmul.f32 %v2138, 1.442695
        %v2388 = vpow.pop %v2387
        %v2389 = vmul.f32 %v2139, 1.442695
        %v2390 = vpow.pop %v2389
        %v2391 = vmul.f32 %v2140, 1.442695
        %v2392 = vpow.pop %v2391
        %v2393 = vmul.f32 %v2141, 1.442695
        %v2394 = vpow.pop %v2393
        %v2395 = vmul.f32 %v2142, 1.442695
        %v2396 = vpow.pop %v2395
        %v2397 = vmul.f32 %v2143, 1.442695
        %v2398 = vpow.pop %v2397
        %v2399 = vmul.f32 %v2144, 1.442695
        %v2400 = vpow.pop %v2399
        %v2401 = vmul.f32 %v2145, 1.442695
        %v2402 = vpow.pop %v2401
        %v2403 = vmul.f32 %v2146, 1.442695
        %v2404 = vpow.pop %v2403
        %v2405 = vmul.f32 %v2147, 1.442695
        %v2406 = vpow.pop %v2405
        %v2407 = vmul.f32 %v2148, 1.442695
        %v2408 = vpow.pop %v2407
        %v2409 = vmul.f32 %v2149, 1.442695
        %v2410 = vpow.pop %v2409
        %v2411 = vmul.f32 %v2150, 1.442695
        %v2412 = vpow.pop %v2411
        %v2413 = vmul.f32 %v2151, 1.442695
        %v2414 = vpow.pop %v2413
        %v2415 = vmul.f32 %v2152, 1.442695
        %v2416 = vpow.pop %v2415
        %v2417 = vmul.f32 %v2153, 1.442695
        %v2418 = vpow.pop %v2417
        %v2419 = vmul.f32 %v2154, 1.442695
        %v2420 = vpow.pop %v2419
        %v2421 = vmul.f32 %v2155, 1.442695
        %v2422 = vpow.pop %v2421
        %v2423 = vmul.f32 %v2156, 1.442695
        %v2424 = vpow.pop %v2423
        %v2425 = vmul.f32 %v2157, 1.442695
        %v2426 = vpow.pop %v2425
        %v2427 = vmul.f32 %v2158, 1.442695
        %v2428 = vpow.pop %v2427
        %v2429 = vmul.f32 %v2159, 1.442695
        %v2430 = vpow.pop %v2429
        %v2431 = vmul.f32 %v2160, 1.442695
        %v2432 = vpow.pop %v2431
        %v2433 = vmul.f32 %v2161, 1.442695
        %v2434 = vpow.pop %v2433
        %v2435 = vmul.f32 %v2162, 1.442695
        %v2436 = vpow.pop %v2435
        %v2437 = vmul.f32 %v2163, 1.442695
        %v2438 = vpow.pop %v2437
        %v2439 = vmul.f32 %v2164, 1.442695
        %v2440 = vpow.pop %v2439
        %v2441 = vmul.f32 %v2165, 1.442695
        %v2442 = vpow.pop %v2441
        %v2443 = vmul.f32 %v2166, 1.442695
        %v2444 = vpow.pop %v2443
        %v2445 = vmul.f32 %v2167, 1.442695
        %v2446 = vpow.pop %v2445
        %v2447 = vmul.f32 %v2168, 1.442695
        %v2448 = vpow.pop %v2447
        %v2449 = vmul.f32 %v2169, 1.442695
        %v2450 = vpow.pop %v2449
        %v2451 = vmul.f32 %v2170, 1.442695
        %v2452 = vpow.pop %v2451
        %v2453 = vmul.f32 %v2171, 1.442695
        %v2454 = vpow.pop %v2453
        %v2455 = vmul.f32 %v2172, 1.442695
        %v2456 = vpow.pop %v2455
        %v2457 = vmul.f32 %v2173, 1.442695
        %v2458 = vpow.pop %v2457
        %v2459 = vmul.f32 %v2174, 1.442695
        %v2460 = vpow.pop %v2459
        %v2461 = vmul.f32 %v2175, 1.442695
        %v2462 = vpow.pop %v2461
        %v2463 = vmul.f32 %v2176, 1.442695
        %v2464 = vpow.pop %v2463
        %v2465 = vmul.f32 %v2177, 1.442695
        %v2466 = vpow.pop %v2465
        %v2467 = vmul.f32 %v2178, 1.442695
        %v2468 = vpow.pop %v2467
        %v2469 = vmul.f32 %v2179, 1.442695
        %v2470 = vpow.pop %v2469
        %v2471 = vmul.f32 %v2180, 1.442695
        %v2472 = vpow.pop %v2471
        %v2473 = vmul.f32 %v2181, 1.442695
        %v2474 = vpow.pop %v2473
        %v2475 = vmul.f32 %v2182, 1.442695
        %v2476 = vpow.pop %v2475
        %v2477 = vmul.f32 %v2183, 1.442695
        %v2478 = vpow.pop %v2477
        %v2479 = vmul.f32 %v2184, 1.442695
        %v2480 = vpow.pop %v2479
        %v2481 = vmul.f32 %v2185, 1.442695
        %v2482 = vpow.pop %v2481
        %v2483 = vmul.f32 %v2186, 1.442695
        %v2484 = vpow.pop %v2483
        %v2485 = vmul.f32 %v2187, 1.442695
        %v2486 = vpow.pop %v2485
        %v2487 = vmul.f32 %v2188, 1.442695
        %v2488 = vpow.pop %v2487
        %v2489 = vmul.f32 %v2189, 1.442695
        %v2490 = vpow.pop %v2489
        %v2491 = vmul.f32 %v2190, 1.442695
        %v2492 = vpow.pop %v2491
        %v2493 = vmul.f32 %v2191, 1.442695
        %v2494 = vpow.pop %v2493
        %v2495 = vmul.f32 %v2192, 1.442695
        %v2496 = vpow.pop %v2495
        %v2497 = vmul.f32 %v2193, 1.442695
        %v2498 = vpow.pop %v2497
        %v2499 = vmul.f32 %v2194, 1.442695
        %v2500 = vpow.pop %v2499
        %v2501 = vmul.f32 %v2195, 1.442695
        %v2502 = vpow.pop %v2501
        %v2503 = vmul.f32 %v2196, 1.442695
        %v2504 = vpow.pop %v2503
        %v2505 = vmul.f32 %v2197, 1.442695
        %v2506 = vpow.pop %v2505
        %v2507 = vmul.f32 %v2198, 1.442695
        %v2508 = vpow.pop %v2507
        %v2509 = vmul.f32 %v2199, 1.442695
        %v2510 = vpow.pop %v2509
        %v2511 = vmul.f32 %v2200, 1.442695
        %v2512 = vpow.pop %v2511
        %v2513 = vmul.f32 %v2201, 1.442695
        %v2514 = vpow.pop %v2513
        %v2515 = vmul.f32 %v2202, 1.442695
        %v2516 = vpow.pop %v2515
        %v2517 = vmul.f32 %v2203, 1.442695
        %v2518 = vpow.pop %v2517
        %v2519 = vmul.f32 %v2204, 1.442695
        %v2520 = vpow.pop %v2519
        %v2521 = vmul.f32 %v2205, 1.442695
        %v2522 = vpow.pop %v2521
        %v2523 = vmul.f32 %v2206, 1.442695
        %v2524 = vpow.pop %v2523
        %v2525 = vmul.f32 %v2207, 1.442695
        %v2526 = vpow.pop %v2525
        %v2527 = vmul.f32 %v2208, 1.442695
        %v2528 = vpow.pop %v2527
        %v2529 = vld [vmem:[#allocation3] sm:$0x1f]
        %v2530 = vld [vmem:[#allocation3 + $0x5] sm:$0x1f]
        %v2531 = vmul.f32 %v1994, %v2529
        %v2532 = vmul.f32 %v1996, %v2530
        %v2533 = vadd.f32 %v2210, %v2220
        %v2534 = vadd.f32 %v2533, %v2230
        %v2535 = vadd.f32 %v2534, %v2240
        %v2536 = vadd.f32 %v2535, %v2250
        %v2537 = vadd.f32 %v2536, %v2260
        %v2538 = vadd.f32 %v2537, %v2270
        %v2539 = vadd.f32 %v2538, %v2280
        %v2540 = vadd.f32 %v2539, %v2290
        %v2541 = vadd.f32 %v2540, %v2300
        %v2542 = vadd.f32 %v2541, %v2310
        %v2543 = vadd.f32 %v2542, %v2320
        %v2544 = vadd.f32 %v2543, %v2330
        %v2545 = vadd.f32 %v2544, %v2340
        %v2546 = vadd.f32 %v2545, %v2350
        %v2547 = vadd.f32 %v2546, %v2360
        %v2548 = vrot.slane %v2547, 4
        %v2549 = vadd.f32 %v2547, %v2548
        %v2550 = vrot.slane %v2549, 2
        %v2551 = vadd.f32 %v2549, %v2550
        %v2552 = vrot.slane %v2551, 1
        %v2553 = vadd.f32 %v2551, %v2552
        %v2554 = vadd.f32 %v2212, %v2222
        %v2555 = vadd.f32 %v2554, %v2232
        %v2556 = vadd.f32 %v2555, %v2242
        %v2557 = vadd.f32 %v2556, %v2252
        %v2558 = vadd.f32 %v2557, %v2262
        %v2559 = vadd.f32 %v2558, %v2272
        %v2560 = vadd.f32 %v2559, %v2282
        %v2561 = vadd.f32 %v2560, %v2292
        %v2562 = vadd.f32 %v2561, %v2302
        %v2563 = vadd.f32 %v2562, %v2312
        %v2564 = vadd.f32 %v2563, %v2322
        %v2565 = vadd.f32 %v2564, %v2332
        %v2566 = vadd.f32 %v2565, %v2342
        %v2567 = vadd.f32 %v2566, %v2352
        %v2568 = vadd.f32 %v2567, %v2362
        %v2569 = vrot.slane %v2568, 4
        %v2570 = vadd.f32 %v2568, %v2569
        %v2571 = vrot.slane %v2570, 2
        %v2572 = vadd.f32 %v2570, %v2571
        %v2573 = vrot.slane %v2572, 1
        %v2574 = vadd.f32 %v2572, %v2573
        %v2575 = vadd.f32 %v2214, %v2224
        %v2576 = vadd.f32 %v2575, %v2234
        %v2577 = vadd.f32 %v2576, %v2244
        %v2578 = vadd.f32 %v2577, %v2254
        %v2579 = vadd.f32 %v2578, %v2264
        %v2580 = vadd.f32 %v2579, %v2274
        %v2581 = vadd.f32 %v2580, %v2284
        %v2582 = vadd.f32 %v2581, %v2294
        %v2583 = vadd.f32 %v2582, %v2304
        %v2584 = vadd.f32 %v2583, %v2314
        %v2585 = vadd.f32 %v2584, %v2324
        %v2586 = vadd.f32 %v2585, %v2334
        %v2587 = vadd.f32 %v2586, %v2344
        %v2588 = vadd.f32 %v2587, %v2354
        %v2589 = vadd.f32 %v2588, %v2364
        %v2590 = vrot.slane %v2589, 4
        %v2591 = vadd.f32 %v2589, %v2590
        %v2592 = vrot.slane %v2591, 2
        %v2593 = vadd.f32 %v2591, %v2592
        %v2594 = vrot.slane %v2593, 1
        %v2595 = vadd.f32 %v2593, %v2594
        %v2596 = vadd.f32 %v2216, %v2226
        %v2597 = vadd.f32 %v2596, %v2236
        %v2598 = vadd.f32 %v2597, %v2246
        %v2599 = vadd.f32 %v2598, %v2256
        %v2600 = vadd.f32 %v2599, %v2266
        %v2601 = vadd.f32 %v2600, %v2276
        %v2602 = vadd.f32 %v2601, %v2286
        %v2603 = vadd.f32 %v2602, %v2296
        %v2604 = vadd.f32 %v2603, %v2306
        %v2605 = vadd.f32 %v2604, %v2316
        %v2606 = vadd.f32 %v2605, %v2326
        %v2607 = vadd.f32 %v2606, %v2336
        %v2608 = vadd.f32 %v2607, %v2346
        %v2609 = vadd.f32 %v2608, %v2356
        %v2610 = vadd.f32 %v2609, %v2366
        %v2611 = vrot.slane %v2610, 4
        %v2612 = vadd.f32 %v2610, %v2611
        %v2613 = vrot.slane %v2612, 2
        %v2614 = vadd.f32 %v2612, %v2613
        %v2615 = vrot.slane %v2614, 1
        %v2616 = vadd.f32 %v2614, %v2615
        %v2617 = vadd.f32 %v2218, %v2228
        %v2618 = vadd.f32 %v2617, %v2238
        %v2619 = vadd.f32 %v2618, %v2248
        %v2620 = vadd.f32 %v2619, %v2258
        %v2621 = vadd.f32 %v2620, %v2268
        %v2622 = vadd.f32 %v2621, %v2278
        %v2623 = vadd.f32 %v2622, %v2288
        %v2624 = vadd.f32 %v2623, %v2298
        %v2625 = vadd.f32 %v2624, %v2308
        %v2626 = vadd.f32 %v2625, %v2318
        %v2627 = vadd.f32 %v2626, %v2328
        %v2628 = vadd.f32 %v2627, %v2338
        %v2629 = vadd.f32 %v2628, %v2348
        %v2630 = vadd.f32 %v2629, %v2358
        %v2631 = vadd.f32 %v2630, %v2368
        %v2632 = vrot.slane %v2631, 4
        %v2633 = vadd.f32 %v2631, %v2632
        %v2634 = vrot.slane %v2633, 2
        %v2635 = vadd.f32 %v2633, %v2634
        %v2636 = vrot.slane %v2635, 1
        %v2637 = vadd.f32 %v2635, %v2636
        %v2638 = vadd.f32 %v2370, %v2380
        %v2639 = vadd.f32 %v2638, %v2390
        %v2640 = vadd.f32 %v2639, %v2400
        %v2641 = vadd.f32 %v2640, %v2410
        %v2642 = vadd.f32 %v2641, %v2420
        %v2643 = vadd.f32 %v2642, %v2430
        %v2644 = vadd.f32 %v2643, %v2440
        %v2645 = vadd.f32 %v2644, %v2450
        %v2646 = vadd.f32 %v2645, %v2460
        %v2647 = vadd.f32 %v2646, %v2470
        %v2648 = vadd.f32 %v2647, %v2480
        %v2649 = vadd.f32 %v2648, %v2490
        %v2650 = vadd.f32 %v2649, %v2500
        %v2651 = vadd.f32 %v2650, %v2510
        %v2652 = vadd.f32 %v2651, %v2520
        %v2653 = vrot.slane %v2652, 4
        %v2654 = vadd.f32 %v2652, %v2653
        %v2655 = vrot.slane %v2654, 2
        %v2656 = vadd.f32 %v2654, %v2655
        %v2657 = vrot.slane %v2656, 1
        %v2658 = vadd.f32 %v2656, %v2657
        %v2659 = vadd.f32 %v2372, %v2382
        %v2660 = vadd.f32 %v2659, %v2392
        %v2661 = vadd.f32 %v2660, %v2402
        %v2662 = vadd.f32 %v2661, %v2412
        %v2663 = vadd.f32 %v2662, %v2422
        %v2664 = vadd.f32 %v2663, %v2432
        %v2665 = vadd.f32 %v2664, %v2442
        %v2666 = vadd.f32 %v2665, %v2452
        %v2667 = vadd.f32 %v2666, %v2462
        %v2668 = vadd.f32 %v2667, %v2472
        %v2669 = vadd.f32 %v2668, %v2482
        %v2670 = vadd.f32 %v2669, %v2492
        %v2671 = vadd.f32 %v2670, %v2502
        %v2672 = vadd.f32 %v2671, %v2512
        %v2673 = vadd.f32 %v2672, %v2522
        %v2674 = vrot.slane %v2673, 4
        %v2675 = vadd.f32 %v2673, %v2674
        %v2676 = vrot.slane %v2675, 2
        %v2677 = vadd.f32 %v2675, %v2676
        %v2678 = vrot.slane %v2677, 1
        %v2679 = vadd.f32 %v2677, %v2678
        %v2680 = vadd.f32 %v2374, %v2384
        %v2681 = vadd.f32 %v2680, %v2394
        %v2682 = vadd.f32 %v2681, %v2404
        %v2683 = vadd.f32 %v2682, %v2414
        %v2684 = vadd.f32 %v2683, %v2424
        %v2685 = vadd.f32 %v2684, %v2434
        %v2686 = vadd.f32 %v2685, %v2444
        %v2687 = vadd.f32 %v2686, %v2454
        %v2688 = vadd.f32 %v2687, %v2464
        %v2689 = vadd.f32 %v2688, %v2474
        %v2690 = vadd.f32 %v2689, %v2484
        %v2691 = vadd.f32 %v2690, %v2494
        %v2692 = vadd.f32 %v2691, %v2504
        %v2693 = vadd.f32 %v2692, %v2514
        %v2694 = vadd.f32 %v2693, %v2524
        %v2695 = vrot.slane %v2694, 4
        %v2696 = vadd.f32 %v2694, %v2695
        %v2697 = vrot.slane %v2696, 2
        %v2698 = vadd.f32 %v2696, %v2697
        %v2699 = vrot.slane %v2698, 1
        %v2700 = vadd.f32 %v2698, %v2699
        %v2701 = vadd.f32 %v2376, %v2386
        %v2702 = vadd.f32 %v2701, %v2396
        %v2703 = vadd.f32 %v2702, %v2406
        %v2704 = vadd.f32 %v2703, %v2416
        %v2705 = vadd.f32 %v2704, %v2426
        %v2706 = vadd.f32 %v2705, %v2436
        %v2707 = vadd.f32 %v2706, %v2446
        %v2708 = vadd.f32 %v2707, %v2456
        %v2709 = vadd.f32 %v2708, %v2466
        %v2710 = vadd.f32 %v2709, %v2476
        %v2711 = vadd.f32 %v2710, %v2486
        %v2712 = vadd.f32 %v2711, %v2496
        %v2713 = vadd.f32 %v2712, %v2506
        %v2714 = vadd.f32 %v2713, %v2516
        %v2715 = vadd.f32 %v2714, %v2526
        %v2716 = vrot.slane %v2715, 4
        %v2717 = vadd.f32 %v2715, %v2716
        %v2718 = vrot.slane %v2717, 2
        %v2719 = vadd.f32 %v2717, %v2718
        %v2720 = vrot.slane %v2719, 1
        %v2721 = vadd.f32 %v2719, %v2720
        %v2722 = vadd.f32 %v2378, %v2388
        %v2723 = vadd.f32 %v2722, %v2398
        %v2724 = vadd.f32 %v2723, %v2408
        %v2725 = vadd.f32 %v2724, %v2418
        %v2726 = vadd.f32 %v2725, %v2428
        %v2727 = vadd.f32 %v2726, %v2438
        %v2728 = vadd.f32 %v2727, %v2448
        %v2729 = vadd.f32 %v2728, %v2458
        %v2730 = vadd.f32 %v2729, %v2468
        %v2731 = vadd.f32 %v2730, %v2478
        %v2732 = vadd.f32 %v2731, %v2488
        %v2733 = vadd.f32 %v2732, %v2498
        %v2734 = vadd.f32 %v2733, %v2508
        %v2735 = vadd.f32 %v2734, %v2518
        %v2736 = vadd.f32 %v2735, %v2528
        %v2737 = vrot.slane %v2736, 4
        %v2738 = vadd.f32 %v2736, %v2737
        %v2739 = vrot.slane %v2738, 2
        %v2740 = vadd.f32 %v2738, %v2739
        %v2741 = vrot.slane %v2740, 1
        %v2742 = vadd.f32 %v2740, %v2741
        %v2753 = vcombine.low %v2553, %v2574
        %v2754 = vcombine.low %v2595, %v2616
        %v2756 = vunpack.c.l.s4 1966171168
        %v2757 = vunpack.c.0.s8 %v2756
        %v2758 = vlaneseq
        %v2759 = vshrl.u32 %v2758, 7
        %v2760 = vsub.s32 %v2757, %v2759
        %v2761 = vrot.slane %v2753, %v2760
        %v2763 = vunpack.c.l.s4 1966171168
        %v2764 = vunpack.c.0.s8 %v2763
        %v2765 = vlaneseq
        %v2766 = vshrl.u32 %v2765, 7
        %v2767 = vsub.s32 %v2764, %v2766
        %v2768 = vrot.slane %v2754, %v2767
        %v2770 = vunpack.c.l.s4 1966171168
        %v2771 = vunpack.c.0.s8 %v2770
        %v2772 = vlaneseq
        %v2773 = vshrl.u32 %v2772, 7
        %v2774 = vsub.s32 %v2771, %v2773
        %v2775 = vrot.slane %v2637, %v2774
        %v2776 = vcombine.low %v2761, %v2768
        %v2778 = vunpack.c.l.s4 1966171168
        %v2779 = vunpack.c.0.s8 %v2778
        %v2780 = vlaneseq
        %v2781 = vshrl.u32 %v2780, 7
        %v2782 = vsub.s32 %v2779, %v2781
        %v2783 = vrot.slane %v2776, %v2782
        %v2785 = vunpack.c.l.s4 1966171168
        %v2786 = vunpack.c.0.s8 %v2785
        %v2787 = vlaneseq
        %v2788 = vshrl.u32 %v2787, 7
        %v2789 = vsub.s32 %v2786, %v2788
        %v2790 = vrot.slane %v2775, %v2789
        %v2791 = vcombine.low %v2783, %v2790
        %v2792 = vcombine.low %v2658, %v2679
        %v2793 = vcombine.low %v2700, %v2721
        %v2795 = vunpack.c.l.s4 1966171168
        %v2796 = vunpack.c.0.s8 %v2795
        %v2797 = vlaneseq
        %v2798 = vshrl.u32 %v2797, 7
        %v2799 = vsub.s32 %v2796, %v2798
        %v2800 = vrot.slane %v2792, %v2799
        %v2802 = vunpack.c.l.s4 1966171168
        %v2803 = vunpack.c.0.s8 %v2802
        %v2804 = vlaneseq
        %v2805 = vshrl.u32 %v2804, 7
        %v2806 = vsub.s32 %v2803, %v2805
        %v2807 = vrot.slane %v2793, %v2806
        %v2809 = vunpack.c.l.s4 1966171168
        %v2810 = vunpack.c.0.s8 %v2809
        %v2811 = vlaneseq
        %v2812 = vshrl.u32 %v2811, 7
        %v2813 = vsub.s32 %v2810, %v2812
        %v2814 = vrot.slane %v2742, %v2813
        %v2815 = vcombine.low %v2800, %v2807
        %v2817 = vunpack.c.l.s4 1966171168
        %v2818 = vunpack.c.0.s8 %v2817
        %v2819 = vlaneseq
        %v2820 = vshrl.u32 %v2819, 7
        %v2821 = vsub.s32 %v2818, %v2820
        %v2822 = vrot.slane %v2815, %v2821
        %v2824 = vunpack.c.l.s4 1966171168
        %v2825 = vunpack.c.0.s8 %v2824
        %v2826 = vlaneseq
        %v2827 = vshrl.u32 %v2826, 7
        %v2828 = vsub.s32 %v2825, %v2827
        %v2829 = vrot.slane %v2814, %v2828
        %v2830 = vcombine.low %v2822, %v2829
        %v2833 = vadd.f32 %v2531, %v2791
        %v2834 = vadd.f32 %v2532, %v2830
        %v2835 = vlaneseq
        %vm2836 = vcmp.ge.s32.totalorder %v2835, 0
        %vm2837 = vcmp.lt.s32.totalorder %v2835, 640
        %vm2838 = vmand %vm2836, %vm2837
        %2839 = vst.msk [vmem:[#allocation3] sm:$0x1f] %vm2838, %v2833
        %2840 = vst.msk [vmem:[#allocation3 + $0x5] sm:$0x1f] %vm2838, %v2834
        %2841 = vmatprep.subr.mxu0 %v2212
        %2842 = vmatpush1.msra.mxu0 %v2210
        %2843 = vmatprep.subr.mxu0 %v2222
        %2844 = vmatpush1.msra.mxu0 %v2220
        %2845 = vmatprep.subr.mxu0 %v2232
        %2846 = vmatpush1.msra.mxu0 %v2230
        %2847 = vmatprep.subr.mxu0 %v2242
        %2848 = vmatpush1.msra.mxu0 %v2240
        %2849 = vmatprep.subr.mxu0 %v2252
        %2850 = vmatpush1.msra.mxu0 %v2250
        %2851 = vmatprep.subr.mxu0 %v2262
        %2852 = vmatpush1.msra.mxu0 %v2260
        %2853 = vmatprep.subr.mxu0 %v2272
        %2854 = vmatpush1.msra.mxu0 %v2270
        %2855 = vmatprep.subr.mxu0 %v2282
        %2856 = vmatpush1.msra.mxu0 %v2280
        %2857 = vmatprep.subr.mxu0 %v2292
        %2858 = vmatpush1.msra.mxu0 %v2290
        %2859 = vmatprep.subr.mxu0 %v2302
        %2860 = vmatpush1.msra.mxu0 %v2300
        %2861 = vmatprep.subr.mxu0 %v2312
        %2862 = vmatpush1.msra.mxu0 %v2310
        %2863 = vmatprep.subr.mxu0 %v2322
        %2864 = vmatpush1.msra.mxu0 %v2320
        %2865 = vmatprep.subr.mxu0 %v2332
        %2866 = vmatpush1.msra.mxu0 %v2330
        %2867 = vmatprep.subr.mxu0 %v2342
        %2868 = vmatpush1.msra.mxu0 %v2340
        %2869 = vmatprep.subr.mxu0 %v2352
        %2870 = vmatpush1.msra.mxu0 %v2350
        %2871 = vmatprep.subr.mxu0 %v2362
        %2872 = vmatpush1.msra.mxu0 %v2360
        %2873 = vmatprep.subr.mxu0 0.0
        %2874 = vmatpush1.msra.mxu0 0.0
        %2875 = vmatprep.subr.mxu0 0.0
        %2876 = vmatpush1.msra.mxu0 0.0
        %2877 = vmatprep.subr.mxu0 0.0
        %2878 = vmatpush1.msra.mxu0 0.0
        %2879 = vmatprep.subr.mxu0 0.0
        %2880 = vmatpush1.msra.mxu0 0.0
        %2881 = vmatprep.subr.mxu0 0.0
        %2882 = vmatpush1.msra.mxu0 0.0
        %2883 = vmatprep.subr.mxu0 0.0
        %2884 = vmatpush1.msra.mxu0 0.0
        %2885 = vmatprep.subr.mxu0 0.0
        %2886 = vmatpush1.msra.mxu0 0.0
        %2887 = vmatprep.subr.mxu0 0.0
        %2888 = vmatpush1.msra.mxu0 0.0
        %2889 = vmatprep.subr.mxu0 0.0
        %2890 = vmatpush1.msra.mxu0 0.0
        %2891 = vmatprep.subr.mxu0 0.0
        %2892 = vmatpush1.msra.mxu0 0.0
        %2893 = vmatprep.subr.mxu0 0.0
        %2894 = vmatpush1.msra.mxu0 0.0
        %2895 = vmatprep.subr.mxu0 0.0
        %2896 = vmatpush1.msra.mxu0 0.0
        %2897 = vmatprep.subr.mxu0 0.0
        %2898 = vmatpush1.msra.mxu0 0.0
        %2899 = vmatprep.subr.mxu0 0.0
        %2900 = vmatpush1.msra.mxu0 0.0
        %2901 = vmatprep.subr.mxu0 0.0
        %2902 = vmatpush1.msra.mxu0 0.0
        %2903 = vmatprep.subr.mxu0 0.0
        %2904 = vmatpush1.msra.mxu0 0.0
        %2905 = vmatprep.mubr.f32.mxu0 0.0
        %2906 = vmatmul.mubr.f32.gmra.mrb[0].mxu0 %v379
        %v2907 = vpop.f32.mrb[0].mxu0
        %v2908 = vadd.f32 0.0, %v2907
        %v2909 = vpop.f32.mrb[0].mxu0
        %v2910 = vadd.f32 0.0, %v2909
        %2911 = vdwg.mxu0
        %2912 = vmatprep.subr.mxu0 %v2216
        %2913 = vmatpush1.msra.mxu0 %v2214
        %2914 = vmatprep.subr.mxu0 %v2226
        %2915 = vmatpush1.msra.mxu0 %v2224
        %2916 = vmatprep.subr.mxu0 %v2236
        %2917 = vmatpush1.msra.mxu0 %v2234
        %2918 = vmatprep.subr.mxu0 %v2246
        %2919 = vmatpush1.msra.mxu0 %v2244
        %2920 = vmatprep.subr.mxu0 %v2256
        %2921 = vmatpush1.msra.mxu0 %v2254
        %2922 = vmatprep.subr.mxu0 %v2266
        %2923 = vmatpush1.msra.mxu0 %v2264
        %2924 = vmatprep.subr.mxu0 %v2276
        %2925 = vmatpush1.msra.mxu0 %v2274
        %2926 = vmatprep.subr.mxu0 %v2286
        %2927 = vmatpush1.msra.mxu0 %v2284
        %2928 = vmatprep.subr.mxu0 %v2296
        %2929 = vmatpush1.msra.mxu0 %v2294
        %2930 = vmatprep.subr.mxu0 %v2306
        %2931 = vmatpush1.msra.mxu0 %v2304
        %2932 = vmatprep.subr.mxu0 %v2316
        %2933 = vmatpush1.msra.mxu0 %v2314
        %2934 = vmatprep.subr.mxu0 %v2326
        %2935 = vmatpush1.msra.mxu0 %v2324
        %2936 = vmatprep.subr.mxu0 %v2336
        %2937 = vmatpush1.msra.mxu0 %v2334
        %2938 = vmatprep.subr.mxu0 %v2346
        %2939 = vmatpush1.msra.mxu0 %v2344
        %2940 = vmatprep.subr.mxu0 %v2356
        %2941 = vmatpush1.msra.mxu0 %v2354
        %2942 = vmatprep.subr.mxu0 %v2366
        %2943 = vmatpush1.msra.mxu0 %v2364
        %2944 = vmatprep.subr.mxu0 0.0
        %2945 = vmatpush1.msra.mxu0 0.0
        %2946 = vmatprep.subr.mxu0 0.0
        %2947 = vmatpush1.msra.mxu0 0.0
        %2948 = vmatprep.subr.mxu0 0.0
        %2949 = vmatpush1.msra.mxu0 0.0
        %2950 = vmatprep.subr.mxu0 0.0
        %2951 = vmatpush1.msra.mxu0 0.0
        %2952 = vmatprep.subr.mxu0 0.0
        %2953 = vmatpush1.msra.mxu0 0.0
        %2954 = vmatprep.subr.mxu0 0.0
        %2955 = vmatpush1.msra.mxu0 0.0
        %2956 = vmatprep.subr.mxu0 0.0
        %2957 = vmatpush1.msra.mxu0 0.0
        %2958 = vmatprep.subr.mxu0 0.0
        %2959 = vmatpush1.msra.mxu0 0.0
        %2960 = vmatprep.subr.mxu0 0.0
        %2961 = vmatpush1.msra.mxu0 0.0
        %2962 = vmatprep.subr.mxu0 0.0
        %2963 = vmatpush1.msra.mxu0 0.0
        %2964 = vmatprep.subr.mxu0 0.0
        %2965 = vmatpush1.msra.mxu0 0.0
        %2966 = vmatprep.subr.mxu0 0.0
        %2967 = vmatpush1.msra.mxu0 0.0
        %2968 = vmatprep.subr.mxu0 0.0
        %2969 = vmatpush1.msra.mxu0 0.0
        %2970 = vmatprep.subr.mxu0 0.0
        %2971 = vmatpush1.msra.mxu0 0.0
        %2972 = vmatprep.subr.mxu0 0.0
        %2973 = vmatpush1.msra.mxu0 0.0
        %2974 = vmatprep.subr.mxu0 0.0
        %2975 = vmatpush1.msra.mxu0 0.0
        %2976 = vmatprep.mubr.f32.mxu0 0.0
        %2977 = vmatmul.mubr.f32.gmra.mrb[0].mxu0 %v379
        %v2978 = vpop.f32.mrb[0].mxu0
        %v2979 = vadd.f32 0.0, %v2978
        %v2980 = vpop.f32.mrb[0].mxu0
        %v2981 = vadd.f32 0.0, %v2980
        %2982 = vdwg.mxu0
        %2983 = vmatprep.subr.mxu0 0.0
        %2984 = vmatpush1.msra.mxu0 %v2218
        %2985 = vmatprep.subr.mxu0 0.0
        %2986 = vmatpush1.msra.mxu0 %v2228
        %2987 = vmatprep.subr.mxu0 0.0
        %2988 = vmatpush1.msra.mxu0 %v2238
        %2989 = vmatprep.subr.mxu0 0.0
        %2990 = vmatpush1.msra.mxu0 %v2248
        %2991 = vmatprep.subr.mxu0 0.0
        %2992 = vmatpush1.msra.mxu0 %v2258
        %2993 = vmatprep.subr.mxu0 0.0
        %2994 = vmatpush1.msra.mxu0 %v2268
        %2995 = vmatprep.subr.mxu0 0.0
        %2996 = vmatpush1.msra.mxu0 %v2278
        %2997 = vmatprep.subr.mxu0 0.0
        %2998 = vmatpush1.msra.mxu0 %v2288
        %2999 = vmatprep.subr.mxu0 0.0
        %3000 = vmatpush1.msra.mxu0 %v2298
        %3001 = vmatprep.subr.mxu0 0.0
        %3002 = vmatpush1.msra.mxu0 %v2308
        %3003 = vmatprep.subr.mxu0 0.0
        %3004 = vmatpush1.msra.mxu0 %v2318
        %3005 = vmatprep.subr.mxu0 0.0
        %3006 = vmatpush1.msra.mxu0 %v2328
        %3007 = vmatprep.subr.mxu0 0.0
        %3008 = vmatpush1.msra.mxu0 %v2338
        %3009 = vmatprep.subr.mxu0 0.0
        %3010 = vmatpush1.msra.mxu0 %v2348
        %3011 = vmatprep.subr.mxu0 0.0
        %3012 = vmatpush1.msra.mxu0 %v2358
        %3013 = vmatprep.subr.mxu0 0.0
        %3014 = vmatpush1.msra.mxu0 %v2368
        %3015 = vmatprep.subr.mxu0 0.0
        %3016 = vmatpush1.msra.mxu0 0.0
        %3017 = vmatprep.subr.mxu0 0.0
        %3018 = vmatpush1.msra.mxu0 0.0
        %3019 = vmatprep.subr.mxu0 0.0
        %3020 = vmatpush1.msra.mxu0 0.0
        %3021 = vmatprep.subr.mxu0 0.0
        %3022 = vmatpush1.msra.mxu0 0.0
        %3023 = vmatprep.subr.mxu0 0.0
        %3024 = vmatpush1.msra.mxu0 0.0
        %3025 = vmatprep.subr.mxu0 0.0
        %3026 = vmatpush1.msra.mxu0 0.0
        %3027 = vmatprep.subr.mxu0 0.0
        %3028 = vmatpush1.msra.mxu0 0.0
        %3029 = vmatprep.subr.mxu0 0.0
        %3030 = vmatpush1.msra.mxu0 0.0
        %3031 = vmatprep.subr.mxu0 0.0
        %3032 = vmatpush1.msra.mxu0 0.0
        %3033 = vmatprep.subr.mxu0 0.0
        %3034 = vmatpush1.msra.mxu0 0.0
        %3035 = vmatprep.subr.mxu0 0.0
        %3036 = vmatpush1.msra.mxu0 0.0
        %3037 = vmatprep.subr.mxu0 0.0
        %3038 = vmatpush1.msra.mxu0 0.0
        %3039 = vmatprep.subr.mxu0 0.0
        %3040 = vmatpush1.msra.mxu0 0.0
        %3041 = vmatprep.subr.mxu0 0.0
        %3042 = vmatpush1.msra.mxu0 0.0
        %3043 = vmatprep.subr.mxu0 0.0
        %3044 = vmatpush1.msra.mxu0 0.0
        %3045 = vmatprep.subr.mxu0 0.0
        %3046 = vmatpush1.msra.mxu0 0.0
        %3047 = vmatprep.mubr.f32.mxu0 0.0
        %3048 = vmatmul.mubr.f32.gmra.mrb[0].mxu0 %v379
        %v3049 = vpop.f32.mrb[0].mxu0
        %v3050 = vadd.f32 0.0, %v3049
        %v3051 = vpop.f32.mrb[0].mxu0
        %3052 = vdwg.mxu0
        %3053 = vmatprep.subr.mxu0 %v2372
        %3054 = vmatpush1.msra.mxu0 %v2370
        %3055 = vmatprep.subr.mxu0 %v2382
        %3056 = vmatpush1.msra.mxu0 %v2380
        %3057 = vmatprep.subr.mxu0 %v2392
        %3058 = vmatpush1.msra.mxu0 %v2390
        %3059 = vmatprep.subr.mxu0 %v2402
        %3060 = vmatpush1.msra.mxu0 %v2400
        %3061 = vmatprep.subr.mxu0 %v2412
        %3062 = vmatpush1.msra.mxu0 %v2410
        %3063 = vmatprep.subr.mxu0 %v2422
        %3064 = vmatpush1.msra.mxu0 %v2420
        %3065 = vmatprep.subr.mxu0 %v2432
        %3066 = vmatpush1.msra.mxu0 %v2430
        %3067 = vmatprep.subr.mxu0 %v2442
        %3068 = vmatpush1.msra.mxu0 %v2440
        %3069 = vmatprep.subr.mxu0 %v2452
        %3070 = vmatpush1.msra.mxu0 %v2450
        %3071 = vmatprep.subr.mxu0 %v2462
        %3072 = vmatpush1.msra.mxu0 %v2460
        %3073 = vmatprep.subr.mxu0 %v2472
        %3074 = vmatpush1.msra.mxu0 %v2470
        %3075 = vmatprep.subr.mxu0 %v2482
        %3076 = vmatpush1.msra.mxu0 %v2480
        %3077 = vmatprep.subr.mxu0 %v2492
        %3078 = vmatpush1.msra.mxu0 %v2490
        %3079 = vmatprep.subr.mxu0 %v2502
        %3080 = vmatpush1.msra.mxu0 %v2500
        %3081 = vmatprep.subr.mxu0 %v2512
        %3082 = vmatpush1.msra.mxu0 %v2510
        %3083 = vmatprep.subr.mxu0 %v2522
        %3084 = vmatpush1.msra.mxu0 %v2520
        %3085 = vmatprep.subr.mxu0 0.0
        %3086 = vmatpush1.msra.mxu0 0.0
        %3087 = vmatprep.subr.mxu0 0.0
        %3088 = vmatpush1.msra.mxu0 0.0
        %3089 = vmatprep.subr.mxu0 0.0
        %3090 = vmatpush1.msra.mxu0 0.0
        %3091 = vmatprep.subr.mxu0 0.0
        %3092 = vmatpush1.msra.mxu0 0.0
        %3093 = vmatprep.subr.mxu0 0.0
        %3094 = vmatpush1.msra.mxu0 0.0
        %3095 = vmatprep.subr.mxu0 0.0
        %3096 = vmatpush1.msra.mxu0 0.0
        %3097 = vmatprep.subr.mxu0 0.0
        %3098 = vmatpush1.msra.mxu0 0.0
        %3099 = vmatprep.subr.mxu0 0.0
        %3100 = vmatpush1.msra.mxu0 0.0
        %3101 = vmatprep.subr.mxu0 0.0
        %3102 = vmatpush1.msra.mxu0 0.0
        %3103 = vmatprep.subr.mxu0 0.0
        %3104 = vmatpush1.msra.mxu0 0.0
        %3105 = vmatprep.subr.mxu0 0.0
        %3106 = vmatpush1.msra.mxu0 0.0
        %3107 = vmatprep.subr.mxu0 0.0
        %3108 = vmatpush1.msra.mxu0 0.0
        %3109 = vmatprep.subr.mxu0 0.0
        %3110 = vmatpush1.msra.mxu0 0.0
        %3111 = vmatprep.subr.mxu0 0.0
        %3112 = vmatpush1.msra.mxu0 0.0
        %3113 = vmatprep.subr.mxu0 0.0
        %3114 = vmatpush1.msra.mxu0 0.0
        %3115 = vmatprep.subr.mxu0 0.0
        %3116 = vmatpush1.msra.mxu0 0.0
        %3117 = vmatprep.mubr.f32.mxu0 0.0
        %3118 = vmatmul.mubr.f32.gmra.mrb[0].mxu0 %v380
        %v3119 = vpop.f32.mrb[0].mxu0
        %v3120 = vadd.f32 0.0, %v3119
        %v3121 = vpop.f32.mrb[0].mxu0
        %v3122 = vadd.f32 0.0, %v3121
        %3123 = vdwg.mxu0
        %3124 = vmatprep.subr.mxu0 %v2376
        %3125 = vmatpush1.msra.mxu0 %v2374
        %3126 = vmatprep.subr.mxu0 %v2386
        %3127 = vmatpush1.msra.mxu0 %v2384
        %3128 = vmatprep.subr.mxu0 %v2396
        %3129 = vmatpush1.msra.mxu0 %v2394
        %3130 = vmatprep.subr.mxu0 %v2406
        %3131 = vmatpush1.msra.mxu0 %v2404
        %3132 = vmatprep.subr.mxu0 %v2416
        %3133 = vmatpush1.msra.mxu0 %v2414
        %3134 = vmatprep.subr.mxu0 %v2426
        %3135 = vmatpush1.msra.mxu0 %v2424
        %3136 = vmatprep.subr.mxu0 %v2436
        %3137 = vmatpush1.msra.mxu0 %v2434
        %3138 = vmatprep.subr.mxu0 %v2446
        %3139 = vmatpush1.msra.mxu0 %v2444
        %3140 = vmatprep.subr.mxu0 %v2456
        %3141 = vmatpush1.msra.mxu0 %v2454
        %3142 = vmatprep.subr.mxu0 %v2466
        %3143 = vmatpush1.msra.mxu0 %v2464
        %3144 = vmatprep.subr.mxu0 %v2476
        %3145 = vmatpush1.msra.mxu0 %v2474
        %3146 = vmatprep.subr.mxu0 %v2486
        %3147 = vmatpush1.msra.mxu0 %v2484
        %3148 = vmatprep.subr.mxu0 %v2496
        %3149 = vmatpush1.msra.mxu0 %v2494
        %3150 = vmatprep.subr.mxu0 %v2506
        %3151 = vmatpush1.msra.mxu0 %v2504
        %3152 = vmatprep.subr.mxu0 %v2516
        %3153 = vmatpush1.msra.mxu0 %v2514
        %3154 = vmatprep.subr.mxu0 %v2526
        %3155 = vmatpush1.msra.mxu0 %v2524
        %3156 = vmatprep.subr.mxu0 0.0
        %3157 = vmatpush1.msra.mxu0 0.0
        %3158 = vmatprep.subr.mxu0 0.0
        %3159 = vmatpush1.msra.mxu0 0.0
        %3160 = vmatprep.subr.mxu0 0.0
        %3161 = vmatpush1.msra.mxu0 0.0
        %3162 = vmatprep.subr.mxu0 0.0
        %3163 = vmatpush1.msra.mxu0 0.0
        %3164 = vmatprep.subr.mxu0 0.0
        %3165 = vmatpush1.msra.mxu0 0.0
        %3166 = vmatprep.subr.mxu0 0.0
        %3167 = vmatpush1.msra.mxu0 0.0
        %3168 = vmatprep.subr.mxu0 0.0
        %3169 = vmatpush1.msra.mxu0 0.0
        %3170 = vmatprep.subr.mxu0 0.0
        %3171 = vmatpush1.msra.mxu0 0.0
        %3172 = vmatprep.subr.mxu0 0.0
        %3173 = vmatpush1.msra.mxu0 0.0
        %3174 = vmatprep.subr.mxu0 0.0
        %3175 = vmatpush1.msra.mxu0 0.0
        %3176 = vmatprep.subr.mxu0 0.0
        %3177 = vmatpush1.msra.mxu0 0.0
        %3178 = vmatprep.subr.mxu0 0.0
        %3179 = vmatpush1.msra.mxu0 0.0
        %3180 = vmatprep.subr.mxu0 0.0
        %3181 = vmatpush1.msra.mxu0 0.0
        %3182 = vmatprep.subr.mxu0 0.0
        %3183 = vmatpush1.msra.mxu0 0.0
        %3184 = vmatprep.subr.mxu0 0.0
        %3185 = vmatpush1.msra.mxu0 0.0
        %3186 = vmatprep.subr.mxu0 0.0
        %3187 = vmatpush1.msra.mxu0 0.0
        %3188 = vmatprep.mubr.f32.mxu0 0.0
        %3189 = vmatmul.mubr.f32.gmra.mrb[0].mxu0 %v380
        %v3190 = vpop.f32.mrb[0].mxu0
        %v3191 = vadd.f32 0.0, %v3190
        %v3192 = vpop.f32.mrb[0].mxu0
        %v3193 = vadd.f32 0.0, %v3192
        %3194 = vdwg.mxu0
        %3195 = vmatprep.subr.mxu0 0.0
        %3196 = vmatpush1.msra.mxu0 %v2378
        %3197 = vmatprep.subr.mxu0 0.0
        %3198 = vmatpush1.msra.mxu0 %v2388
        %3199 = vmatprep.subr.mxu0 0.0
        %3200 = vmatpush1.msra.mxu0 %v2398
        %3201 = vmatprep.subr.mxu0 0.0
        %3202 = vmatpush1.msra.mxu0 %v2408
        %3203 = vmatprep.subr.mxu0 0.0
        %3204 = vmatpush1.msra.mxu0 %v2418
        %3205 = vmatprep.subr.mxu0 0.0
        %3206 = vmatpush1.msra.mxu0 %v2428
        %3207 = vmatprep.subr.mxu0 0.0
        %3208 = vmatpush1.msra.mxu0 %v2438
        %3209 = vmatprep.subr.mxu0 0.0
        %3210 = vmatpush1.msra.mxu0 %v2448
        %3211 = vmatprep.subr.mxu0 0.0
        %3212 = vmatpush1.msra.mxu0 %v2458
        %3213 = vmatprep.subr.mxu0 0.0
        %3214 = vmatpush1.msra.mxu0 %v2468
        %3215 = vmatprep.subr.mxu0 0.0
        %3216 = vmatpush1.msra.mxu0 %v2478
        %3217 = vmatprep.subr.mxu0 0.0
        %3218 = vmatpush1.msra.mxu0 %v2488
        %3219 = vmatprep.subr.mxu0 0.0
        %3220 = vmatpush1.msra.mxu0 %v2498
        %3221 = vmatprep.subr.mxu0 0.0
        %3222 = vmatpush1.msra.mxu0 %v2508
        %3223 = vmatprep.subr.mxu0 0.0
        %3224 = vmatpush1.msra.mxu0 %v2518
        %3225 = vmatprep.subr.mxu0 0.0
        %3226 = vmatpush1.msra.mxu0 %v2528
        %3227 = vmatprep.subr.mxu0 0.0
        %3228 = vmatpush1.msra.mxu0 0.0
        %3229 = vmatprep.subr.mxu0 0.0
        %3230 = vmatpush1.msra.mxu0 0.0
        %3231 = vmatprep.subr.mxu0 0.0
        %3232 = vmatpush1.msra.mxu0 0.0
        %3233 = vmatprep.subr.mxu0 0.0
        %3234 = vmatpush1.msra.mxu0 0.0
        %3235 = vmatprep.subr.mxu0 0.0
        %3236 = vmatpush1.msra.mxu0 0.0
        %3237 = vmatprep.subr.mxu0 0.0
        %3238 = vmatpush1.msra.mxu0 0.0
        %3239 = vmatprep.subr.mxu0 0.0
        %3240 = vmatpush1.msra.mxu0 0.0
        %3241 = vmatprep.subr.mxu0 0.0
        %3242 = vmatpush1.msra.mxu0 0.0
        %3243 = vmatprep.subr.mxu0 0.0
        %3244 = vmatpush1.msra.mxu0 0.0
        %3245 = vmatprep.subr.mxu0 0.0
        %3246 = vmatpush1.msra.mxu0 0.0
        %3247 = vmatprep.subr.mxu0 0.0
        %3248 = vmatpush1.msra.mxu0 0.0
        %3249 = vmatprep.subr.mxu0 0.0
        %3250 = vmatpush1.msra.mxu0 0.0
        %3251 = vmatprep.subr.mxu0 0.0
        %3252 = vmatpush1.msra.mxu0 0.0
        %3253 = vmatprep.subr.mxu0 0.0
        %3254 = vmatpush1.msra.mxu0 0.0
        %3255 = vmatprep.subr.mxu0 0.0
        %3256 = vmatpush1.msra.mxu0 0.0
        %3257 = vmatprep.subr.mxu0 0.0
        %3258 = vmatpush1.msra.mxu0 0.0
        %3259 = vmatprep.mubr.f32.mxu0 0.0
        %3260 = vmatmul.mubr.f32.gmra.mrb[0].mxu0 %v380
        %v3261 = vpop.f32.mrb[0].mxu0
        %v3262 = vadd.f32 0.0, %v3261
        %v3263 = vpop.f32.mrb[0].mxu0
        %3264 = vdwg.mxu0
        %v3265 = vld [vmem:[#allocation4] sm:$0xff]
        %v3266 = vld [vmem:[#allocation4 + $0x8] sm:$0xff]
        %v3267 = vld [vmem:[#allocation4 + $0x10] sm:$0xff]
        %v3268 = vld [vmem:[#allocation4 + $0x18] sm:$0xff]
        %v3269 = vld [vmem:[#allocation4 + $0x20] sm:$0xff]
        %v3270 = vld [vmem:[#allocation4 + $0x28] sm:$0xff]
        %v3271 = vld [vmem:[#allocation4 + $0x30] sm:$0xff]
        %v3272 = vld [vmem:[#allocation4 + $0x38] sm:$0xff]
        %v3273 = vld [vmem:[#allocation4 + $0x40] sm:$0xff]
        %v3274 = vld [vmem:[#allocation4 + $0x48] sm:$0xff]
        %v3277 = vlaneseq
        %v3278 = vshrl.u32 %v3277, 7
        %v3279 = vsub.s32 0, %v3278
        %v3280 = vrot.slane %v1994, %v3279
        %v3281 = vlaneseq
        %v3282 = vshrl.u32 %v3281, 7
        %v3283 = vsub.s32 1, %v3282
        %v3284 = vrot.slane %v1994, %v3283
        %v3285 = vlaneseq
        %v3286 = vshrl.u32 %v3285, 7
        %v3287 = vsub.s32 2, %v3286
        %v3288 = vrot.slane %v1994, %v3287
        %v3289 = vlaneseq
        %v3290 = vshrl.u32 %v3289, 7
        %v3291 = vsub.s32 3, %v3290
        %v3292 = vrot.slane %v1994, %v3291
        %v3293 = vlaneseq
        %v3294 = vshrl.u32 %v3293, 7
        %v3295 = vsub.s32 4, %v3294
        %v3296 = vrot.slane %v1994, %v3295
        %v3297 = vlaneseq
        %v3298 = vshrl.u32 %v3297, 7
        %v3299 = vsub.s32 0, %v3298
        %v3300 = vrot.slane %v1996, %v3299
        %v3301 = vlaneseq
        %v3302 = vshrl.u32 %v3301, 7
        %v3303 = vsub.s32 1, %v3302
        %v3304 = vrot.slane %v1996, %v3303
        %v3305 = vlaneseq
        %v3306 = vshrl.u32 %v3305, 7
        %v3307 = vsub.s32 2, %v3306
        %v3308 = vrot.slane %v1996, %v3307
        %v3309 = vlaneseq
        %v3310 = vshrl.u32 %v3309, 7
        %v3311 = vsub.s32 3, %v3310
        %v3312 = vrot.slane %v1996, %v3311
        %v3313 = vlaneseq
        %v3314 = vshrl.u32 %v3313, 7
        %v3315 = vsub.s32 4, %v3314
        %v3316 = vrot.slane %v1996, %v3315
        %v3327 = vmul.f32 %v3280, %v3265
        %v3328 = vmul.f32 %v3284, %v3266
        %v3329 = vmul.f32 %v3288, %v3267
        %v3330 = vmul.f32 %v3292, %v3268
        %v3331 = vmul.f32 %v3296, %v3269
        %v3332 = vmul.f32 %v3300, %v3270
        %v3333 = vmul.f32 %v3304, %v3271
        %v3334 = vmul.f32 %v3308, %v3272
        %v3335 = vmul.f32 %v3312, %v3273
        %v3336 = vmul.f32 %v3316, %v3274
        %v3337 = vadd.f32 %v3327, %v2908
        %v3338 = vadd.f32 %v3328, %v2910
        %v3339 = vadd.f32 %v3329, %v2979
        %v3340 = vadd.f32 %v3330, %v2981
        %v3341 = vadd.f32 %v3331, %v3050
        %v3342 = vadd.f32 %v3332, %v3120
        %v3343 = vadd.f32 %v3333, %v3122
        %v3344 = vadd.f32 %v3334, %v3191
        %v3345 = vadd.f32 %v3335, %v3193
        %v3346 = vadd.f32 %v3336, %v3262
        %3347 = vst [vmem:[#allocation4] sm:$0xff] %v3337
        %3348 = vst [vmem:[#allocation4 + $0x8] sm:$0xff] %v3338
        %3349 = vst [vmem:[#allocation4 + $0x10] sm:$0xff] %v3339
        %3350 = vst [vmem:[#allocation4 + $0x18] sm:$0xff] %v3340
        %3351 = vst [vmem:[#allocation4 + $0x20] sm:$0xff] %v3341
        %3352 = vst [vmem:[#allocation4 + $0x28] sm:$0xff] %v3342
        %3353 = vst [vmem:[#allocation4 + $0x30] sm:$0xff] %v3343
        %3354 = vst [vmem:[#allocation4 + $0x38] sm:$0xff] %v3344
        %3355 = vst [vmem:[#allocation4 + $0x40] sm:$0xff] %v3345
        %3356 = vst [vmem:[#allocation4 + $0x48] sm:$0xff] %v3346
        %3357 = vst.msk [vmem:[#allocation2] sm:$0x1f] %vm2838, %v1989
        %3358 = vst.msk [vmem:[#allocation2 + $0x5] sm:$0x1f] %vm2838, %v1990
        %p3359 = scmp.eq.s32.totalorder %s32, 4
        // Predicated region
        $region49: #{tpu_custom_call.1} parent=31 // pred_check
          %p3360 = pneg %p3359
        $region50: #{tpu_custom_call.1} parent=31 // pred_check_branch
          %3362 = sbr.rel (%p3360) target = $region52
        $region51: #{tpu_custom_call.1} parent=31 // pred_region
          %v3363 = vld [vmem:[#allocation3] sm:$0x1f]
          %v3364 = vld [vmem:[#allocation3 + $0x5] sm:$0x1f]
          %v3365 = vrcp.pop %v3363
          %v3366 = vmul.f32 1.0, %v3365
          %v3367 = vrcp.pop %v3364
          %v3368 = vmul.f32 1.0, %v3367
          %v3369 = vld [vmem:[#allocation4] sm:$0xff]
          %v3370 = vld [vmem:[#allocation4 + $0x8] sm:$0xff]
          %v3371 = vld [vmem:[#allocation4 + $0x10] sm:$0xff]
          %v3372 = vld [vmem:[#allocation4 + $0x18] sm:$0xff]
          %v3373 = vld [vmem:[#allocation4 + $0x20] sm:$0xff]
          %v3374 = vld [vmem:[#allocation4 + $0x28] sm:$0xff]
          %v3375 = vld [vmem:[#allocation4 + $0x30] sm:$0xff]
          %v3376 = vld [vmem:[#allocation4 + $0x38] sm:$0xff]
          %v3377 = vld [vmem:[#allocation4 + $0x40] sm:$0xff]
          %v3378 = vld [vmem:[#allocation4 + $0x48] sm:$0xff]
          %v3381 = vlaneseq
          %v3382 = vshrl.u32 %v3381, 7
          %v3383 = vsub.s32 0, %v3382
          %v3384 = vrot.slane %v3366, %v3383
          %v3385 = vlaneseq
          %v3386 = vshrl.u32 %v3385, 7
          %v3387 = vsub.s32 1, %v3386
          %v3388 = vrot.slane %v3366, %v3387
          %v3389 = vlaneseq
          %v3390 = vshrl.u32 %v3389, 7
          %v3391 = vsub.s32 2, %v3390
          %v3392 = vrot.slane %v3366, %v3391
          %v3393 = vlaneseq
          %v3394 = vshrl.u32 %v3393, 7
          %v3395 = vsub.s32 3, %v3394
          %v3396 = vrot.slane %v3366, %v3395
          %v3397 = vlaneseq
          %v3398 = vshrl.u32 %v3397, 7
          %v3399 = vsub.s32 4, %v3398
          %v3400 = vrot.slane %v3366, %v3399
          %v3401 = vlaneseq
          %v3402 = vshrl.u32 %v3401, 7
          %v3403 = vsub.s32 0, %v3402
          %v3404 = vrot.slane %v3368, %v3403
          %v3405 = vlaneseq
          %v3406 = vshrl.u32 %v3405, 7
          %v3407 = vsub.s32 1, %v3406
          %v3408 = vrot.slane %v3368, %v3407
          %v3409 = vlaneseq
          %v3410 = vshrl.u32 %v3409, 7
          %v3411 = vsub.s32 2, %v3410
          %v3412 = vrot.slane %v3368, %v3411
          %v3413 = vlaneseq
          %v3414 = vshrl.u32 %v3413, 7
          %v3415 = vsub.s32 3, %v3414
          %v3416 = vrot.slane %v3368, %v3415
          %v3417 = vlaneseq
          %v3418 = vshrl.u32 %v3417, 7
          %v3419 = vsub.s32 4, %v3418
          %v3420 = vrot.slane %v3368, %v3419
          %v3431 = vmul.f32 %v3369, %v3384
          %v3432 = vmul.f32 %v3370, %v3388
          %v3433 = vmul.f32 %v3371, %v3392
          %v3434 = vmul.f32 %v3372, %v3396
          %v3435 = vmul.f32 %v3373, %v3400
          %v3436 = vmul.f32 %v3374, %v3404
          %v3437 = vmul.f32 %v3375, %v3408
          %v3438 = vmul.f32 %v3376, %v3412
          %v3439 = vmul.f32 %v3377, %v3416
          %v3440 = vmul.f32 %v3378, %v3420
          %3441 = vst [vmem:[%s326] sm:$0xff] %v3431
          %3442 = vst [vmem:[%s326 + $0x8] sm:$0xff] %v3432
          %3443 = vst [vmem:[%s326 + $0x10] sm:$0xff] %v3433
          %3444 = vst [vmem:[%s326 + $0x18] sm:$0xff] %v3434
          %3445 = vst [vmem:[%s326 + $0x20] sm:$0xff] %v3435
          %3446 = vst [vmem:[%s326 + $0x28] sm:$0xff] %v3436
          %3447 = vst [vmem:[%s326 + $0x30] sm:$0xff] %v3437
          %3448 = vst [vmem:[%s326 + $0x38] sm:$0xff] %v3438
          %3449 = vst [vmem:[%s326 + $0x40] sm:$0xff] %v3439
          %3450 = vst [vmem:[%s326 + $0x48] sm:$0xff] %v3440
        $region52: #{tpu_custom_call.1} parent=31 // pred_fallthru
          _
        %s3451 = sand.u32 %s155, 1
        %s3452 = scalar_lea.sflag [#allocation7], %s3451
        %s3453 = sand.u32 %s155, 1
        %s3454 = smul.addr %s3453, 80
        %s3455 = scalar_lea.vmem [#allocation11], %s3454
        // Predicated region
        $region53: #{tpu_custom_call.1} parent=31 // pred_check
          %p3456 = pneg %p165
        $region54: #{tpu_custom_call.1} parent=31 // pred_check_branch
          %3458 = sbr.rel (%p3456) target = $region56
        $region55: #{tpu_custom_call.1} parent=31 // pred_region
          %s3459 = smul.u32 2, %s30
          %s3460 = smul.u32 5, %s31
          %s3462 = ssub.s32 1280, 1280
          %3463 = vsyncadd %s3452, %s3462
          %s3464 = smul.addr %s3459, 5
          %s3465 = sadd.s32 %s3460, %s3464
          %s3466 = smul.addr %s29, 10
          %s3467 = sadd.s32 %s3465, %s3466
          %s3468 = smul.addr %s3467, 128
          %s3469 = scalar_lea.hbm %s3, %s3468
          %s3470 = sshll.u32 %s3455, 4
          %s3471 = int_to_ptr.vmem [resolvable:$true] %s3470
          %3476 = dma.vmem_to_hbm [thread:$0]  %s3471, 1280, %s3469, %s3452, 640, 640, 40
        $region56: #{tpu_custom_call.1} parent=31 // pred_fallthru
          _
      $region32: #{tpu_custom_call.1} parent=5 // pred_fallthru
        _
      %p3477 = scmp.le.s32.totalorder 2, %s18
      // Predicated region
      $region57: #{tpu_custom_call.1} parent=5 // pred_check
        %p3478 = pneg %p3477
      $region58: #{tpu_custom_call.1} parent=5 // pred_check_branch
        %3480 = sbr.rel (%p3478) target = $region60
      $region59: #{tpu_custom_call.1} parent=5 // pred_region
        %s3481 = ssub.s32 %s18, 2
        // Predicated region
        $region61: #{tpu_custom_call.1} parent=59 // pred_check
          %p3482 = pneg %p171
        $region62: #{tpu_custom_call.1} parent=59 // pred_check_branch
          %3484 = sbr.rel (%p3482) target = $region64
        $region63: #{tpu_custom_call.1} parent=59 // pred_region
          %s3485 = sand.u32 %s156, 1
          %s3486 = scalar_lea.sflag [#allocation7], %s3485
          %s3487 = sand.u32 %s156, 1
          %s3488 = smul.addr %s3487, 80
          %s3489 = scalar_lea.vmem [#allocation11], %s3488
          %3490 = dma.done %s3486, 1280
        $region64: #{tpu_custom_call.1} parent=59 // pred_fallthru
          _
      $region60: #{tpu_custom_call.1} parent=5 // pred_fallthru
        _
    $region6: #{tpu_custom_call.1} parent=1 // loop_footer
      %s22 = sadd.s32 1, %s18
    $region7: #{tpu_custom_call.1} parent=1 // loop_footer_branch
      %17 = sbr.rel target = $region3
    $region8: #{tpu_custom_call.1} parent=1 // loop_exit
      _
    %3491 = vsyncpa [#allocation6], 1
    %s3492 = scalar_lea.sflag [#allocation6], 1
    %3493 = vsyncpa %s3492, 1
    %3494 = vsyncpa [#allocation9], 1
    %s3495 = scalar_lea.sflag [#allocation9], 1
    %3496 = vsyncpa %s3495, 1
    %3497 = vsyncpa [#allocation7], 1
    %s3498 = scalar_lea.sflag [#allocation7], 1
    %3499 = vsyncpa %s3498, 1

</llo_original>
